<compile_context>
chip_gen: v6e
topology: v6e:2x2x1
jax: 0.10.0
libtpu: 0.0.40
codegen_flags: <defaults>
</compile_context>

<pallas_src>
import math

import jax
import jax.numpy as jnp
from jax import lax
from jax.experimental import pallas as pl
from jax.experimental.pallas import tpu as pltpu


_EPS_DOT = 1e-3
_EPS_LEN = 1e-12


# ----------------------------------------------------------------------------
# in-kernel helpers (operate on per-channel (sub_rows, W_pad) arrays)
# ----------------------------------------------------------------------------
def _material_precompute(n, d, r, s):
    """Scene-independent material terms, computed once per sub-tile."""
    rough = jnp.maximum(r, 1e-3)
    alpha = rough * rough
    alpha_sq = alpha * alpha
    k = alpha * 0.5
    one_minus_k = 1.0 - k
    F0 = s
    one_minus_F0 = tuple(1.0 - s[c] for c in range(3))
    diff_c = tuple(d[c] * one_minus_F0[c] * (1.0 / math.pi) for c in range(3))
    return (n, diff_c, alpha_sq, k, one_minus_k, F0, one_minus_F0)


def _scene_geometry(cam, lpos, lcol, px, py):
    """Material-independent per-scene geometry, shared by estimate & target."""
    # incoming light direction + distance (surface plane z == 0)
    Lx = lpos[0] - px
    Ly = lpos[1] - py
    Lz = lpos[2]
    dist_sq = Lx * Lx + Ly * Ly + Lz * Lz
    inv_d = lax.rsqrt(dist_sq + _EPS_LEN)
    wi = (Lx * inv_d, Ly * inv_d, Lz * inv_d)

    # view direction
    Vx = cam[0] - px
    Vy = cam[1] - py
    Vz = cam[2]
    inv_v = lax.rsqrt(Vx * Vx + Vy * Vy + Vz * Vz + _EPS_LEN)
    wo = (Vx * inv_v, Vy * inv_v, Vz * inv_v)

    # half vector
    hx, hy, hz = wi[0] + wo[0], wi[1] + wo[1], wi[2] + wo[2]
    inv_h = lax.rsqrt(hx * hx + hy * hy + hz * hz + _EPS_LEN)
    h = (hx * inv_h, hy * inv_h, hz * inv_h)

    VoH = jnp.maximum(wo[0] * h[0] + wo[1] * h[1] + wo[2] * h[2], _EPS_DOT)
    m = 1.0 - VoH
    m5 = (m * m) * (m * m) * m          # Schlick fresnel base

    inv_d2 = inv_d * inv_d              # 1 / dist_sq
    lcol_fall = tuple(lcol[c] * inv_d2 for c in range(3))
    return wi, wo, h, m5, lcol_fall


def _shade(geom, mat):
    """Material-dependent part of the Cook-Torrance render (3 radiance maps)."""
    wi, wo, h, m5, lcol_fall = geom
    n, diff_c, alpha_sq, k, one_minus_k, F0, one_minus_F0 = mat
    nx, ny, nz = n

    NoL = jnp.maximum(nx * wi[0] + ny * wi[1] + nz * wi[2], _EPS_DOT)
    NoV = jnp.maximum(nx * wo[0] + ny * wo[1] + nz * wo[2], _EPS_DOT)
    NoH = jnp.maximum(nx * h[0] + ny * h[1] + nz * h[2], _EPS_DOT)

    # D * G / (4 NoL NoV) folded; exact divide (avoids approx-reciprocal error
    # at tiny denominators, EUP has slack behind the VALU).
    denom = NoH * NoH * (alpha_sq - 1.0) + 1.0
    gl = NoL * one_minus_k + k
    gv = NoV * one_minus_k + k
    spec_common = 0.25 * alpha_sq / (math.pi * denom * denom * gl * gv)

    out = []
    for c in range(3):
        F = F0[c] + one_minus_F0[c] * m5
        rad = (diff_c[c] + spec_common * F) * (lcol_fall[c] * NoL)
        out.append(jnp.maximum(rad, 0.0))
    return out


# ----------------------------------------------------------------------------
# fused kernel: L1 partial sums + all-scenes rendering-loss partial sum
# ----------------------------------------------------------------------------
def _make_mix_loss_kernel(S, H, W, W_pad, h_tile, sub_rows):
    n_sub = h_tile // sub_rows

    def kernel(scenes_ref, inp_ref, tgt_ref, out_ref):
        b = pl.program_id(0)
        t = pl.program_id(1)

        # --- hoist per-batch scene parameters (SMEM scalar reads) -----------
        scene_params = []
        base_b = b * (S * 9)
        for sc in range(S):
            base = base_b + sc * 9
            cam = tuple(scenes_ref[base + j] for j in range(3))
            lpos = tuple(scenes_ref[base + 3 + j] for j in range(3))
            lcol = tuple(scenes_ref[base + 6 + j] for j in range(3))
            scene_params.append((cam, lpos, lcol))

        zero = jnp.zeros((sub_rows, W_pad), jnp.float32)
        init = (zero, zero, zero, zero, zero)

        def body(i, carry):
            acc_n, acc_d, acc_r, acc_s, acc_rd = carry
            r0 = i * sub_rows
            if not isinstance(i, int):
                r0 = pl.multiple_of(r0, sub_rows)

            # --- planar surface coords of this sub-tile (in-kernel iota) ----
            h_idx = lax.broadcasted_iota(jnp.int32, (sub_rows, W_pad), 0)
            w_idx = lax.broadcasted_iota(jnp.int32, (sub_rows, W_pad), 1)
            row0 = t * h_tile + i * sub_rows
            py = ((h_idx + row0).astype(jnp.float32) + 0.5) * (2.0 / H) - 1.0
            px = (w_idx.astype(jnp.float32) + 0.5) * (2.0 / W) - 1.0

            # --- expand estimate (raw 9-ch -> SVBRDF), slice target ----------
            nx = inp_ref[0, 0, pl.ds(r0, sub_rows), :]
            ny = inp_ref[0, 1, pl.ds(r0, sub_rows), :]
            inv_n = lax.rsqrt(nx * nx + ny * ny + 1.0)
            en = (nx * inv_n, ny * inv_n, inv_n)
            ed = tuple((inp_ref[0, 2 + c, pl.ds(r0, sub_rows), :] + 1.0) * 0.5
                       for c in range(3))
            er = (inp_ref[0, 5, pl.ds(r0, sub_rows), :] + 1.0) * 0.5
            es = tuple((inp_ref[0, 6 + c, pl.ds(r0, sub_rows), :] + 1.0) * 0.5
                       for c in range(3))

            tn = tuple(tgt_ref[0, c, pl.ds(r0, sub_rows), :] for c in range(3))
            td = tuple(tgt_ref[0, 3 + c, pl.ds(r0, sub_rows), :] for c in range(3))
            tr = tuple(tgt_ref[0, 6 + c, pl.ds(r0, sub_rows), :] for c in range(3))
            ts = tuple(tgt_ref[0, 9 + c, pl.ds(r0, sub_rows), :] for c in range(3))

            # --- L1 element-wise accumulation (log-space for diff/spec) ------
            acc_n = (acc_n + jnp.abs(en[0] - tn[0]) + jnp.abs(en[1] - tn[1])
                     + jnp.abs(en[2] - tn[2]))
            for c in range(3):
                acc_d = acc_d + jnp.abs(jnp.log(ed[c] + 0.01)
                                        - jnp.log(td[c] + 0.01))
                acc_r = acc_r + jnp.abs(er - tr[c])
                acc_s = acc_s + jnp.abs(jnp.log(es[c] + 0.01)
                                        - jnp.log(ts[c] + 0.01))

            # --- material precompute (once per sub-tile, shared by scenes) ---
            mat_e = _material_precompute(en, ed, er, es)
            # renormalize target normal for the render path only (cheap).
            inv_tn = lax.rsqrt(tn[0] * tn[0] + tn[1] * tn[1] + tn[2] * tn[2]
                               + _EPS_LEN)
            tn_r = (tn[0] * inv_tn, tn[1] * inv_tn, tn[2] * inv_tn)
            mat_t = _material_precompute(tn_r, td, tr[0], ts)

            # --- rendering loss: geometry shared, shade twice per scene ------
            for cam, lpos, lcol in scene_params:
                geom = _scene_geometry(cam, lpos, lcol, px, py)
                est_img = _shade(geom, mat_e)
                tgt_img = _shade(geom, mat_t)
                for c in range(3):
                    acc_rd = acc_rd + jnp.abs(jnp.log(est_img[c] + 0.1)
                                              - jnp.log(tgt_img[c] + 0.1))
            return (acc_n, acc_d, acc_r, acc_s, acc_rd)

        if n_sub == 1:
            accs = body(0, init)
        else:
            accs = lax.fori_loop(0, n_sub, body, init)
        acc_n, acc_d, acc_r, acc_s, acc_rd = accs

        # --- mask out padded lanes (only when W was padded up to W_pad) ------
        if W_pad > W:
            w_idx = lax.broadcasted_iota(jnp.int32, (sub_rows, W_pad), 1)
            mask = (w_idx < W).astype(jnp.float32)
            acc_n = acc_n * mask
            acc_d = acc_d * mask
            acc_r = acc_r * mask
            acc_s = acc_s * mask
            acc_rd = acc_rd * mask

        # --- single cross-lane reduction per loss term ------------------------
        sn = jnp.sum(acc_n, keepdims=True)
        sd = jnp.sum(acc_d, keepdims=True)
        sr = jnp.sum(acc_r, keepdims=True)
        ss = jnp.sum(acc_s, keepdims=True)
        s_render = jnp.sum(acc_rd, keepdims=True)

        # --- single consolidated lane-dense (8,128) output tile --------------
        row = lax.broadcasted_iota(jnp.int32, (8, 128), 0)
        tile = ((row == 0).astype(jnp.float32) * sn
                + (row == 1).astype(jnp.float32) * sd
                + (row == 2).astype(jnp.float32) * sr
                + (row == 3).astype(jnp.float32) * ss
                + (row == 4).astype(jnp.float32) * s_render)
        out_ref[...] = tile.reshape(1, 1, 8, 128)

    return kernel


def _choose_h_tile(H, W_pad, pixels_per_tile, B):
    """Row-tile height: multiple of 8, divides H, >= 2 grid steps when possible."""
    if H % 8 != 0:
        return H
    rows = max(8, (pixels_per_tile // max(W_pad, 1)) // 8 * 8)
    ht = min(H, rows)
    while H % ht != 0:
        ht -= 8
    # v7x: make sure the grid has >= 2 steps so both TensorCores get work.
    if B * (H // ht) < 2 and ht >= 16 and (ht // 2) % 8 == 0 and H % (ht // 2) == 0:
        ht //= 2
    return ht


# ----------------------------------------------------------------------------
# wrapper
# ----------------------------------------------------------------------------
def mix_loss(input_batch, target_batch, scenes, l1_weight=0.1, render_weight=1.0,
             pixels_per_tile=32768):
    B, C_in, H, W = input_batch.shape
    S = scenes.shape[1]

    inp = input_batch.astype(jnp.float32)
    tgt = target_batch.astype(jnp.float32)
    scenes_flat = scenes.astype(jnp.float32).reshape(-1)     # (B*S*9,) -> SMEM

    # lane-dense padding of W to a multiple of 128 (padded lanes masked out)
    if W % 128 == 0:
        W_pad = W
    else:
        W_pad = ((W + 127) // 128) * 128
        pad = ((0, 0), (0, 0), (0, 0), (0, W_pad - W))
        inp = jnp.pad(inp, pad)
        tgt = jnp.pad(tgt, pad)

    h_tile = _choose_h_tile(H, W_pad, pixels_per_tile, B)
    n_tiles = H // h_tile
    sub_rows = 8 if h_tile % 8 == 0 else h_tile   # vreg-scale sub-tiles

    kernel = _make_mix_loss_kernel(S, H, W, W_pad, h_tile, sub_rows)

    out = pl.pallas_call(
        kernel,
        out_shape=jax.ShapeDtypeStruct((B, n_tiles, 8, 128), jnp.float32),
        grid=(B, n_tiles),
        in_specs=[
            pl.BlockSpec(memory_space=pltpu.MemorySpace.SMEM),                 # scenes
            pl.BlockSpec((1, C_in, h_tile, W_pad), lambda b, t: (b, 0, t, 0)),  # estimate
            pl.BlockSpec((1, 12, h_tile, W_pad), lambda b, t: (b, 0, t, 0)),    # target
        ],
        out_specs=pl.BlockSpec((1, 1, 8, 128), lambda b, t: (b, t, 0, 0)),
        compiler_params=pltpu.CompilerParams(
            dimension_semantics=("parallel", "parallel"),
            vmem_limit_bytes=32 * 1024 * 1024,
        ),
    )(scenes_flat, inp, tgt)

    sums = out[:, :, :, 0]                    # (B, nT, 8)
    totals = jnp.sum(sums, axis=(0, 1))       # (8,)
    l1_val = (totals[0] + totals[1] + totals[2] + totals[3]) / (B * 3 * H * W)
    render_val = totals[4] / (B * S * 3 * H * W)
    return l1_weight * l1_val + render_weight * render_val


# ----------------------------------------------------------------------------
# deterministic synthetic data
# ----------------------------------------------------------------------------
def _hemisphere_dirs(key, shape):
    v = jax.random.normal(key, shape + (3,))
    v = v.at[..., 2].set(jnp.abs(v[..., 2]) + 0.1)
    return v / jnp.linalg.norm(v, axis=-1, keepdims=True)


def generate_scenes(key, batch, n_random=3, n_specular=6):
    """Per-batch scenes: [cam_xyz, light_xyz, light_rgb] -> (B, S, 9)."""
    kc, kl, kcr, kd, kcs = jax.random.split(key, 5)
    dist = 2.0

    cam_r = _hemisphere_dirs(kc, (batch, n_random)) * dist
    light_r = _hemisphere_dirs(kl, (batch, n_random)) * dist
    col_r = jnp.broadcast_to(
        jax.random.uniform(kcr, (batch, n_random, 1), minval=3.0, maxval=6.0),
        (batch, n_random, 3),
    )
    rand_scenes = jnp.concatenate([cam_r, light_r, col_r], axis=-1)

    d = _hemisphere_dirs(kd, (batch, n_specular))
    cam_s = d * dist
    light_s = jnp.concatenate([-d[..., 0:1], -d[..., 1:2], d[..., 2:3]], axis=-1) * dist
    col_s = jnp.broadcast_to(
        jax.random.uniform(kcs, (batch, n_specular, 1), minval=3.0, maxval=6.0),
        (batch, n_specular, 3),
    )
    spec_scenes = jnp.concatenate([cam_s, light_s, col_s], axis=-1)

    return jnp.concatenate([rand_scenes, spec_scenes], axis=1).astype(jnp.float32)


if __name__ == "__main__":
    B, H, W = 2, 32, 128   # small but lane-dense (W multiple of 128)
    key = jax.random.PRNGKey(0)
    k_in, k_tn, k_td, k_tr, k_ts, k_scene = jax.random.split(key, 6)

    # raw network output: 9 channels in [-1, 1]
    input_batch = jax.random.uniform(
        k_in, (B, 9, H, W), minval=-1.0, maxval=1.0, dtype=jnp.float32
    )

    # target SVBRDF: 12 channels (unit normals + diffuse + roughness + specular)
    tn = jax.random.normal(k_tn, (B, 3, H, W))
    tn = tn.at[:, 2].set(jnp.abs(tn[:, 2]) + 0.1)
    tn = tn / jnp.linalg.norm(tn, axis=1, keepdims=True)
    td = jax.random.uniform(k_td, (B, 3, H, W), minval=0.05, maxval=0.95)
    tr = jnp.broadcast_to(
        jax.random.uniform(k_tr, (B, 1, H, W), minval=0.1, maxval=0.9), (B, 3, H, W)
    )
    ts = jax.random.uniform(k_ts, (B, 3, H, W), minval=0.05, maxval=0.95)
    target_batch = jnp.concatenate([tn, td, tr, ts], axis=1).astype(jnp.float32)

    scenes = generate_scenes(k_scene, B, n_random=3, n_specular=6)  # (B, 9, 9)

    # pixels_per_tile=2048 forces h_tile=16 -> 2 pixel tiles per batch element
    # and 2 in-kernel sub-tiles, exercising both the grid tiling and the
    # fori_loop path at this small test size (use the default ~32K in prod).
    loss = mix_loss(input_batch, target_batch, scenes,
                    l1_weight=0.1, render_weight=1.0, pixels_per_tile=2048)
    loss = jax.block_until_ready(loss)
    assert jnp.isfinite(loss), f"non-finite loss: {loss}"
    print("KERNEL_OK")
</pallas_src>

<mosaic_0001>
module attributes {stable_mosaic.version = 11 : i64} {
  func.func @kernel(%arg0: i32, %arg1: i32, %arg2: memref<162xf32, #tpu.memory_space<smem>>, %arg3: memref<1x9x16x128xf32, #tpu.memory_space<vmem>>, %arg4: memref<1x12x16x128xf32, #tpu.memory_space<vmem>>, %arg5: memref<1x1x8x128xf32, #tpu.memory_space<vmem>>) attributes {dimension_semantics = [#tpu.dimension_semantics<parallel>, #tpu.dimension_semantics<parallel>], iteration_bounds = array<i64: 2, 2>, scalar_prefetch = 0 : i64, scratch_operands = 0 : i64, tpu.core_type = #tpu.core_type<tc>, window_params = [{transform_indices = @transform_0, window_bounds = array<i64: 162>}, {transform_indices = @transform_1, window_bounds = array<i64: 1, 9, 16, 128>}, {transform_indices = @transform_2, window_bounds = array<i64: 1, 12, 16, 128>}, {transform_indices = @transform_3, window_bounds = array<i64: 1, 1, 8, 128>}]} {
    %c81_i32 = arith.constant 81 : i32
    %0 = arith.muli %arg0, %c81_i32 : i32
    %c0_i32 = arith.constant 0 : i32
    %1 = arith.addi %0, %c0_i32 : i32
    %c0_i32_0 = arith.constant 0 : i32
    %2 = arith.addi %1, %c0_i32_0 : i32
    %3 = arith.index_cast %2 : i32 to index
    %4 = memref.load %arg2[%3] : memref<162xf32, #tpu.memory_space<smem>>
    %c1_i32 = arith.constant 1 : i32
    %5 = arith.addi %1, %c1_i32 : i32
    %6 = arith.index_cast %5 : i32 to index
    %7 = memref.load %arg2[%6] : memref<162xf32, #tpu.memory_space<smem>>
    %c2_i32 = arith.constant 2 : i32
    %8 = arith.addi %1, %c2_i32 : i32
    %9 = arith.index_cast %8 : i32 to index
    %10 = memref.load %arg2[%9] : memref<162xf32, #tpu.memory_space<smem>>
    %c3_i32 = arith.constant 3 : i32
    %11 = arith.addi %1, %c3_i32 : i32
    %c0_i32_1 = arith.constant 0 : i32
    %12 = arith.addi %11, %c0_i32_1 : i32
    %13 = arith.index_cast %12 : i32 to index
    %14 = memref.load %arg2[%13] : memref<162xf32, #tpu.memory_space<smem>>
    %c3_i32_2 = arith.constant 3 : i32
    %15 = arith.addi %1, %c3_i32_2 : i32
    %c1_i32_3 = arith.constant 1 : i32
    %16 = arith.addi %15, %c1_i32_3 : i32
    %17 = arith.index_cast %16 : i32 to index
    %18 = memref.load %arg2[%17] : memref<162xf32, #tpu.memory_space<smem>>
    %c3_i32_4 = arith.constant 3 : i32
    %19 = arith.addi %1, %c3_i32_4 : i32
    %c2_i32_5 = arith.constant 2 : i32
    %20 = arith.addi %19, %c2_i32_5 : i32
    %21 = arith.index_cast %20 : i32 to index
    %22 = memref.load %arg2[%21] : memref<162xf32, #tpu.memory_space<smem>>
    %c6_i32 = arith.constant 6 : i32
    %23 = arith.addi %1, %c6_i32 : i32
    %c0_i32_6 = arith.constant 0 : i32
    %24 = arith.addi %23, %c0_i32_6 : i32
    %25 = arith.index_cast %24 : i32 to index
    %26 = memref.load %arg2[%25] : memref<162xf32, #tpu.memory_space<smem>>
    %c6_i32_7 = arith.constant 6 : i32
    %27 = arith.addi %1, %c6_i32_7 : i32
    %c1_i32_8 = arith.constant 1 : i32
    %28 = arith.addi %27, %c1_i32_8 : i32
    %29 = arith.index_cast %28 : i32 to index
    %30 = memref.load %arg2[%29] : memref<162xf32, #tpu.memory_space<smem>>
    %c6_i32_9 = arith.constant 6 : i32
    %31 = arith.addi %1, %c6_i32_9 : i32
    %c2_i32_10 = arith.constant 2 : i32
    %32 = arith.addi %31, %c2_i32_10 : i32
    %33 = arith.index_cast %32 : i32 to index
    %34 = memref.load %arg2[%33] : memref<162xf32, #tpu.memory_space<smem>>
    %c9_i32 = arith.constant 9 : i32
    %35 = arith.addi %0, %c9_i32 : i32
    %c0_i32_11 = arith.constant 0 : i32
    %36 = arith.addi %35, %c0_i32_11 : i32
    %37 = arith.index_cast %36 : i32 to index
    %38 = memref.load %arg2[%37] : memref<162xf32, #tpu.memory_space<smem>>
    %c1_i32_12 = arith.constant 1 : i32
    %39 = arith.addi %35, %c1_i32_12 : i32
    %40 = arith.index_cast %39 : i32 to index
    %41 = memref.load %arg2[%40] : memref<162xf32, #tpu.memory_space<smem>>
    %c2_i32_13 = arith.constant 2 : i32
    %42 = arith.addi %35, %c2_i32_13 : i32
    %43 = arith.index_cast %42 : i32 to index
    %44 = memref.load %arg2[%43] : memref<162xf32, #tpu.memory_space<smem>>
    %c3_i32_14 = arith.constant 3 : i32
    %45 = arith.addi %35, %c3_i32_14 : i32
    %c0_i32_15 = arith.constant 0 : i32
    %46 = arith.addi %45, %c0_i32_15 : i32
    %47 = arith.index_cast %46 : i32 to index
    %48 = memref.load %arg2[%47] : memref<162xf32, #tpu.memory_space<smem>>
    %c3_i32_16 = arith.constant 3 : i32
    %49 = arith.addi %35, %c3_i32_16 : i32
    %c1_i32_17 = arith.constant 1 : i32
    %50 = arith.addi %49, %c1_i32_17 : i32
    %51 = arith.index_cast %50 : i32 to index
    %52 = memref.load %arg2[%51] : memref<162xf32, #tpu.memory_space<smem>>
    %c3_i32_18 = arith.constant 3 : i32
    %53 = arith.addi %35, %c3_i32_18 : i32
    %c2_i32_19 = arith.constant 2 : i32
    %54 = arith.addi %53, %c2_i32_19 : i32
    %55 = arith.index_cast %54 : i32 to index
    %56 = memref.load %arg2[%55] : memref<162xf32, #tpu.memory_space<smem>>
    %c6_i32_20 = arith.constant 6 : i32
    %57 = arith.addi %35, %c6_i32_20 : i32
    %c0_i32_21 = arith.constant 0 : i32
    %58 = arith.addi %57, %c0_i32_21 : i32
    %59 = arith.index_cast %58 : i32 to index
    %60 = memref.load %arg2[%59] : memref<162xf32, #tpu.memory_space<smem>>
    %c6_i32_22 = arith.constant 6 : i32
    %61 = arith.addi %35, %c6_i32_22 : i32
    %c1_i32_23 = arith.constant 1 : i32
    %62 = arith.addi %61, %c1_i32_23 : i32
    %63 = arith.index_cast %62 : i32 to index
    %64 = memref.load %arg2[%63] : memref<162xf32, #tpu.memory_space<smem>>
    %c6_i32_24 = arith.constant 6 : i32
    %65 = arith.addi %35, %c6_i32_24 : i32
    %c2_i32_25 = arith.constant 2 : i32
    %66 = arith.addi %65, %c2_i32_25 : i32
    %67 = arith.index_cast %66 : i32 to index
    %68 = memref.load %arg2[%67] : memref<162xf32, #tpu.memory_space<smem>>
    %c18_i32 = arith.constant 18 : i32
    %69 = arith.addi %0, %c18_i32 : i32
    %c0_i32_26 = arith.constant 0 : i32
    %70 = arith.addi %69, %c0_i32_26 : i32
    %71 = arith.index_cast %70 : i32 to index
    %72 = memref.load %arg2[%71] : memref<162xf32, #tpu.memory_space<smem>>
    %c1_i32_27 = arith.constant 1 : i32
    %73 = arith.addi %69, %c1_i32_27 : i32
    %74 = arith.index_cast %73 : i32 to index
    %75 = memref.load %arg2[%74] : memref<162xf32, #tpu.memory_space<smem>>
    %c2_i32_28 = arith.constant 2 : i32
    %76 = arith.addi %69, %c2_i32_28 : i32
    %77 = arith.index_cast %76 : i32 to index
    %78 = memref.load %arg2[%77] : memref<162xf32, #tpu.memory_space<smem>>
    %c3_i32_29 = arith.constant 3 : i32
    %79 = arith.addi %69, %c3_i32_29 : i32
    %c0_i32_30 = arith.constant 0 : i32
    %80 = arith.addi %79, %c0_i32_30 : i32
    %81 = arith.index_cast %80 : i32 to index
    %82 = memref.load %arg2[%81] : memref<162xf32, #tpu.memory_space<smem>>
    %c3_i32_31 = arith.constant 3 : i32
    %83 = arith.addi %69, %c3_i32_31 : i32
    %c1_i32_32 = arith.constant 1 : i32
    %84 = arith.addi %83, %c1_i32_32 : i32
    %85 = arith.index_cast %84 : i32 to index
    %86 = memref.load %arg2[%85] : memref<162xf32, #tpu.memory_space<smem>>
    %c3_i32_33 = arith.constant 3 : i32
    %87 = arith.addi %69, %c3_i32_33 : i32
    %c2_i32_34 = arith.constant 2 : i32
    %88 = arith.addi %87, %c2_i32_34 : i32
    %89 = arith.index_cast %88 : i32 to index
    %90 = memref.load %arg2[%89] : memref<162xf32, #tpu.memory_space<smem>>
    %c6_i32_35 = arith.constant 6 : i32
    %91 = arith.addi %69, %c6_i32_35 : i32
    %c0_i32_36 = arith.constant 0 : i32
    %92 = arith.addi %91, %c0_i32_36 : i32
    %93 = arith.index_cast %92 : i32 to index
    %94 = memref.load %arg2[%93] : memref<162xf32, #tpu.memory_space<smem>>
    %c6_i32_37 = arith.constant 6 : i32
    %95 = arith.addi %69, %c6_i32_37 : i32
    %c1_i32_38 = arith.constant 1 : i32
    %96 = arith.addi %95, %c1_i32_38 : i32
    %97 = arith.index_cast %96 : i32 to index
    %98 = memref.load %arg2[%97] : memref<162xf32, #tpu.memory_space<smem>>
    %c6_i32_39 = arith.constant 6 : i32
    %99 = arith.addi %69, %c6_i32_39 : i32
    %c2_i32_40 = arith.constant 2 : i32
    %100 = arith.addi %99, %c2_i32_40 : i32
    %101 = arith.index_cast %100 : i32 to index
    %102 = memref.load %arg2[%101] : memref<162xf32, #tpu.memory_space<smem>>
    %c27_i32 = arith.constant 27 : i32
    %103 = arith.addi %0, %c27_i32 : i32
    %c0_i32_41 = arith.constant 0 : i32
    %104 = arith.addi %103, %c0_i32_41 : i32
    %105 = arith.index_cast %104 : i32 to index
    %106 = memref.load %arg2[%105] : memref<162xf32, #tpu.memory_space<smem>>
    %c1_i32_42 = arith.constant 1 : i32
    %107 = arith.addi %103, %c1_i32_42 : i32
    %108 = arith.index_cast %107 : i32 to index
    %109 = memref.load %arg2[%108] : memref<162xf32, #tpu.memory_space<smem>>
    %c2_i32_43 = arith.constant 2 : i32
    %110 = arith.addi %103, %c2_i32_43 : i32
    %111 = arith.index_cast %110 : i32 to index
    %112 = memref.load %arg2[%111] : memref<162xf32, #tpu.memory_space<smem>>
    %c3_i32_44 = arith.constant 3 : i32
    %113 = arith.addi %103, %c3_i32_44 : i32
    %c0_i32_45 = arith.constant 0 : i32
    %114 = arith.addi %113, %c0_i32_45 : i32
    %115 = arith.index_cast %114 : i32 to index
    %116 = memref.load %arg2[%115] : memref<162xf32, #tpu.memory_space<smem>>
    %c3_i32_46 = arith.constant 3 : i32
    %117 = arith.addi %103, %c3_i32_46 : i32
    %c1_i32_47 = arith.constant 1 : i32
    %118 = arith.addi %117, %c1_i32_47 : i32
    %119 = arith.index_cast %118 : i32 to index
    %120 = memref.load %arg2[%119] : memref<162xf32, #tpu.memory_space<smem>>
    %c3_i32_48 = arith.constant 3 : i32
    %121 = arith.addi %103, %c3_i32_48 : i32
    %c2_i32_49 = arith.constant 2 : i32
    %122 = arith.addi %121, %c2_i32_49 : i32
    %123 = arith.index_cast %122 : i32 to index
    %124 = memref.load %arg2[%123] : memref<162xf32, #tpu.memory_space<smem>>
    %c6_i32_50 = arith.constant 6 : i32
    %125 = arith.addi %103, %c6_i32_50 : i32
    %c0_i32_51 = arith.constant 0 : i32
    %126 = arith.addi %125, %c0_i32_51 : i32
    %127 = arith.index_cast %126 : i32 to index
    %128 = memref.load %arg2[%127] : memref<162xf32, #tpu.memory_space<smem>>
    %c6_i32_52 = arith.constant 6 : i32
    %129 = arith.addi %103, %c6_i32_52 : i32
    %c1_i32_53 = arith.constant 1 : i32
    %130 = arith.addi %129, %c1_i32_53 : i32
    %131 = arith.index_cast %130 : i32 to index
    %132 = memref.load %arg2[%131] : memref<162xf32, #tpu.memory_space<smem>>
    %c6_i32_54 = arith.constant 6 : i32
    %133 = arith.addi %103, %c6_i32_54 : i32
    %c2_i32_55 = arith.constant 2 : i32
    %134 = arith.addi %133, %c2_i32_55 : i32
    %135 = arith.index_cast %134 : i32 to index
    %136 = memref.load %arg2[%135] : memref<162xf32, #tpu.memory_space<smem>>
    %c36_i32 = arith.constant 36 : i32
    %137 = arith.addi %0, %c36_i32 : i32
    %c0_i32_56 = arith.constant 0 : i32
    %138 = arith.addi %137, %c0_i32_56 : i32
    %139 = arith.index_cast %138 : i32 to index
    %140 = memref.load %arg2[%139] : memref<162xf32, #tpu.memory_space<smem>>
    %c1_i32_57 = arith.constant 1 : i32
    %141 = arith.addi %137, %c1_i32_57 : i32
    %142 = arith.index_cast %141 : i32 to index
    %143 = memref.load %arg2[%142] : memref<162xf32, #tpu.memory_space<smem>>
    %c2_i32_58 = arith.constant 2 : i32
    %144 = arith.addi %137, %c2_i32_58 : i32
    %145 = arith.index_cast %144 : i32 to index
    %146 = memref.load %arg2[%145] : memref<162xf32, #tpu.memory_space<smem>>
    %c3_i32_59 = arith.constant 3 : i32
    %147 = arith.addi %137, %c3_i32_59 : i32
    %c0_i32_60 = arith.constant 0 : i32
    %148 = arith.addi %147, %c0_i32_60 : i32
    %149 = arith.index_cast %148 : i32 to index
    %150 = memref.load %arg2[%149] : memref<162xf32, #tpu.memory_space<smem>>
    %c3_i32_61 = arith.constant 3 : i32
    %151 = arith.addi %137, %c3_i32_61 : i32
    %c1_i32_62 = arith.constant 1 : i32
    %152 = arith.addi %151, %c1_i32_62 : i32
    %153 = arith.index_cast %152 : i32 to index
    %154 = memref.load %arg2[%153] : memref<162xf32, #tpu.memory_space<smem>>
    %c3_i32_63 = arith.constant 3 : i32
    %155 = arith.addi %137, %c3_i32_63 : i32
    %c2_i32_64 = arith.constant 2 : i32
    %156 = arith.addi %155, %c2_i32_64 : i32
    %157 = arith.index_cast %156 : i32 to index
    %158 = memref.load %arg2[%157] : memref<162xf32, #tpu.memory_space<smem>>
    %c6_i32_65 = arith.constant 6 : i32
    %159 = arith.addi %137, %c6_i32_65 : i32
    %c0_i32_66 = arith.constant 0 : i32
    %160 = arith.addi %159, %c0_i32_66 : i32
    %161 = arith.index_cast %160 : i32 to index
    %162 = memref.load %arg2[%161] : memref<162xf32, #tpu.memory_space<smem>>
    %c6_i32_67 = arith.constant 6 : i32
    %163 = arith.addi %137, %c6_i32_67 : i32
    %c1_i32_68 = arith.constant 1 : i32
    %164 = arith.addi %163, %c1_i32_68 : i32
    %165 = arith.index_cast %164 : i32 to index
    %166 = memref.load %arg2[%165] : memref<162xf32, #tpu.memory_space<smem>>
    %c6_i32_69 = arith.constant 6 : i32
    %167 = arith.addi %137, %c6_i32_69 : i32
    %c2_i32_70 = arith.constant 2 : i32
    %168 = arith.addi %167, %c2_i32_70 : i32
    %169 = arith.index_cast %168 : i32 to index
    %170 = memref.load %arg2[%169] : memref<162xf32, #tpu.memory_space<smem>>
    %c45_i32 = arith.constant 45 : i32
    %171 = arith.addi %0, %c45_i32 : i32
    %c0_i32_71 = arith.constant 0 : i32
    %172 = arith.addi %171, %c0_i32_71 : i32
    %173 = arith.index_cast %172 : i32 to index
    %174 = memref.load %arg2[%173] : memref<162xf32, #tpu.memory_space<smem>>
    %c1_i32_72 = arith.constant 1 : i32
    %175 = arith.addi %171, %c1_i32_72 : i32
    %176 = arith.index_cast %175 : i32 to index
    %177 = memref.load %arg2[%176] : memref<162xf32, #tpu.memory_space<smem>>
    %c2_i32_73 = arith.constant 2 : i32
    %178 = arith.addi %171, %c2_i32_73 : i32
    %179 = arith.index_cast %178 : i32 to index
    %180 = memref.load %arg2[%179] : memref<162xf32, #tpu.memory_space<smem>>
    %c3_i32_74 = arith.constant 3 : i32
    %181 = arith.addi %171, %c3_i32_74 : i32
    %c0_i32_75 = arith.constant 0 : i32
    %182 = arith.addi %181, %c0_i32_75 : i32
    %183 = arith.index_cast %182 : i32 to index
    %184 = memref.load %arg2[%183] : memref<162xf32, #tpu.memory_space<smem>>
    %c3_i32_76 = arith.constant 3 : i32
    %185 = arith.addi %171, %c3_i32_76 : i32
    %c1_i32_77 = arith.constant 1 : i32
    %186 = arith.addi %185, %c1_i32_77 : i32
    %187 = arith.index_cast %186 : i32 to index
    %188 = memref.load %arg2[%187] : memref<162xf32, #tpu.memory_space<smem>>
    %c3_i32_78 = arith.constant 3 : i32
    %189 = arith.addi %171, %c3_i32_78 : i32
    %c2_i32_79 = arith.constant 2 : i32
    %190 = arith.addi %189, %c2_i32_79 : i32
    %191 = arith.index_cast %190 : i32 to index
    %192 = memref.load %arg2[%191] : memref<162xf32, #tpu.memory_space<smem>>
    %c6_i32_80 = arith.constant 6 : i32
    %193 = arith.addi %171, %c6_i32_80 : i32
    %c0_i32_81 = arith.constant 0 : i32
    %194 = arith.addi %193, %c0_i32_81 : i32
    %195 = arith.index_cast %194 : i32 to index
    %196 = memref.load %arg2[%195] : memref<162xf32, #tpu.memory_space<smem>>
    %c6_i32_82 = arith.constant 6 : i32
    %197 = arith.addi %171, %c6_i32_82 : i32
    %c1_i32_83 = arith.constant 1 : i32
    %198 = arith.addi %197, %c1_i32_83 : i32
    %199 = arith.index_cast %198 : i32 to index
    %200 = memref.load %arg2[%199] : memref<162xf32, #tpu.memory_space<smem>>
    %c6_i32_84 = arith.constant 6 : i32
    %201 = arith.addi %171, %c6_i32_84 : i32
    %c2_i32_85 = arith.constant 2 : i32
    %202 = arith.addi %201, %c2_i32_85 : i32
    %203 = arith.index_cast %202 : i32 to index
    %204 = memref.load %arg2[%203] : memref<162xf32, #tpu.memory_space<smem>>
    %c54_i32 = arith.constant 54 : i32
    %205 = arith.addi %0, %c54_i32 : i32
    %c0_i32_86 = arith.constant 0 : i32
    %206 = arith.addi %205, %c0_i32_86 : i32
    %207 = arith.index_cast %206 : i32 to index
    %208 = memref.load %arg2[%207] : memref<162xf32, #tpu.memory_space<smem>>
    %c1_i32_87 = arith.constant 1 : i32
    %209 = arith.addi %205, %c1_i32_87 : i32
    %210 = arith.index_cast %209 : i32 to index
    %211 = memref.load %arg2[%210] : memref<162xf32, #tpu.memory_space<smem>>
    %c2_i32_88 = arith.constant 2 : i32
    %212 = arith.addi %205, %c2_i32_88 : i32
    %213 = arith.index_cast %212 : i32 to index
    %214 = memref.load %arg2[%213] : memref<162xf32, #tpu.memory_space<smem>>
    %c3_i32_89 = arith.constant 3 : i32
    %215 = arith.addi %205, %c3_i32_89 : i32
    %c0_i32_90 = arith.constant 0 : i32
    %216 = arith.addi %215, %c0_i32_90 : i32
    %217 = arith.index_cast %216 : i32 to index
    %218 = memref.load %arg2[%217] : memref<162xf32, #tpu.memory_space<smem>>
    %c3_i32_91 = arith.constant 3 : i32
    %219 = arith.addi %205, %c3_i32_91 : i32
    %c1_i32_92 = arith.constant 1 : i32
    %220 = arith.addi %219, %c1_i32_92 : i32
    %221 = arith.index_cast %220 : i32 to index
    %222 = memref.load %arg2[%221] : memref<162xf32, #tpu.memory_space<smem>>
    %c3_i32_93 = arith.constant 3 : i32
    %223 = arith.addi %205, %c3_i32_93 : i32
    %c2_i32_94 = arith.constant 2 : i32
    %224 = arith.addi %223, %c2_i32_94 : i32
    %225 = arith.index_cast %224 : i32 to index
    %226 = memref.load %arg2[%225] : memref<162xf32, #tpu.memory_space<smem>>
    %c6_i32_95 = arith.constant 6 : i32
    %227 = arith.addi %205, %c6_i32_95 : i32
    %c0_i32_96 = arith.constant 0 : i32
    %228 = arith.addi %227, %c0_i32_96 : i32
    %229 = arith.index_cast %228 : i32 to index
    %230 = memref.load %arg2[%229] : memref<162xf32, #tpu.memory_space<smem>>
    %c6_i32_97 = arith.constant 6 : i32
    %231 = arith.addi %205, %c6_i32_97 : i32
    %c1_i32_98 = arith.constant 1 : i32
    %232 = arith.addi %231, %c1_i32_98 : i32
    %233 = arith.index_cast %232 : i32 to index
    %234 = memref.load %arg2[%233] : memref<162xf32, #tpu.memory_space<smem>>
    %c6_i32_99 = arith.constant 6 : i32
    %235 = arith.addi %205, %c6_i32_99 : i32
    %c2_i32_100 = arith.constant 2 : i32
    %236 = arith.addi %235, %c2_i32_100 : i32
    %237 = arith.index_cast %236 : i32 to index
    %238 = memref.load %arg2[%237] : memref<162xf32, #tpu.memory_space<smem>>
    %c63_i32 = arith.constant 63 : i32
    %239 = arith.addi %0, %c63_i32 : i32
    %c0_i32_101 = arith.constant 0 : i32
    %240 = arith.addi %239, %c0_i32_101 : i32
    %241 = arith.index_cast %240 : i32 to index
    %242 = memref.load %arg2[%241] : memref<162xf32, #tpu.memory_space<smem>>
    %c1_i32_102 = arith.constant 1 : i32
    %243 = arith.addi %239, %c1_i32_102 : i32
    %244 = arith.index_cast %243 : i32 to index
    %245 = memref.load %arg2[%244] : memref<162xf32, #tpu.memory_space<smem>>
    %c2_i32_103 = arith.constant 2 : i32
    %246 = arith.addi %239, %c2_i32_103 : i32
    %247 = arith.index_cast %246 : i32 to index
    %248 = memref.load %arg2[%247] : memref<162xf32, #tpu.memory_space<smem>>
    %c3_i32_104 = arith.constant 3 : i32
    %249 = arith.addi %239, %c3_i32_104 : i32
    %c0_i32_105 = arith.constant 0 : i32
    %250 = arith.addi %249, %c0_i32_105 : i32
    %251 = arith.index_cast %250 : i32 to index
    %252 = memref.load %arg2[%251] : memref<162xf32, #tpu.memory_space<smem>>
    %c3_i32_106 = arith.constant 3 : i32
    %253 = arith.addi %239, %c3_i32_106 : i32
    %c1_i32_107 = arith.constant 1 : i32
    %254 = arith.addi %253, %c1_i32_107 : i32
    %255 = arith.index_cast %254 : i32 to index
    %256 = memref.load %arg2[%255] : memref<162xf32, #tpu.memory_space<smem>>
    %c3_i32_108 = arith.constant 3 : i32
    %257 = arith.addi %239, %c3_i32_108 : i32
    %c2_i32_109 = arith.constant 2 : i32
    %258 = arith.addi %257, %c2_i32_109 : i32
    %259 = arith.index_cast %258 : i32 to index
    %260 = memref.load %arg2[%259] : memref<162xf32, #tpu.memory_space<smem>>
    %c6_i32_110 = arith.constant 6 : i32
    %261 = arith.addi %239, %c6_i32_110 : i32
    %c0_i32_111 = arith.constant 0 : i32
    %262 = arith.addi %261, %c0_i32_111 : i32
    %263 = arith.index_cast %262 : i32 to index
    %264 = memref.load %arg2[%263] : memref<162xf32, #tpu.memory_space<smem>>
    %c6_i32_112 = arith.constant 6 : i32
    %265 = arith.addi %239, %c6_i32_112 : i32
    %c1_i32_113 = arith.constant 1 : i32
    %266 = arith.addi %265, %c1_i32_113 : i32
    %267 = arith.index_cast %266 : i32 to index
    %268 = memref.load %arg2[%267] : memref<162xf32, #tpu.memory_space<smem>>
    %c6_i32_114 = arith.constant 6 : i32
    %269 = arith.addi %239, %c6_i32_114 : i32
    %c2_i32_115 = arith.constant 2 : i32
    %270 = arith.addi %269, %c2_i32_115 : i32
    %271 = arith.index_cast %270 : i32 to index
    %272 = memref.load %arg2[%271] : memref<162xf32, #tpu.memory_space<smem>>
    %c72_i32 = arith.constant 72 : i32
    %273 = arith.addi %0, %c72_i32 : i32
    %c0_i32_116 = arith.constant 0 : i32
    %274 = arith.addi %273, %c0_i32_116 : i32
    %275 = arith.index_cast %274 : i32 to index
    %276 = memref.load %arg2[%275] : memref<162xf32, #tpu.memory_space<smem>>
    %c1_i32_117 = arith.constant 1 : i32
    %277 = arith.addi %273, %c1_i32_117 : i32
    %278 = arith.index_cast %277 : i32 to index
    %279 = memref.load %arg2[%278] : memref<162xf32, #tpu.memory_space<smem>>
    %c2_i32_118 = arith.constant 2 : i32
    %280 = arith.addi %273, %c2_i32_118 : i32
    %281 = arith.index_cast %280 : i32 to index
    %282 = memref.load %arg2[%281] : memref<162xf32, #tpu.memory_space<smem>>
    %c3_i32_119 = arith.constant 3 : i32
    %283 = arith.addi %273, %c3_i32_119 : i32
    %c0_i32_120 = arith.constant 0 : i32
    %284 = arith.addi %283, %c0_i32_120 : i32
    %285 = arith.index_cast %284 : i32 to index
    %286 = memref.load %arg2[%285] : memref<162xf32, #tpu.memory_space<smem>>
    %c3_i32_121 = arith.constant 3 : i32
    %287 = arith.addi %273, %c3_i32_121 : i32
    %c1_i32_122 = arith.constant 1 : i32
    %288 = arith.addi %287, %c1_i32_122 : i32
    %289 = arith.index_cast %288 : i32 to index
    %290 = memref.load %arg2[%289] : memref<162xf32, #tpu.memory_space<smem>>
    %c3_i32_123 = arith.constant 3 : i32
    %291 = arith.addi %273, %c3_i32_123 : i32
    %c2_i32_124 = arith.constant 2 : i32
    %292 = arith.addi %291, %c2_i32_124 : i32
    %293 = arith.index_cast %292 : i32 to index
    %294 = memref.load %arg2[%293] : memref<162xf32, #tpu.memory_space<smem>>
    %c6_i32_125 = arith.constant 6 : i32
    %295 = arith.addi %273, %c6_i32_125 : i32
    %c0_i32_126 = arith.constant 0 : i32
    %296 = arith.addi %295, %c0_i32_126 : i32
    %297 = arith.index_cast %296 : i32 to index
    %298 = memref.load %arg2[%297] : memref<162xf32, #tpu.memory_space<smem>>
    %c6_i32_127 = arith.constant 6 : i32
    %299 = arith.addi %273, %c6_i32_127 : i32
    %c1_i32_128 = arith.constant 1 : i32
    %300 = arith.addi %299, %c1_i32_128 : i32
    %301 = arith.index_cast %300 : i32 to index
    %302 = memref.load %arg2[%301] : memref<162xf32, #tpu.memory_space<smem>>
    %c6_i32_129 = arith.constant 6 : i32
    %303 = arith.addi %273, %c6_i32_129 : i32
    %c2_i32_130 = arith.constant 2 : i32
    %304 = arith.addi %303, %c2_i32_130 : i32
    %305 = arith.index_cast %304 : i32 to index
    %306 = memref.load %arg2[%305] : memref<162xf32, #tpu.memory_space<smem>>
    %cst = arith.constant 0.000000e+00 : f32
    %307 = vector.broadcast %cst : f32 to vector<8x128xf32>
    %c0_i32_131 = arith.constant 0 : i32
    %c2_i32_132 = arith.constant 2 : i32
    %308 = arith.addi %c0_i32_131, %c2_i32_132 : i32
    %c1_i32_133 = arith.constant 1 : i32
    %309:5 = scf.for %arg6 = %c0_i32_131 to %308 step %c1_i32_133 iter_args(%arg7 = %307, %arg8 = %307, %arg9 = %307, %arg10 = %307, %arg11 = %307) -> (vector<8x128xf32>, vector<8x128xf32>, vector<8x128xf32>, vector<8x128xf32>, vector<8x128xf32>)  : i32 {
      %c8_i32 = arith.constant 8 : i32
      %372 = arith.muli %arg6, %c8_i32 : i32
      %373 = tpu.assume_multiple %372, 8 : i32
      %374 = tpu.iota {dimensions = array<i32: 0>} : vector<8x128xi32>
      %375 = tpu.iota {dimensions = array<i32: 1>} : vector<8x128xi32>
      %c16_i32 = arith.constant 16 : i32
      %376 = arith.muli %arg1, %c16_i32 : i32
      %c8_i32_147 = arith.constant 8 : i32
      %377 = arith.muli %arg6, %c8_i32_147 : i32
      %378 = arith.addi %376, %377 : i32
      %379 = vector.broadcast %378 : i32 to vector<8x128xi32>
      %380 = arith.addi %374, %379 : vector<8x128xi32>
      %381 = arith.sitofp %380 : vector<8x128xi32> to vector<8x128xf32>
      %cst_148 = arith.constant 5.000000e-01 : f32
      %382 = vector.broadcast %cst_148 : f32 to vector<8x128xf32>
      %383 = arith.addf %381, %382 : vector<8x128xf32>
      %cst_149 = arith.constant 6.250000e-02 : f32
      %384 = vector.broadcast %cst_149 : f32 to vector<8x128xf32>
      %385 = arith.mulf %383, %384 : vector<8x128xf32>
      %cst_150 = arith.constant 1.000000e+00 : f32
      %386 = vector.broadcast %cst_150 : f32 to vector<8x128xf32>
      %387 = arith.subf %385, %386 : vector<8x128xf32>
      %388 = arith.sitofp %375 : vector<8x128xi32> to vector<8x128xf32>
      %cst_151 = arith.constant 5.000000e-01 : f32
      %389 = vector.broadcast %cst_151 : f32 to vector<8x128xf32>
      %390 = arith.addf %388, %389 : vector<8x128xf32>
      %cst_152 = arith.constant 1.562500e-02 : f32
      %391 = vector.broadcast %cst_152 : f32 to vector<8x128xf32>
      %392 = arith.mulf %390, %391 : vector<8x128xf32>
      %cst_153 = arith.constant 1.000000e+00 : f32
      %393 = vector.broadcast %cst_153 : f32 to vector<8x128xf32>
      %394 = arith.subf %392, %393 : vector<8x128xf32>
      %c0_154 = arith.constant 0 : index
      %c0_155 = arith.constant 0 : index
      %395 = arith.index_cast %373 : i32 to index
      %c0_156 = arith.constant 0 : index
      %396 = vector.load %arg3[%c0_154, %c0_155, %395, %c0_156] : memref<1x9x16x128xf32, #tpu.memory_space<vmem>>, vector<1x1x8x128xf32>
      %397 = vector.shape_cast %396 : vector<1x1x8x128xf32> to vector<8x128xf32>
      %c0_157 = arith.constant 0 : index
      %c1 = arith.constant 1 : index
      %398 = arith.index_cast %373 : i32 to index
      %c0_158 = arith.constant 0 : index
      %399 = vector.load %arg3[%c0_157, %c1, %398, %c0_158] : memref<1x9x16x128xf32, #tpu.memory_space<vmem>>, vector<1x1x8x128xf32>
      %400 = vector.shape_cast %399 : vector<1x1x8x128xf32> to vector<8x128xf32>
      %401 = arith.mulf %397, %397 : vector<8x128xf32>
      %402 = arith.mulf %400, %400 : vector<8x128xf32>
      %403 = arith.addf %401, %402 : vector<8x128xf32>
      %cst_159 = arith.constant 1.000000e+00 : f32
      %404 = vector.broadcast %cst_159 : f32 to vector<8x128xf32>
      %405 = arith.addf %403, %404 : vector<8x128xf32>
      %406 = math.rsqrt %405 : vector<8x128xf32>
      %407 = arith.mulf %397, %406 : vector<8x128xf32>
      %408 = arith.mulf %400, %406 : vector<8x128xf32>
      %c0_160 = arith.constant 0 : index
      %c2 = arith.constant 2 : index
      %409 = arith.index_cast %373 : i32 to index
      %c0_161 = arith.constant 0 : index
      %410 = vector.load %arg3[%c0_160, %c2, %409, %c0_161] : memref<1x9x16x128xf32, #tpu.memory_space<vmem>>, vector<1x1x8x128xf32>
      %411 = vector.shape_cast %410 : vector<1x1x8x128xf32> to vector<8x128xf32>
      %cst_162 = arith.constant 1.000000e+00 : f32
      %412 = vector.broadcast %cst_162 : f32 to vector<8x128xf32>
      %413 = arith.addf %411, %412 : vector<8x128xf32>
      %cst_163 = arith.constant 5.000000e-01 : f32
      %414 = vector.broadcast %cst_163 : f32 to vector<8x128xf32>
      %415 = arith.mulf %413, %414 : vector<8x128xf32>
      %c0_164 = arith.constant 0 : index
      %c3 = arith.constant 3 : index
      %416 = arith.index_cast %373 : i32 to index
      %c0_165 = arith.constant 0 : index
      %417 = vector.load %arg3[%c0_164, %c3, %416, %c0_165] : memref<1x9x16x128xf32, #tpu.memory_space<vmem>>, vector<1x1x8x128xf32>
      %418 = vector.shape_cast %417 : vector<1x1x8x128xf32> to vector<8x128xf32>
      %cst_166 = arith.constant 1.000000e+00 : f32
      %419 = vector.broadcast %cst_166 : f32 to vector<8x128xf32>
      %420 = arith.addf %418, %419 : vector<8x128xf32>
      %cst_167 = arith.constant 5.000000e-01 : f32
      %421 = vector.broadcast %cst_167 : f32 to vector<8x128xf32>
      %422 = arith.mulf %420, %421 : vector<8x128xf32>
      %c0_168 = arith.constant 0 : index
      %c4 = arith.constant 4 : index
      %423 = arith.index_cast %373 : i32 to index
      %c0_169 = arith.constant 0 : index
      %424 = vector.load %arg3[%c0_168, %c4, %423, %c0_169] : memref<1x9x16x128xf32, #tpu.memory_space<vmem>>, vector<1x1x8x128xf32>
      %425 = vector.shape_cast %424 : vector<1x1x8x128xf32> to vector<8x128xf32>
      %cst_170 = arith.constant 1.000000e+00 : f32
      %426 = vector.broadcast %cst_170 : f32 to vector<8x128xf32>
      %427 = arith.addf %425, %426 : vector<8x128xf32>
      %cst_171 = arith.constant 5.000000e-01 : f32
      %428 = vector.broadcast %cst_171 : f32 to vector<8x128xf32>
      %429 = arith.mulf %427, %428 : vector<8x128xf32>
      %c0_172 = arith.constant 0 : index
      %c5 = arith.constant 5 : index
      %430 = arith.index_cast %373 : i32 to index
      %c0_173 = arith.constant 0 : index
      %431 = vector.load %arg3[%c0_172, %c5, %430, %c0_173] : memref<1x9x16x128xf32, #tpu.memory_space<vmem>>, vector<1x1x8x128xf32>
      %432 = vector.shape_cast %431 : vector<1x1x8x128xf32> to vector<8x128xf32>
      %cst_174 = arith.constant 1.000000e+00 : f32
      %433 = vector.broadcast %cst_174 : f32 to vector<8x128xf32>
      %434 = arith.addf %432, %433 : vector<8x128xf32>
      %cst_175 = arith.constant 5.000000e-01 : f32
      %435 = vector.broadcast %cst_175 : f32 to vector<8x128xf32>
      %436 = arith.mulf %434, %435 : vector<8x128xf32>
      %c0_176 = arith.constant 0 : index
      %c6 = arith.constant 6 : index
      %437 = arith.index_cast %373 : i32 to index
      %c0_177 = arith.constant 0 : index
      %438 = vector.load %arg3[%c0_176, %c6, %437, %c0_177] : memref<1x9x16x128xf32, #tpu.memory_space<vmem>>, vector<1x1x8x128xf32>
      %439 = vector.shape_cast %438 : vector<1x1x8x128xf32> to vector<8x128xf32>
      %cst_178 = arith.constant 1.000000e+00 : f32
      %440 = vector.broadcast %cst_178 : f32 to vector<8x128xf32>
      %441 = arith.addf %439, %440 : vector<8x128xf32>
      %cst_179 = arith.constant 5.000000e-01 : f32
      %442 = vector.broadcast %cst_179 : f32 to vector<8x128xf32>
      %443 = arith.mulf %441, %442 : vector<8x128xf32>
      %c0_180 = arith.constant 0 : index
      %c7 = arith.constant 7 : index
      %444 = arith.index_cast %373 : i32 to index
      %c0_181 = arith.constant 0 : index
      %445 = vector.load %arg3[%c0_180, %c7, %444, %c0_181] : memref<1x9x16x128xf32, #tpu.memory_space<vmem>>, vector<1x1x8x128xf32>
      %446 = vector.shape_cast %445 : vector<1x1x8x128xf32> to vector<8x128xf32>
      %cst_182 = arith.constant 1.000000e+00 : f32
      %447 = vector.broadcast %cst_182 : f32 to vector<8x128xf32>
      %448 = arith.addf %446, %447 : vector<8x128xf32>
      %cst_183 = arith.constant 5.000000e-01 : f32
      %449 = vector.broadcast %cst_183 : f32 to vector<8x128xf32>
      %450 = arith.mulf %448, %449 : vector<8x128xf32>
      %c0_184 = arith.constant 0 : index
      %c8 = arith.constant 8 : index
      %451 = arith.index_cast %373 : i32 to index
      %c0_185 = arith.constant 0 : index
      %452 = vector.load %arg3[%c0_184, %c8, %451, %c0_185] : memref<1x9x16x128xf32, #tpu.memory_space<vmem>>, vector<1x1x8x128xf32>
      %453 = vector.shape_cast %452 : vector<1x1x8x128xf32> to vector<8x128xf32>
      %cst_186 = arith.constant 1.000000e+00 : f32
      %454 = vector.broadcast %cst_186 : f32 to vector<8x128xf32>
      %455 = arith.addf %453, %454 : vector<8x128xf32>
      %cst_187 = arith.constant 5.000000e-01 : f32
      %456 = vector.broadcast %cst_187 : f32 to vector<8x128xf32>
      %457 = arith.mulf %455, %456 : vector<8x128xf32>
      %c0_188 = arith.constant 0 : index
      %c0_189 = arith.constant 0 : index
      %458 = arith.index_cast %373 : i32 to index
      %c0_190 = arith.constant 0 : index
      %459 = vector.load %arg4[%c0_188, %c0_189, %458, %c0_190] : memref<1x12x16x128xf32, #tpu.memory_space<vmem>>, vector<1x1x8x128xf32>
      %460 = vector.shape_cast %459 : vector<1x1x8x128xf32> to vector<8x128xf32>
      %c0_191 = arith.constant 0 : index
      %c1_192 = arith.constant 1 : index
      %461 = arith.index_cast %373 : i32 to index
      %c0_193 = arith.constant 0 : index
      %462 = vector.load %arg4[%c0_191, %c1_192, %461, %c0_193] : memref<1x12x16x128xf32, #tpu.memory_space<vmem>>, vector<1x1x8x128xf32>
      %463 = vector.shape_cast %462 : vector<1x1x8x128xf32> to vector<8x128xf32>
      %c0_194 = arith.constant 0 : index
      %c2_195 = arith.constant 2 : index
      %464 = arith.index_cast %373 : i32 to index
      %c0_196 = arith.constant 0 : index
      %465 = vector.load %arg4[%c0_194, %c2_195, %464, %c0_196] : memref<1x12x16x128xf32, #tpu.memory_space<vmem>>, vector<1x1x8x128xf32>
      %466 = vector.shape_cast %465 : vector<1x1x8x128xf32> to vector<8x128xf32>
      %c0_197 = arith.constant 0 : index
      %c3_198 = arith.constant 3 : index
      %467 = arith.index_cast %373 : i32 to index
      %c0_199 = arith.constant 0 : index
      %468 = vector.load %arg4[%c0_197, %c3_198, %467, %c0_199] : memref<1x12x16x128xf32, #tpu.memory_space<vmem>>, vector<1x1x8x128xf32>
      %469 = vector.shape_cast %468 : vector<1x1x8x128xf32> to vector<8x128xf32>
      %c0_200 = arith.constant 0 : index
      %c4_201 = arith.constant 4 : index
      %470 = arith.index_cast %373 : i32 to index
      %c0_202 = arith.constant 0 : index
      %471 = vector.load %arg4[%c0_200, %c4_201, %470, %c0_202] : memref<1x12x16x128xf32, #tpu.memory_space<vmem>>, vector<1x1x8x128xf32>
      %472 = vector.shape_cast %471 : vector<1x1x8x128xf32> to vector<8x128xf32>
      %c0_203 = arith.constant 0 : index
      %c5_204 = arith.constant 5 : index
      %473 = arith.index_cast %373 : i32 to index
      %c0_205 = arith.constant 0 : index
      %474 = vector.load %arg4[%c0_203, %c5_204, %473, %c0_205] : memref<1x12x16x128xf32, #tpu.memory_space<vmem>>, vector<1x1x8x128xf32>
      %475 = vector.shape_cast %474 : vector<1x1x8x128xf32> to vector<8x128xf32>
      %c0_206 = arith.constant 0 : index
      %c6_207 = arith.constant 6 : index
      %476 = arith.index_cast %373 : i32 to index
      %c0_208 = arith.constant 0 : index
      %477 = vector.load %arg4[%c0_206, %c6_207, %476, %c0_208] : memref<1x12x16x128xf32, #tpu.memory_space<vmem>>, vector<1x1x8x128xf32>
      %478 = vector.shape_cast %477 : vector<1x1x8x128xf32> to vector<8x128xf32>
      %c0_209 = arith.constant 0 : index
      %c7_210 = arith.constant 7 : index
      %479 = arith.index_cast %373 : i32 to index
      %c0_211 = arith.constant 0 : index
      %480 = vector.load %arg4[%c0_209, %c7_210, %479, %c0_211] : memref<1x12x16x128xf32, #tpu.memory_space<vmem>>, vector<1x1x8x128xf32>
      %481 = vector.shape_cast %480 : vector<1x1x8x128xf32> to vector<8x128xf32>
      %c0_212 = arith.constant 0 : index
      %c8_213 = arith.constant 8 : index
      %482 = arith.index_cast %373 : i32 to index
      %c0_214 = arith.constant 0 : index
      %483 = vector.load %arg4[%c0_212, %c8_213, %482, %c0_214] : memref<1x12x16x128xf32, #tpu.memory_space<vmem>>, vector<1x1x8x128xf32>
      %484 = vector.shape_cast %483 : vector<1x1x8x128xf32> to vector<8x128xf32>
      %c0_215 = arith.constant 0 : index
      %c9 = arith.constant 9 : index
      %485 = arith.index_cast %373 : i32 to index
      %c0_216 = arith.constant 0 : index
      %486 = vector.load %arg4[%c0_215, %c9, %485, %c0_216] : memref<1x12x16x128xf32, #tpu.memory_space<vmem>>, vector<1x1x8x128xf32>
      %487 = vector.shape_cast %486 : vector<1x1x8x128xf32> to vector<8x128xf32>
      %c0_217 = arith.constant 0 : index
      %c10 = arith.constant 10 : index
      %488 = arith.index_cast %373 : i32 to index
      %c0_218 = arith.constant 0 : index
      %489 = vector.load %arg4[%c0_217, %c10, %488, %c0_218] : memref<1x12x16x128xf32, #tpu.memory_space<vmem>>, vector<1x1x8x128xf32>
      %490 = vector.shape_cast %489 : vector<1x1x8x128xf32> to vector<8x128xf32>
      %c0_219 = arith.constant 0 : index
      %c11 = arith.constant 11 : index
      %491 = arith.index_cast %373 : i32 to index
      %c0_220 = arith.constant 0 : index
      %492 = vector.load %arg4[%c0_219, %c11, %491, %c0_220] : memref<1x12x16x128xf32, #tpu.memory_space<vmem>>, vector<1x1x8x128xf32>
      %493 = vector.shape_cast %492 : vector<1x1x8x128xf32> to vector<8x128xf32>
      %494 = arith.subf %407, %460 : vector<8x128xf32>
      %495 = math.absf %494 : vector<8x128xf32>
      %496 = arith.addf %arg7, %495 : vector<8x128xf32>
      %497 = arith.subf %408, %463 : vector<8x128xf32>
      %498 = math.absf %497 : vector<8x128xf32>
      %499 = arith.addf %496, %498 : vector<8x128xf32>
      %500 = arith.subf %406, %466 : vector<8x128xf32>
      %501 = math.absf %500 : vector<8x128xf32>
      %502 = arith.addf %499, %501 : vector<8x128xf32>
      %cst_221 = arith.constant 0.00999999977 : f32
      %503 = vector.broadcast %cst_221 : f32 to vector<8x128xf32>
      %504 = arith.addf %415, %503 : vector<8x128xf32>
      %505 = math.log %504 : vector<8x128xf32>
      %cst_222 = arith.constant 0.00999999977 : f32
      %506 = vector.broadcast %cst_222 : f32 to vector<8x128xf32>
      %507 = arith.addf %469, %506 : vector<8x128xf32>
      %508 = math.log %507 : vector<8x128xf32>
      %509 = arith.subf %505, %508 : vector<8x128xf32>
      %510 = math.absf %509 : vector<8x128xf32>
      %511 = arith.addf %arg8, %510 : vector<8x128xf32>
      %512 = arith.subf %436, %478 : vector<8x128xf32>
      %513 = math.absf %512 : vector<8x128xf32>
      %514 = arith.addf %arg9, %513 : vector<8x128xf32>
      %cst_223 = arith.constant 0.00999999977 : f32
      %515 = vector.broadcast %cst_223 : f32 to vector<8x128xf32>
      %516 = arith.addf %443, %515 : vector<8x128xf32>
      %517 = math.log %516 : vector<8x128xf32>
      %cst_224 = arith.constant 0.00999999977 : f32
      %518 = vector.broadcast %cst_224 : f32 to vector<8x128xf32>
      %519 = arith.addf %487, %518 : vector<8x128xf32>
      %520 = math.log %519 : vector<8x128xf32>
      %521 = arith.subf %517, %520 : vector<8x128xf32>
      %522 = math.absf %521 : vector<8x128xf32>
      %523 = arith.addf %arg10, %522 : vector<8x128xf32>
      %cst_225 = arith.constant 0.00999999977 : f32
      %524 = vector.broadcast %cst_225 : f32 to vector<8x128xf32>
      %525 = arith.addf %422, %524 : vector<8x128xf32>
      %526 = math.log %525 : vector<8x128xf32>
      %cst_226 = arith.constant 0.00999999977 : f32
      %527 = vector.broadcast %cst_226 : f32 to vector<8x128xf32>
      %528 = arith.addf %472, %527 : vector<8x128xf32>
      %529 = math.log %528 : vector<8x128xf32>
      %530 = arith.subf %526, %529 : vector<8x128xf32>
      %531 = math.absf %530 : vector<8x128xf32>
      %532 = arith.addf %511, %531 : vector<8x128xf32>
      %533 = arith.subf %436, %481 : vector<8x128xf32>
      %534 = math.absf %533 : vector<8x128xf32>
      %535 = arith.addf %514, %534 : vector<8x128xf32>
      %cst_227 = arith.constant 0.00999999977 : f32
      %536 = vector.broadcast %cst_227 : f32 to vector<8x128xf32>
      %537 = arith.addf %450, %536 : vector<8x128xf32>
      %538 = math.log %537 : vector<8x128xf32>
      %cst_228 = arith.constant 0.00999999977 : f32
      %539 = vector.broadcast %cst_228 : f32 to vector<8x128xf32>
      %540 = arith.addf %490, %539 : vector<8x128xf32>
      %541 = math.log %540 : vector<8x128xf32>
      %542 = arith.subf %538, %541 : vector<8x128xf32>
      %543 = math.absf %542 : vector<8x128xf32>
      %544 = arith.addf %523, %543 : vector<8x128xf32>
      %cst_229 = arith.constant 0.00999999977 : f32
      %545 = vector.broadcast %cst_229 : f32 to vector<8x128xf32>
      %546 = arith.addf %429, %545 : vector<8x128xf32>
      %547 = math.log %546 : vector<8x128xf32>
      %cst_230 = arith.constant 0.00999999977 : f32
      %548 = vector.broadcast %cst_230 : f32 to vector<8x128xf32>
      %549 = arith.addf %475, %548 : vector<8x128xf32>
      %550 = math.log %549 : vector<8x128xf32>
      %551 = arith.subf %547, %550 : vector<8x128xf32>
      %552 = math.absf %551 : vector<8x128xf32>
      %553 = arith.addf %532, %552 : vector<8x128xf32>
      %554 = arith.subf %436, %484 : vector<8x128xf32>
      %555 = math.absf %554 : vector<8x128xf32>
      %556 = arith.addf %535, %555 : vector<8x128xf32>
      %cst_231 = arith.constant 0.00999999977 : f32
      %557 = vector.broadcast %cst_231 : f32 to vector<8x128xf32>
      %558 = arith.addf %457, %557 : vector<8x128xf32>
      %559 = math.log %558 : vector<8x128xf32>
      %cst_232 = arith.constant 0.00999999977 : f32
      %560 = vector.broadcast %cst_232 : f32 to vector<8x128xf32>
      %561 = arith.addf %493, %560 : vector<8x128xf32>
      %562 = math.log %561 : vector<8x128xf32>
      %563 = arith.subf %559, %562 : vector<8x128xf32>
      %564 = math.absf %563 : vector<8x128xf32>
      %565 = arith.addf %544, %564 : vector<8x128xf32>
      %cst_233 = arith.constant 1.000000e-03 : f32
      %566 = vector.broadcast %cst_233 : f32 to vector<8x128xf32>
      %567 = arith.maximumf %436, %566 : vector<8x128xf32>
      %568 = arith.mulf %567, %567 : vector<8x128xf32>
      %569 = arith.mulf %568, %568 : vector<8x128xf32>
      %cst_234 = arith.constant 5.000000e-01 : f32
      %570 = vector.broadcast %cst_234 : f32 to vector<8x128xf32>
      %571 = arith.mulf %568, %570 : vector<8x128xf32>
      %cst_235 = arith.constant 1.000000e+00 : f32
      %572 = vector.broadcast %cst_235 : f32 to vector<8x128xf32>
      %573 = arith.subf %572, %571 : vector<8x128xf32>
      %cst_236 = arith.constant 1.000000e+00 : f32
      %574 = vector.broadcast %cst_236 : f32 to vector<8x128xf32>
      %575 = arith.subf %574, %443 : vector<8x128xf32>
      %cst_237 = arith.constant 1.000000e+00 : f32
      %576 = vector.broadcast %cst_237 : f32 to vector<8x128xf32>
      %577 = arith.subf %576, %450 : vector<8x128xf32>
      %cst_238 = arith.constant 1.000000e+00 : f32
      %578 = vector.broadcast %cst_238 : f32 to vector<8x128xf32>
      %579 = arith.subf %578, %457 : vector<8x128xf32>
      %580 = arith.mulf %415, %575 : vector<8x128xf32>
      %cst_239 = arith.constant 0.318309873 : f32
      %581 = vector.broadcast %cst_239 : f32 to vector<8x128xf32>
      %582 = arith.mulf %580, %581 : vector<8x128xf32>
      %583 = arith.mulf %422, %577 : vector<8x128xf32>
      %cst_240 = arith.constant 0.318309873 : f32
      %584 = vector.broadcast %cst_240 : f32 to vector<8x128xf32>
      %585 = arith.mulf %583, %584 : vector<8x128xf32>
      %586 = arith.mulf %429, %579 : vector<8x128xf32>
      %cst_241 = arith.constant 0.318309873 : f32
      %587 = vector.broadcast %cst_241 : f32 to vector<8x128xf32>
      %588 = arith.mulf %586, %587 : vector<8x128xf32>
      %589 = arith.mulf %460, %460 : vector<8x128xf32>
      %590 = arith.mulf %463, %463 : vector<8x128xf32>
      %591 = arith.addf %589, %590 : vector<8x128xf32>
      %592 = arith.mulf %466, %466 : vector<8x128xf32>
      %593 = arith.addf %591, %592 : vector<8x128xf32>
      %cst_242 = arith.constant 9.99999996E-13 : f32
      %594 = vector.broadcast %cst_242 : f32 to vector<8x128xf32>
      %595 = arith.addf %593, %594 : vector<8x128xf32>
      %596 = math.rsqrt %595 : vector<8x128xf32>
      %597 = arith.mulf %460, %596 : vector<8x128xf32>
      %598 = arith.mulf %463, %596 : vector<8x128xf32>
      %599 = arith.mulf %466, %596 : vector<8x128xf32>
      %cst_243 = arith.constant 1.000000e-03 : f32
      %600 = vector.broadcast %cst_243 : f32 to vector<8x128xf32>
      %601 = arith.maximumf %478, %600 : vector<8x128xf32>
      %602 = arith.mulf %601, %601 : vector<8x128xf32>
      %603 = arith.mulf %602, %602 : vector<8x128xf32>
      %cst_244 = arith.constant 5.000000e-01 : f32
      %604 = vector.broadcast %cst_244 : f32 to vector<8x128xf32>
      %605 = arith.mulf %602, %604 : vector<8x128xf32>
      %cst_245 = arith.constant 1.000000e+00 : f32
      %606 = vector.broadcast %cst_245 : f32 to vector<8x128xf32>
      %607 = arith.subf %606, %605 : vector<8x128xf32>
      %cst_246 = arith.constant 1.000000e+00 : f32
      %608 = vector.broadcast %cst_246 : f32 to vector<8x128xf32>
      %609 = arith.subf %608, %487 : vector<8x128xf32>
      %cst_247 = arith.constant 1.000000e+00 : f32
      %610 = vector.broadcast %cst_247 : f32 to vector<8x128xf32>
      %611 = arith.subf %610, %490 : vector<8x128xf32>
      %cst_248 = arith.constant 1.000000e+00 : f32
      %612 = vector.broadcast %cst_248 : f32 to vector<8x128xf32>
      %613 = arith.subf %612, %493 : vector<8x128xf32>
      %614 = arith.mulf %469, %609 : vector<8x128xf32>
      %cst_249 = arith.constant 0.318309873 : f32
      %615 = vector.broadcast %cst_249 : f32 to vector<8x128xf32>
      %616 = arith.mulf %614, %615 : vector<8x128xf32>
      %617 = arith.mulf %472, %611 : vector<8x128xf32>
      %cst_250 = arith.constant 0.318309873 : f32
      %618 = vector.broadcast %cst_250 : f32 to vector<8x128xf32>
      %619 = arith.mulf %617, %618 : vector<8x128xf32>
      %620 = arith.mulf %475, %613 : vector<8x128xf32>
      %cst_251 = arith.constant 0.318309873 : f32
      %621 = vector.broadcast %cst_251 : f32 to vector<8x128xf32>
      %622 = arith.mulf %620, %621 : vector<8x128xf32>
      %623 = vector.broadcast %14 : f32 to vector<8x128xf32>
      %624 = arith.subf %623, %394 : vector<8x128xf32>
      %625 = vector.broadcast %18 : f32 to vector<8x128xf32>
      %626 = arith.subf %625, %387 : vector<8x128xf32>
      %627 = arith.mulf %624, %624 : vector<8x128xf32>
      %628 = arith.mulf %626, %626 : vector<8x128xf32>
      %629 = arith.addf %627, %628 : vector<8x128xf32>
      %630 = arith.mulf %22, %22 : f32
      %631 = vector.broadcast %630 : f32 to vector<8x128xf32>
      %632 = arith.addf %629, %631 : vector<8x128xf32>
      %cst_252 = arith.constant 9.99999996E-13 : f32
      %633 = vector.broadcast %cst_252 : f32 to vector<8x128xf32>
      %634 = arith.addf %632, %633 : vector<8x128xf32>
      %635 = math.rsqrt %634 : vector<8x128xf32>
      %636 = arith.mulf %624, %635 : vector<8x128xf32>
      %637 = arith.mulf %626, %635 : vector<8x128xf32>
      %638 = vector.broadcast %22 : f32 to vector<8x128xf32>
      %639 = arith.mulf %638, %635 : vector<8x128xf32>
      %640 = vector.broadcast %4 : f32 to vector<8x128xf32>
      %641 = arith.subf %640, %394 : vector<8x128xf32>
      %642 = vector.broadcast %7 : f32 to vector<8x128xf32>
      %643 = arith.subf %642, %387 : vector<8x128xf32>
      %644 = arith.mulf %641, %641 : vector<8x128xf32>
      %645 = arith.mulf %643, %643 : vector<8x128xf32>
      %646 = arith.addf %644, %645 : vector<8x128xf32>
      %647 = arith.mulf %10, %10 : f32
      %648 = vector.broadcast %647 : f32 to vector<8x128xf32>
      %649 = arith.addf %646, %648 : vector<8x128xf32>
      %cst_253 = arith.constant 9.99999996E-13 : f32
      %650 = vector.broadcast %cst_253 : f32 to vector<8x128xf32>
      %651 = arith.addf %649, %650 : vector<8x128xf32>
      %652 = math.rsqrt %651 : vector<8x128xf32>
      %653 = arith.mulf %641, %652 : vector<8x128xf32>
      %654 = arith.mulf %643, %652 : vector<8x128xf32>
      %655 = vector.broadcast %10 : f32 to vector<8x128xf32>
      %656 = arith.mulf %655, %652 : vector<8x128xf32>
      %657 = arith.addf %636, %653 : vector<8x128xf32>
      %658 = arith.addf %637, %654 : vector<8x128xf32>
      %659 = arith.addf %639, %656 : vector<8x128xf32>
      %660 = arith.mulf %657, %657 : vector<8x128xf32>
      %661 = arith.mulf %658, %658 : vector<8x128xf32>
      %662 = arith.addf %660, %661 : vector<8x128xf32>
      %663 = arith.mulf %659, %659 : vector<8x128xf32>
      %664 = arith.addf %662, %663 : vector<8x128xf32>
      %cst_254 = arith.constant 9.99999996E-13 : f32
      %665 = vector.broadcast %cst_254 : f32 to vector<8x128xf32>
      %666 = arith.addf %664, %665 : vector<8x128xf32>
      %667 = math.rsqrt %666 : vector<8x128xf32>
      %668 = arith.mulf %657, %667 : vector<8x128xf32>
      %669 = arith.mulf %658, %667 : vector<8x128xf32>
      %670 = arith.mulf %659, %667 : vector<8x128xf32>
      %671 = arith.mulf %653, %668 : vector<8x128xf32>
      %672 = arith.mulf %654, %669 : vector<8x128xf32>
      %673 = arith.addf %671, %672 : vector<8x128xf32>
      %674 = arith.mulf %656, %670 : vector<8x128xf32>
      %675 = arith.addf %673, %674 : vector<8x128xf32>
      %cst_255 = arith.constant 1.000000e-03 : f32
      %676 = vector.broadcast %cst_255 : f32 to vector<8x128xf32>
      %677 = arith.maximumf %675, %676 : vector<8x128xf32>
      %cst_256 = arith.constant 1.000000e+00 : f32
      %678 = vector.broadcast %cst_256 : f32 to vector<8x128xf32>
      %679 = arith.subf %678, %677 : vector<8x128xf32>
      %680 = arith.mulf %679, %679 : vector<8x128xf32>
      %681 = arith.mulf %679, %679 : vector<8x128xf32>
      %682 = arith.mulf %680, %681 : vector<8x128xf32>
      %683 = arith.mulf %682, %679 : vector<8x128xf32>
      %684 = arith.mulf %635, %635 : vector<8x128xf32>
      %685 = vector.broadcast %26 : f32 to vector<8x128xf32>
      %686 = arith.mulf %685, %684 : vector<8x128xf32>
      %687 = vector.broadcast %30 : f32 to vector<8x128xf32>
      %688 = arith.mulf %687, %684 : vector<8x128xf32>
      %689 = vector.broadcast %34 : f32 to vector<8x128xf32>
      %690 = arith.mulf %689, %684 : vector<8x128xf32>
      %691 = arith.mulf %407, %636 : vector<8x128xf32>
      %692 = arith.mulf %408, %637 : vector<8x128xf32>
      %693 = arith.addf %691, %692 : vector<8x128xf32>
      %694 = arith.mulf %406, %639 : vector<8x128xf32>
      %695 = arith.addf %693, %694 : vector<8x128xf32>
      %cst_257 = arith.constant 1.000000e-03 : f32
      %696 = vector.broadcast %cst_257 : f32 to vector<8x128xf32>
      %697 = arith.maximumf %695, %696 : vector<8x128xf32>
      %698 = arith.mulf %407, %653 : vector<8x128xf32>
      %699 = arith.mulf %408, %654 : vector<8x128xf32>
      %700 = arith.addf %698, %699 : vector<8x128xf32>
      %701 = arith.mulf %406, %656 : vector<8x128xf32>
      %702 = arith.addf %700, %701 : vector<8x128xf32>
      %cst_258 = arith.constant 1.000000e-03 : f32
      %703 = vector.broadcast %cst_258 : f32 to vector<8x128xf32>
      %704 = arith.maximumf %702, %703 : vector<8x128xf32>
      %705 = arith.mulf %407, %668 : vector<8x128xf32>
      %706 = arith.mulf %408, %669 : vector<8x128xf32>
      %707 = arith.addf %705, %706 : vector<8x128xf32>
      %708 = arith.mulf %406, %670 : vector<8x128xf32>
      %709 = arith.addf %707, %708 : vector<8x128xf32>
      %cst_259 = arith.constant 1.000000e-03 : f32
      %710 = vector.broadcast %cst_259 : f32 to vector<8x128xf32>
      %711 = arith.maximumf %709, %710 : vector<8x128xf32>
      %712 = arith.mulf %711, %711 : vector<8x128xf32>
      %cst_260 = arith.constant 1.000000e+00 : f32
      %713 = vector.broadcast %cst_260 : f32 to vector<8x128xf32>
      %714 = arith.subf %569, %713 : vector<8x128xf32>
      %715 = arith.mulf %712, %714 : vector<8x128xf32>
      %cst_261 = arith.constant 1.000000e+00 : f32
      %716 = vector.broadcast %cst_261 : f32 to vector<8x128xf32>
      %717 = arith.addf %715, %716 : vector<8x128xf32>
      %718 = arith.mulf %697, %573 : vector<8x128xf32>
      %719 = arith.addf %718, %571 : vector<8x128xf32>
      %720 = arith.mulf %704, %573 : vector<8x128xf32>
      %721 = arith.addf %720, %571 : vector<8x128xf32>
      %cst_262 = arith.constant 2.500000e-01 : f32
      %722 = vector.broadcast %cst_262 : f32 to vector<8x128xf32>
      %723 = arith.mulf %722, %569 : vector<8x128xf32>
      %cst_263 = arith.constant 3.14159274 : f32
      %724 = vector.broadcast %cst_263 : f32 to vector<8x128xf32>
      %725 = arith.mulf %724, %717 : vector<8x128xf32>
      %726 = arith.mulf %725, %717 : vector<8x128xf32>
      %727 = arith.mulf %726, %719 : vector<8x128xf32>
      %728 = arith.mulf %727, %721 : vector<8x128xf32>
      %729 = arith.divf %723, %728 : vector<8x128xf32>
      %730 = arith.mulf %575, %683 : vector<8x128xf32>
      %731 = arith.addf %443, %730 : vector<8x128xf32>
      %732 = arith.mulf %729, %731 : vector<8x128xf32>
      %733 = arith.addf %582, %732 : vector<8x128xf32>
      %734 = arith.mulf %686, %697 : vector<8x128xf32>
      %735 = arith.mulf %733, %734 : vector<8x128xf32>
      %cst_264 = arith.constant 0.000000e+00 : f32
      %736 = vector.broadcast %cst_264 : f32 to vector<8x128xf32>
      %737 = arith.maximumf %735, %736 : vector<8x128xf32>
      %738 = arith.mulf %577, %683 : vector<8x128xf32>
      %739 = arith.addf %450, %738 : vector<8x128xf32>
      %740 = arith.mulf %729, %739 : vector<8x128xf32>
      %741 = arith.addf %585, %740 : vector<8x128xf32>
      %742 = arith.mulf %688, %697 : vector<8x128xf32>
      %743 = arith.mulf %741, %742 : vector<8x128xf32>
      %cst_265 = arith.constant 0.000000e+00 : f32
      %744 = vector.broadcast %cst_265 : f32 to vector<8x128xf32>
      %745 = arith.maximumf %743, %744 : vector<8x128xf32>
      %746 = arith.mulf %579, %683 : vector<8x128xf32>
      %747 = arith.addf %457, %746 : vector<8x128xf32>
      %748 = arith.mulf %729, %747 : vector<8x128xf32>
      %749 = arith.addf %588, %748 : vector<8x128xf32>
      %750 = arith.mulf %690, %697 : vector<8x128xf32>
      %751 = arith.mulf %749, %750 : vector<8x128xf32>
      %cst_266 = arith.constant 0.000000e+00 : f32
      %752 = vector.broadcast %cst_266 : f32 to vector<8x128xf32>
      %753 = arith.maximumf %751, %752 : vector<8x128xf32>
      %754 = arith.mulf %597, %636 : vector<8x128xf32>
      %755 = arith.mulf %598, %637 : vector<8x128xf32>
      %756 = arith.addf %754, %755 : vector<8x128xf32>
      %757 = arith.mulf %599, %639 : vector<8x128xf32>
      %758 = arith.addf %756, %757 : vector<8x128xf32>
      %cst_267 = arith.constant 1.000000e-03 : f32
      %759 = vector.broadcast %cst_267 : f32 to vector<8x128xf32>
      %760 = arith.maximumf %758, %759 : vector<8x128xf32>
      %761 = arith.mulf %597, %653 : vector<8x128xf32>
      %762 = arith.mulf %598, %654 : vector<8x128xf32>
      %763 = arith.addf %761, %762 : vector<8x128xf32>
      %764 = arith.mulf %599, %656 : vector<8x128xf32>
      %765 = arith.addf %763, %764 : vector<8x128xf32>
      %cst_268 = arith.constant 1.000000e-03 : f32
      %766 = vector.broadcast %cst_268 : f32 to vector<8x128xf32>
      %767 = arith.maximumf %765, %766 : vector<8x128xf32>
      %768 = arith.mulf %597, %668 : vector<8x128xf32>
      %769 = arith.mulf %598, %669 : vector<8x128xf32>
      %770 = arith.addf %768, %769 : vector<8x128xf32>
      %771 = arith.mulf %599, %670 : vector<8x128xf32>
      %772 = arith.addf %770, %771 : vector<8x128xf32>
      %cst_269 = arith.constant 1.000000e-03 : f32
      %773 = vector.broadcast %cst_269 : f32 to vector<8x128xf32>
      %774 = arith.maximumf %772, %773 : vector<8x128xf32>
      %775 = arith.mulf %774, %774 : vector<8x128xf32>
      %cst_270 = arith.constant 1.000000e+00 : f32
      %776 = vector.broadcast %cst_270 : f32 to vector<8x128xf32>
      %777 = arith.subf %603, %776 : vector<8x128xf32>
      %778 = arith.mulf %775, %777 : vector<8x128xf32>
      %cst_271 = arith.constant 1.000000e+00 : f32
      %779 = vector.broadcast %cst_271 : f32 to vector<8x128xf32>
      %780 = arith.addf %778, %779 : vector<8x128xf32>
      %781 = arith.mulf %760, %607 : vector<8x128xf32>
      %782 = arith.addf %781, %605 : vector<8x128xf32>
      %783 = arith.mulf %767, %607 : vector<8x128xf32>
      %784 = arith.addf %783, %605 : vector<8x128xf32>
      %cst_272 = arith.constant 2.500000e-01 : f32
      %785 = vector.broadcast %cst_272 : f32 to vector<8x128xf32>
      %786 = arith.mulf %785, %603 : vector<8x128xf32>
      %cst_273 = arith.constant 3.14159274 : f32
      %787 = vector.broadcast %cst_273 : f32 to vector<8x128xf32>
      %788 = arith.mulf %787, %780 : vector<8x128xf32>
      %789 = arith.mulf %788, %780 : vector<8x128xf32>
      %790 = arith.mulf %789, %782 : vector<8x128xf32>
      %791 = arith.mulf %790, %784 : vector<8x128xf32>
      %792 = arith.divf %786, %791 : vector<8x128xf32>
      %793 = arith.mulf %609, %683 : vector<8x128xf32>
      %794 = arith.addf %487, %793 : vector<8x128xf32>
      %795 = arith.mulf %792, %794 : vector<8x128xf32>
      %796 = arith.addf %616, %795 : vector<8x128xf32>
      %797 = arith.mulf %686, %760 : vector<8x128xf32>
      %798 = arith.mulf %796, %797 : vector<8x128xf32>
      %cst_274 = arith.constant 0.000000e+00 : f32
      %799 = vector.broadcast %cst_274 : f32 to vector<8x128xf32>
      %800 = arith.maximumf %798, %799 : vector<8x128xf32>
      %801 = arith.mulf %611, %683 : vector<8x128xf32>
      %802 = arith.addf %490, %801 : vector<8x128xf32>
      %803 = arith.mulf %792, %802 : vector<8x128xf32>
      %804 = arith.addf %619, %803 : vector<8x128xf32>
      %805 = arith.mulf %688, %760 : vector<8x128xf32>
      %806 = arith.mulf %804, %805 : vector<8x128xf32>
      %cst_275 = arith.constant 0.000000e+00 : f32
      %807 = vector.broadcast %cst_275 : f32 to vector<8x128xf32>
      %808 = arith.maximumf %806, %807 : vector<8x128xf32>
      %809 = arith.mulf %613, %683 : vector<8x128xf32>
      %810 = arith.addf %493, %809 : vector<8x128xf32>
      %811 = arith.mulf %792, %810 : vector<8x128xf32>
      %812 = arith.addf %622, %811 : vector<8x128xf32>
      %813 = arith.mulf %690, %760 : vector<8x128xf32>
      %814 = arith.mulf %812, %813 : vector<8x128xf32>
      %cst_276 = arith.constant 0.000000e+00 : f32
      %815 = vector.broadcast %cst_276 : f32 to vector<8x128xf32>
      %816 = arith.maximumf %814, %815 : vector<8x128xf32>
      %cst_277 = arith.constant 1.000000e-01 : f32
      %817 = vector.broadcast %cst_277 : f32 to vector<8x128xf32>
      %818 = arith.addf %737, %817 : vector<8x128xf32>
      %819 = math.log %818 : vector<8x128xf32>
      %cst_278 = arith.constant 1.000000e-01 : f32
      %820 = vector.broadcast %cst_278 : f32 to vector<8x128xf32>
      %821 = arith.addf %800, %820 : vector<8x128xf32>
      %822 = math.log %821 : vector<8x128xf32>
      %823 = arith.subf %819, %822 : vector<8x128xf32>
      %824 = math.absf %823 : vector<8x128xf32>
      %825 = arith.addf %arg11, %824 : vector<8x128xf32>
      %cst_279 = arith.constant 1.000000e-01 : f32
      %826 = vector.broadcast %cst_279 : f32 to vector<8x128xf32>
      %827 = arith.addf %745, %826 : vector<8x128xf32>
      %828 = math.log %827 : vector<8x128xf32>
      %cst_280 = arith.constant 1.000000e-01 : f32
      %829 = vector.broadcast %cst_280 : f32 to vector<8x128xf32>
      %830 = arith.addf %808, %829 : vector<8x128xf32>
      %831 = math.log %830 : vector<8x128xf32>
      %832 = arith.subf %828, %831 : vector<8x128xf32>
      %833 = math.absf %832 : vector<8x128xf32>
      %834 = arith.addf %825, %833 : vector<8x128xf32>
      %cst_281 = arith.constant 1.000000e-01 : f32
      %835 = vector.broadcast %cst_281 : f32 to vector<8x128xf32>
      %836 = arith.addf %753, %835 : vector<8x128xf32>
      %837 = math.log %836 : vector<8x128xf32>
      %cst_282 = arith.constant 1.000000e-01 : f32
      %838 = vector.broadcast %cst_282 : f32 to vector<8x128xf32>
      %839 = arith.addf %816, %838 : vector<8x128xf32>
      %840 = math.log %839 : vector<8x128xf32>
      %841 = arith.subf %837, %840 : vector<8x128xf32>
      %842 = math.absf %841 : vector<8x128xf32>
      %843 = arith.addf %834, %842 : vector<8x128xf32>
      %844 = vector.broadcast %48 : f32 to vector<8x128xf32>
      %845 = arith.subf %844, %394 : vector<8x128xf32>
      %846 = vector.broadcast %52 : f32 to vector<8x128xf32>
      %847 = arith.subf %846, %387 : vector<8x128xf32>
      %848 = arith.mulf %845, %845 : vector<8x128xf32>
      %849 = arith.mulf %847, %847 : vector<8x128xf32>
      %850 = arith.addf %848, %849 : vector<8x128xf32>
      %851 = arith.mulf %56, %56 : f32
      %852 = vector.broadcast %851 : f32 to vector<8x128xf32>
      %853 = arith.addf %850, %852 : vector<8x128xf32>
      %cst_283 = arith.constant 9.99999996E-13 : f32
      %854 = vector.broadcast %cst_283 : f32 to vector<8x128xf32>
      %855 = arith.addf %853, %854 : vector<8x128xf32>
      %856 = math.rsqrt %855 : vector<8x128xf32>
      %857 = arith.mulf %845, %856 : vector<8x128xf32>
      %858 = arith.mulf %847, %856 : vector<8x128xf32>
      %859 = vector.broadcast %56 : f32 to vector<8x128xf32>
      %860 = arith.mulf %859, %856 : vector<8x128xf32>
      %861 = vector.broadcast %38 : f32 to vector<8x128xf32>
      %862 = arith.subf %861, %394 : vector<8x128xf32>
      %863 = vector.broadcast %41 : f32 to vector<8x128xf32>
      %864 = arith.subf %863, %387 : vector<8x128xf32>
      %865 = arith.mulf %862, %862 : vector<8x128xf32>
      %866 = arith.mulf %864, %864 : vector<8x128xf32>
      %867 = arith.addf %865, %866 : vector<8x128xf32>
      %868 = arith.mulf %44, %44 : f32
      %869 = vector.broadcast %868 : f32 to vector<8x128xf32>
      %870 = arith.addf %867, %869 : vector<8x128xf32>
      %cst_284 = arith.constant 9.99999996E-13 : f32
      %871 = vector.broadcast %cst_284 : f32 to vector<8x128xf32>
      %872 = arith.addf %870, %871 : vector<8x128xf32>
      %873 = math.rsqrt %872 : vector<8x128xf32>
      %874 = arith.mulf %862, %873 : vector<8x128xf32>
      %875 = arith.mulf %864, %873 : vector<8x128xf32>
      %876 = vector.broadcast %44 : f32 to vector<8x128xf32>
      %877 = arith.mulf %876, %873 : vector<8x128xf32>
      %878 = arith.addf %857, %874 : vector<8x128xf32>
      %879 = arith.addf %858, %875 : vector<8x128xf32>
      %880 = arith.addf %860, %877 : vector<8x128xf32>
      %881 = arith.mulf %878, %878 : vector<8x128xf32>
      %882 = arith.mulf %879, %879 : vector<8x128xf32>
      %883 = arith.addf %881, %882 : vector<8x128xf32>
      %884 = arith.mulf %880, %880 : vector<8x128xf32>
      %885 = arith.addf %883, %884 : vector<8x128xf32>
      %cst_285 = arith.constant 9.99999996E-13 : f32
      %886 = vector.broadcast %cst_285 : f32 to vector<8x128xf32>
      %887 = arith.addf %885, %886 : vector<8x128xf32>
      %888 = math.rsqrt %887 : vector<8x128xf32>
      %889 = arith.mulf %878, %888 : vector<8x128xf32>
      %890 = arith.mulf %879, %888 : vector<8x128xf32>
      %891 = arith.mulf %880, %888 : vector<8x128xf32>
      %892 = arith.mulf %874, %889 : vector<8x128xf32>
      %893 = arith.mulf %875, %890 : vector<8x128xf32>
      %894 = arith.addf %892, %893 : vector<8x128xf32>
      %895 = arith.mulf %877, %891 : vector<8x128xf32>
      %896 = arith.addf %894, %895 : vector<8x128xf32>
      %cst_286 = arith.constant 1.000000e-03 : f32
      %897 = vector.broadcast %cst_286 : f32 to vector<8x128xf32>
      %898 = arith.maximumf %896, %897 : vector<8x128xf32>
      %cst_287 = arith.constant 1.000000e+00 : f32
      %899 = vector.broadcast %cst_287 : f32 to vector<8x128xf32>
      %900 = arith.subf %899, %898 : vector<8x128xf32>
      %901 = arith.mulf %900, %900 : vector<8x128xf32>
      %902 = arith.mulf %900, %900 : vector<8x128xf32>
      %903 = arith.mulf %901, %902 : vector<8x128xf32>
      %904 = arith.mulf %903, %900 : vector<8x128xf32>
      %905 = arith.mulf %856, %856 : vector<8x128xf32>
      %906 = vector.broadcast %60 : f32 to vector<8x128xf32>
      %907 = arith.mulf %906, %905 : vector<8x128xf32>
      %908 = vector.broadcast %64 : f32 to vector<8x128xf32>
      %909 = arith.mulf %908, %905 : vector<8x128xf32>
      %910 = vector.broadcast %68 : f32 to vector<8x128xf32>
      %911 = arith.mulf %910, %905 : vector<8x128xf32>
      %912 = arith.mulf %407, %857 : vector<8x128xf32>
      %913 = arith.mulf %408, %858 : vector<8x128xf32>
      %914 = arith.addf %912, %913 : vector<8x128xf32>
      %915 = arith.mulf %406, %860 : vector<8x128xf32>
      %916 = arith.addf %914, %915 : vector<8x128xf32>
      %cst_288 = arith.constant 1.000000e-03 : f32
      %917 = vector.broadcast %cst_288 : f32 to vector<8x128xf32>
      %918 = arith.maximumf %916, %917 : vector<8x128xf32>
      %919 = arith.mulf %407, %874 : vector<8x128xf32>
      %920 = arith.mulf %408, %875 : vector<8x128xf32>
      %921 = arith.addf %919, %920 : vector<8x128xf32>
      %922 = arith.mulf %406, %877 : vector<8x128xf32>
      %923 = arith.addf %921, %922 : vector<8x128xf32>
      %cst_289 = arith.constant 1.000000e-03 : f32
      %924 = vector.broadcast %cst_289 : f32 to vector<8x128xf32>
      %925 = arith.maximumf %923, %924 : vector<8x128xf32>
      %926 = arith.mulf %407, %889 : vector<8x128xf32>
      %927 = arith.mulf %408, %890 : vector<8x128xf32>
      %928 = arith.addf %926, %927 : vector<8x128xf32>
      %929 = arith.mulf %406, %891 : vector<8x128xf32>
      %930 = arith.addf %928, %929 : vector<8x128xf32>
      %cst_290 = arith.constant 1.000000e-03 : f32
      %931 = vector.broadcast %cst_290 : f32 to vector<8x128xf32>
      %932 = arith.maximumf %930, %931 : vector<8x128xf32>
      %933 = arith.mulf %932, %932 : vector<8x128xf32>
      %cst_291 = arith.constant 1.000000e+00 : f32
      %934 = vector.broadcast %cst_291 : f32 to vector<8x128xf32>
      %935 = arith.subf %569, %934 : vector<8x128xf32>
      %936 = arith.mulf %933, %935 : vector<8x128xf32>
      %cst_292 = arith.constant 1.000000e+00 : f32
      %937 = vector.broadcast %cst_292 : f32 to vector<8x128xf32>
      %938 = arith.addf %936, %937 : vector<8x128xf32>
      %939 = arith.mulf %918, %573 : vector<8x128xf32>
      %940 = arith.addf %939, %571 : vector<8x128xf32>
      %941 = arith.mulf %925, %573 : vector<8x128xf32>
      %942 = arith.addf %941, %571 : vector<8x128xf32>
      %cst_293 = arith.constant 2.500000e-01 : f32
      %943 = vector.broadcast %cst_293 : f32 to vector<8x128xf32>
      %944 = arith.mulf %943, %569 : vector<8x128xf32>
      %cst_294 = arith.constant 3.14159274 : f32
      %945 = vector.broadcast %cst_294 : f32 to vector<8x128xf32>
      %946 = arith.mulf %945, %938 : vector<8x128xf32>
      %947 = arith.mulf %946, %938 : vector<8x128xf32>
      %948 = arith.mulf %947, %940 : vector<8x128xf32>
      %949 = arith.mulf %948, %942 : vector<8x128xf32>
      %950 = arith.divf %944, %949 : vector<8x128xf32>
      %951 = arith.mulf %575, %904 : vector<8x128xf32>
      %952 = arith.addf %443, %951 : vector<8x128xf32>
      %953 = arith.mulf %950, %952 : vector<8x128xf32>
      %954 = arith.addf %582, %953 : vector<8x128xf32>
      %955 = arith.mulf %907, %918 : vector<8x128xf32>
      %956 = arith.mulf %954, %955 : vector<8x128xf32>
      %cst_295 = arith.constant 0.000000e+00 : f32
      %957 = vector.broadcast %cst_295 : f32 to vector<8x128xf32>
      %958 = arith.maximumf %956, %957 : vector<8x128xf32>
      %959 = arith.mulf %577, %904 : vector<8x128xf32>
      %960 = arith.addf %450, %959 : vector<8x128xf32>
      %961 = arith.mulf %950, %960 : vector<8x128xf32>
      %962 = arith.addf %585, %961 : vector<8x128xf32>
      %963 = arith.mulf %909, %918 : vector<8x128xf32>
      %964 = arith.mulf %962, %963 : vector<8x128xf32>
      %cst_296 = arith.constant 0.000000e+00 : f32
      %965 = vector.broadcast %cst_296 : f32 to vector<8x128xf32>
      %966 = arith.maximumf %964, %965 : vector<8x128xf32>
      %967 = arith.mulf %579, %904 : vector<8x128xf32>
      %968 = arith.addf %457, %967 : vector<8x128xf32>
      %969 = arith.mulf %950, %968 : vector<8x128xf32>
      %970 = arith.addf %588, %969 : vector<8x128xf32>
      %971 = arith.mulf %911, %918 : vector<8x128xf32>
      %972 = arith.mulf %970, %971 : vector<8x128xf32>
      %cst_297 = arith.constant 0.000000e+00 : f32
      %973 = vector.broadcast %cst_297 : f32 to vector<8x128xf32>
      %974 = arith.maximumf %972, %973 : vector<8x128xf32>
      %975 = arith.mulf %597, %857 : vector<8x128xf32>
      %976 = arith.mulf %598, %858 : vector<8x128xf32>
      %977 = arith.addf %975, %976 : vector<8x128xf32>
      %978 = arith.mulf %599, %860 : vector<8x128xf32>
      %979 = arith.addf %977, %978 : vector<8x128xf32>
      %cst_298 = arith.constant 1.000000e-03 : f32
      %980 = vector.broadcast %cst_298 : f32 to vector<8x128xf32>
      %981 = arith.maximumf %979, %980 : vector<8x128xf32>
      %982 = arith.mulf %597, %874 : vector<8x128xf32>
      %983 = arith.mulf %598, %875 : vector<8x128xf32>
      %984 = arith.addf %982, %983 : vector<8x128xf32>
      %985 = arith.mulf %599, %877 : vector<8x128xf32>
      %986 = arith.addf %984, %985 : vector<8x128xf32>
      %cst_299 = arith.constant 1.000000e-03 : f32
      %987 = vector.broadcast %cst_299 : f32 to vector<8x128xf32>
      %988 = arith.maximumf %986, %987 : vector<8x128xf32>
      %989 = arith.mulf %597, %889 : vector<8x128xf32>
      %990 = arith.mulf %598, %890 : vector<8x128xf32>
      %991 = arith.addf %989, %990 : vector<8x128xf32>
      %992 = arith.mulf %599, %891 : vector<8x128xf32>
      %993 = arith.addf %991, %992 : vector<8x128xf32>
      %cst_300 = arith.constant 1.000000e-03 : f32
      %994 = vector.broadcast %cst_300 : f32 to vector<8x128xf32>
      %995 = arith.maximumf %993, %994 : vector<8x128xf32>
      %996 = arith.mulf %995, %995 : vector<8x128xf32>
      %cst_301 = arith.constant 1.000000e+00 : f32
      %997 = vector.broadcast %cst_301 : f32 to vector<8x128xf32>
      %998 = arith.subf %603, %997 : vector<8x128xf32>
      %999 = arith.mulf %996, %998 : vector<8x128xf32>
      %cst_302 = arith.constant 1.000000e+00 : f32
      %1000 = vector.broadcast %cst_302 : f32 to vector<8x128xf32>
      %1001 = arith.addf %999, %1000 : vector<8x128xf32>
      %1002 = arith.mulf %981, %607 : vector<8x128xf32>
      %1003 = arith.addf %1002, %605 : vector<8x128xf32>
      %1004 = arith.mulf %988, %607 : vector<8x128xf32>
      %1005 = arith.addf %1004, %605 : vector<8x128xf32>
      %cst_303 = arith.constant 2.500000e-01 : f32
      %1006 = vector.broadcast %cst_303 : f32 to vector<8x128xf32>
      %1007 = arith.mulf %1006, %603 : vector<8x128xf32>
      %cst_304 = arith.constant 3.14159274 : f32
      %1008 = vector.broadcast %cst_304 : f32 to vector<8x128xf32>
      %1009 = arith.mulf %1008, %1001 : vector<8x128xf32>
      %1010 = arith.mulf %1009, %1001 : vector<8x128xf32>
      %1011 = arith.mulf %1010, %1003 : vector<8x128xf32>
      %1012 = arith.mulf %1011, %1005 : vector<8x128xf32>
      %1013 = arith.divf %1007, %1012 : vector<8x128xf32>
      %1014 = arith.mulf %609, %904 : vector<8x128xf32>
      %1015 = arith.addf %487, %1014 : vector<8x128xf32>
      %1016 = arith.mulf %1013, %1015 : vector<8x128xf32>
      %1017 = arith.addf %616, %1016 : vector<8x128xf32>
      %1018 = arith.mulf %907, %981 : vector<8x128xf32>
      %1019 = arith.mulf %1017, %1018 : vector<8x128xf32>
      %cst_305 = arith.constant 0.000000e+00 : f32
      %1020 = vector.broadcast %cst_305 : f32 to vector<8x128xf32>
      %1021 = arith.maximumf %1019, %1020 : vector<8x128xf32>
      %1022 = arith.mulf %611, %904 : vector<8x128xf32>
      %1023 = arith.addf %490, %1022 : vector<8x128xf32>
      %1024 = arith.mulf %1013, %1023 : vector<8x128xf32>
      %1025 = arith.addf %619, %1024 : vector<8x128xf32>
      %1026 = arith.mulf %909, %981 : vector<8x128xf32>
      %1027 = arith.mulf %1025, %1026 : vector<8x128xf32>
      %cst_306 = arith.constant 0.000000e+00 : f32
      %1028 = vector.broadcast %cst_306 : f32 to vector<8x128xf32>
      %1029 = arith.maximumf %1027, %1028 : vector<8x128xf32>
      %1030 = arith.mulf %613, %904 : vector<8x128xf32>
      %1031 = arith.addf %493, %1030 : vector<8x128xf32>
      %1032 = arith.mulf %1013, %1031 : vector<8x128xf32>
      %1033 = arith.addf %622, %1032 : vector<8x128xf32>
      %1034 = arith.mulf %911, %981 : vector<8x128xf32>
      %1035 = arith.mulf %1033, %1034 : vector<8x128xf32>
      %cst_307 = arith.constant 0.000000e+00 : f32
      %1036 = vector.broadcast %cst_307 : f32 to vector<8x128xf32>
      %1037 = arith.maximumf %1035, %1036 : vector<8x128xf32>
      %cst_308 = arith.constant 1.000000e-01 : f32
      %1038 = vector.broadcast %cst_308 : f32 to vector<8x128xf32>
      %1039 = arith.addf %958, %1038 : vector<8x128xf32>
      %1040 = math.log %1039 : vector<8x128xf32>
      %cst_309 = arith.constant 1.000000e-01 : f32
      %1041 = vector.broadcast %cst_309 : f32 to vector<8x128xf32>
      %1042 = arith.addf %1021, %1041 : vector<8x128xf32>
      %1043 = math.log %1042 : vector<8x128xf32>
      %1044 = arith.subf %1040, %1043 : vector<8x128xf32>
      %1045 = math.absf %1044 : vector<8x128xf32>
      %1046 = arith.addf %843, %1045 : vector<8x128xf32>
      %cst_310 = arith.constant 1.000000e-01 : f32
      %1047 = vector.broadcast %cst_310 : f32 to vector<8x128xf32>
      %1048 = arith.addf %966, %1047 : vector<8x128xf32>
      %1049 = math.log %1048 : vector<8x128xf32>
      %cst_311 = arith.constant 1.000000e-01 : f32
      %1050 = vector.broadcast %cst_311 : f32 to vector<8x128xf32>
      %1051 = arith.addf %1029, %1050 : vector<8x128xf32>
      %1052 = math.log %1051 : vector<8x128xf32>
      %1053 = arith.subf %1049, %1052 : vector<8x128xf32>
      %1054 = math.absf %1053 : vector<8x128xf32>
      %1055 = arith.addf %1046, %1054 : vector<8x128xf32>
      %cst_312 = arith.constant 1.000000e-01 : f32
      %1056 = vector.broadcast %cst_312 : f32 to vector<8x128xf32>
      %1057 = arith.addf %974, %1056 : vector<8x128xf32>
      %1058 = math.log %1057 : vector<8x128xf32>
      %cst_313 = arith.constant 1.000000e-01 : f32
      %1059 = vector.broadcast %cst_313 : f32 to vector<8x128xf32>
      %1060 = arith.addf %1037, %1059 : vector<8x128xf32>
      %1061 = math.log %1060 : vector<8x128xf32>
      %1062 = arith.subf %1058, %1061 : vector<8x128xf32>
      %1063 = math.absf %1062 : vector<8x128xf32>
      %1064 = arith.addf %1055, %1063 : vector<8x128xf32>
      %1065 = vector.broadcast %82 : f32 to vector<8x128xf32>
      %1066 = arith.subf %1065, %394 : vector<8x128xf32>
      %1067 = vector.broadcast %86 : f32 to vector<8x128xf32>
      %1068 = arith.subf %1067, %387 : vector<8x128xf32>
      %1069 = arith.mulf %1066, %1066 : vector<8x128xf32>
      %1070 = arith.mulf %1068, %1068 : vector<8x128xf32>
      %1071 = arith.addf %1069, %1070 : vector<8x128xf32>
      %1072 = arith.mulf %90, %90 : f32
      %1073 = vector.broadcast %1072 : f32 to vector<8x128xf32>
      %1074 = arith.addf %1071, %1073 : vector<8x128xf32>
      %cst_314 = arith.constant 9.99999996E-13 : f32
      %1075 = vector.broadcast %cst_314 : f32 to vector<8x128xf32>
      %1076 = arith.addf %1074, %1075 : vector<8x128xf32>
      %1077 = math.rsqrt %1076 : vector<8x128xf32>
      %1078 = arith.mulf %1066, %1077 : vector<8x128xf32>
      %1079 = arith.mulf %1068, %1077 : vector<8x128xf32>
      %1080 = vector.broadcast %90 : f32 to vector<8x128xf32>
      %1081 = arith.mulf %1080, %1077 : vector<8x128xf32>
      %1082 = vector.broadcast %72 : f32 to vector<8x128xf32>
      %1083 = arith.subf %1082, %394 : vector<8x128xf32>
      %1084 = vector.broadcast %75 : f32 to vector<8x128xf32>
      %1085 = arith.subf %1084, %387 : vector<8x128xf32>
      %1086 = arith.mulf %1083, %1083 : vector<8x128xf32>
      %1087 = arith.mulf %1085, %1085 : vector<8x128xf32>
      %1088 = arith.addf %1086, %1087 : vector<8x128xf32>
      %1089 = arith.mulf %78, %78 : f32
      %1090 = vector.broadcast %1089 : f32 to vector<8x128xf32>
      %1091 = arith.addf %1088, %1090 : vector<8x128xf32>
      %cst_315 = arith.constant 9.99999996E-13 : f32
      %1092 = vector.broadcast %cst_315 : f32 to vector<8x128xf32>
      %1093 = arith.addf %1091, %1092 : vector<8x128xf32>
      %1094 = math.rsqrt %1093 : vector<8x128xf32>
      %1095 = arith.mulf %1083, %1094 : vector<8x128xf32>
      %1096 = arith.mulf %1085, %1094 : vector<8x128xf32>
      %1097 = vector.broadcast %78 : f32 to vector<8x128xf32>
      %1098 = arith.mulf %1097, %1094 : vector<8x128xf32>
      %1099 = arith.addf %1078, %1095 : vector<8x128xf32>
      %1100 = arith.addf %1079, %1096 : vector<8x128xf32>
      %1101 = arith.addf %1081, %1098 : vector<8x128xf32>
      %1102 = arith.mulf %1099, %1099 : vector<8x128xf32>
      %1103 = arith.mulf %1100, %1100 : vector<8x128xf32>
      %1104 = arith.addf %1102, %1103 : vector<8x128xf32>
      %1105 = arith.mulf %1101, %1101 : vector<8x128xf32>
      %1106 = arith.addf %1104, %1105 : vector<8x128xf32>
      %cst_316 = arith.constant 9.99999996E-13 : f32
      %1107 = vector.broadcast %cst_316 : f32 to vector<8x128xf32>
      %1108 = arith.addf %1106, %1107 : vector<8x128xf32>
      %1109 = math.rsqrt %1108 : vector<8x128xf32>
      %1110 = arith.mulf %1099, %1109 : vector<8x128xf32>
      %1111 = arith.mulf %1100, %1109 : vector<8x128xf32>
      %1112 = arith.mulf %1101, %1109 : vector<8x128xf32>
      %1113 = arith.mulf %1095, %1110 : vector<8x128xf32>
      %1114 = arith.mulf %1096, %1111 : vector<8x128xf32>
      %1115 = arith.addf %1113, %1114 : vector<8x128xf32>
      %1116 = arith.mulf %1098, %1112 : vector<8x128xf32>
      %1117 = arith.addf %1115, %1116 : vector<8x128xf32>
      %cst_317 = arith.constant 1.000000e-03 : f32
      %1118 = vector.broadcast %cst_317 : f32 to vector<8x128xf32>
      %1119 = arith.maximumf %1117, %1118 : vector<8x128xf32>
      %cst_318 = arith.constant 1.000000e+00 : f32
      %1120 = vector.broadcast %cst_318 : f32 to vector<8x128xf32>
      %1121 = arith.subf %1120, %1119 : vector<8x128xf32>
      %1122 = arith.mulf %1121, %1121 : vector<8x128xf32>
      %1123 = arith.mulf %1121, %1121 : vector<8x128xf32>
      %1124 = arith.mulf %1122, %1123 : vector<8x128xf32>
      %1125 = arith.mulf %1124, %1121 : vector<8x128xf32>
      %1126 = arith.mulf %1077, %1077 : vector<8x128xf32>
      %1127 = vector.broadcast %94 : f32 to vector<8x128xf32>
      %1128 = arith.mulf %1127, %1126 : vector<8x128xf32>
      %1129 = vector.broadcast %98 : f32 to vector<8x128xf32>
      %1130 = arith.mulf %1129, %1126 : vector<8x128xf32>
      %1131 = vector.broadcast %102 : f32 to vector<8x128xf32>
      %1132 = arith.mulf %1131, %1126 : vector<8x128xf32>
      %1133 = arith.mulf %407, %1078 : vector<8x128xf32>
      %1134 = arith.mulf %408, %1079 : vector<8x128xf32>
      %1135 = arith.addf %1133, %1134 : vector<8x128xf32>
      %1136 = arith.mulf %406, %1081 : vector<8x128xf32>
      %1137 = arith.addf %1135, %1136 : vector<8x128xf32>
      %cst_319 = arith.constant 1.000000e-03 : f32
      %1138 = vector.broadcast %cst_319 : f32 to vector<8x128xf32>
      %1139 = arith.maximumf %1137, %1138 : vector<8x128xf32>
      %1140 = arith.mulf %407, %1095 : vector<8x128xf32>
      %1141 = arith.mulf %408, %1096 : vector<8x128xf32>
      %1142 = arith.addf %1140, %1141 : vector<8x128xf32>
      %1143 = arith.mulf %406, %1098 : vector<8x128xf32>
      %1144 = arith.addf %1142, %1143 : vector<8x128xf32>
      %cst_320 = arith.constant 1.000000e-03 : f32
      %1145 = vector.broadcast %cst_320 : f32 to vector<8x128xf32>
      %1146 = arith.maximumf %1144, %1145 : vector<8x128xf32>
      %1147 = arith.mulf %407, %1110 : vector<8x128xf32>
      %1148 = arith.mulf %408, %1111 : vector<8x128xf32>
      %1149 = arith.addf %1147, %1148 : vector<8x128xf32>
      %1150 = arith.mulf %406, %1112 : vector<8x128xf32>
      %1151 = arith.addf %1149, %1150 : vector<8x128xf32>
      %cst_321 = arith.constant 1.000000e-03 : f32
      %1152 = vector.broadcast %cst_321 : f32 to vector<8x128xf32>
      %1153 = arith.maximumf %1151, %1152 : vector<8x128xf32>
      %1154 = arith.mulf %1153, %1153 : vector<8x128xf32>
      %cst_322 = arith.constant 1.000000e+00 : f32
      %1155 = vector.broadcast %cst_322 : f32 to vector<8x128xf32>
      %1156 = arith.subf %569, %1155 : vector<8x128xf32>
      %1157 = arith.mulf %1154, %1156 : vector<8x128xf32>
      %cst_323 = arith.constant 1.000000e+00 : f32
      %1158 = vector.broadcast %cst_323 : f32 to vector<8x128xf32>
      %1159 = arith.addf %1157, %1158 : vector<8x128xf32>
      %1160 = arith.mulf %1139, %573 : vector<8x128xf32>
      %1161 = arith.addf %1160, %571 : vector<8x128xf32>
      %1162 = arith.mulf %1146, %573 : vector<8x128xf32>
      %1163 = arith.addf %1162, %571 : vector<8x128xf32>
      %cst_324 = arith.constant 2.500000e-01 : f32
      %1164 = vector.broadcast %cst_324 : f32 to vector<8x128xf32>
      %1165 = arith.mulf %1164, %569 : vector<8x128xf32>
      %cst_325 = arith.constant 3.14159274 : f32
      %1166 = vector.broadcast %cst_325 : f32 to vector<8x128xf32>
      %1167 = arith.mulf %1166, %1159 : vector<8x128xf32>
      %1168 = arith.mulf %1167, %1159 : vector<8x128xf32>
      %1169 = arith.mulf %1168, %1161 : vector<8x128xf32>
      %1170 = arith.mulf %1169, %1163 : vector<8x128xf32>
      %1171 = arith.divf %1165, %1170 : vector<8x128xf32>
      %1172 = arith.mulf %575, %1125 : vector<8x128xf32>
      %1173 = arith.addf %443, %1172 : vector<8x128xf32>
      %1174 = arith.mulf %1171, %1173 : vector<8x128xf32>
      %1175 = arith.addf %582, %1174 : vector<8x128xf32>
      %1176 = arith.mulf %1128, %1139 : vector<8x128xf32>
      %1177 = arith.mulf %1175, %1176 : vector<8x128xf32>
      %cst_326 = arith.constant 0.000000e+00 : f32
      %1178 = vector.broadcast %cst_326 : f32 to vector<8x128xf32>
      %1179 = arith.maximumf %1177, %1178 : vector<8x128xf32>
      %1180 = arith.mulf %577, %1125 : vector<8x128xf32>
      %1181 = arith.addf %450, %1180 : vector<8x128xf32>
      %1182 = arith.mulf %1171, %1181 : vector<8x128xf32>
      %1183 = arith.addf %585, %1182 : vector<8x128xf32>
      %1184 = arith.mulf %1130, %1139 : vector<8x128xf32>
      %1185 = arith.mulf %1183, %1184 : vector<8x128xf32>
      %cst_327 = arith.constant 0.000000e+00 : f32
      %1186 = vector.broadcast %cst_327 : f32 to vector<8x128xf32>
      %1187 = arith.maximumf %1185, %1186 : vector<8x128xf32>
      %1188 = arith.mulf %579, %1125 : vector<8x128xf32>
      %1189 = arith.addf %457, %1188 : vector<8x128xf32>
      %1190 = arith.mulf %1171, %1189 : vector<8x128xf32>
      %1191 = arith.addf %588, %1190 : vector<8x128xf32>
      %1192 = arith.mulf %1132, %1139 : vector<8x128xf32>
      %1193 = arith.mulf %1191, %1192 : vector<8x128xf32>
      %cst_328 = arith.constant 0.000000e+00 : f32
      %1194 = vector.broadcast %cst_328 : f32 to vector<8x128xf32>
      %1195 = arith.maximumf %1193, %1194 : vector<8x128xf32>
      %1196 = arith.mulf %597, %1078 : vector<8x128xf32>
      %1197 = arith.mulf %598, %1079 : vector<8x128xf32>
      %1198 = arith.addf %1196, %1197 : vector<8x128xf32>
      %1199 = arith.mulf %599, %1081 : vector<8x128xf32>
      %1200 = arith.addf %1198, %1199 : vector<8x128xf32>
      %cst_329 = arith.constant 1.000000e-03 : f32
      %1201 = vector.broadcast %cst_329 : f32 to vector<8x128xf32>
      %1202 = arith.maximumf %1200, %1201 : vector<8x128xf32>
      %1203 = arith.mulf %597, %1095 : vector<8x128xf32>
      %1204 = arith.mulf %598, %1096 : vector<8x128xf32>
      %1205 = arith.addf %1203, %1204 : vector<8x128xf32>
      %1206 = arith.mulf %599, %1098 : vector<8x128xf32>
      %1207 = arith.addf %1205, %1206 : vector<8x128xf32>
      %cst_330 = arith.constant 1.000000e-03 : f32
      %1208 = vector.broadcast %cst_330 : f32 to vector<8x128xf32>
      %1209 = arith.maximumf %1207, %1208 : vector<8x128xf32>
      %1210 = arith.mulf %597, %1110 : vector<8x128xf32>
      %1211 = arith.mulf %598, %1111 : vector<8x128xf32>
      %1212 = arith.addf %1210, %1211 : vector<8x128xf32>
      %1213 = arith.mulf %599, %1112 : vector<8x128xf32>
      %1214 = arith.addf %1212, %1213 : vector<8x128xf32>
      %cst_331 = arith.constant 1.000000e-03 : f32
      %1215 = vector.broadcast %cst_331 : f32 to vector<8x128xf32>
      %1216 = arith.maximumf %1214, %1215 : vector<8x128xf32>
      %1217 = arith.mulf %1216, %1216 : vector<8x128xf32>
      %cst_332 = arith.constant 1.000000e+00 : f32
      %1218 = vector.broadcast %cst_332 : f32 to vector<8x128xf32>
      %1219 = arith.subf %603, %1218 : vector<8x128xf32>
      %1220 = arith.mulf %1217, %1219 : vector<8x128xf32>
      %cst_333 = arith.constant 1.000000e+00 : f32
      %1221 = vector.broadcast %cst_333 : f32 to vector<8x128xf32>
      %1222 = arith.addf %1220, %1221 : vector<8x128xf32>
      %1223 = arith.mulf %1202, %607 : vector<8x128xf32>
      %1224 = arith.addf %1223, %605 : vector<8x128xf32>
      %1225 = arith.mulf %1209, %607 : vector<8x128xf32>
      %1226 = arith.addf %1225, %605 : vector<8x128xf32>
      %cst_334 = arith.constant 2.500000e-01 : f32
      %1227 = vector.broadcast %cst_334 : f32 to vector<8x128xf32>
      %1228 = arith.mulf %1227, %603 : vector<8x128xf32>
      %cst_335 = arith.constant 3.14159274 : f32
      %1229 = vector.broadcast %cst_335 : f32 to vector<8x128xf32>
      %1230 = arith.mulf %1229, %1222 : vector<8x128xf32>
      %1231 = arith.mulf %1230, %1222 : vector<8x128xf32>
      %1232 = arith.mulf %1231, %1224 : vector<8x128xf32>
      %1233 = arith.mulf %1232, %1226 : vector<8x128xf32>
      %1234 = arith.divf %1228, %1233 : vector<8x128xf32>
      %1235 = arith.mulf %609, %1125 : vector<8x128xf32>
      %1236 = arith.addf %487, %1235 : vector<8x128xf32>
      %1237 = arith.mulf %1234, %1236 : vector<8x128xf32>
      %1238 = arith.addf %616, %1237 : vector<8x128xf32>
      %1239 = arith.mulf %1128, %1202 : vector<8x128xf32>
      %1240 = arith.mulf %1238, %1239 : vector<8x128xf32>
      %cst_336 = arith.constant 0.000000e+00 : f32
      %1241 = vector.broadcast %cst_336 : f32 to vector<8x128xf32>
      %1242 = arith.maximumf %1240, %1241 : vector<8x128xf32>
      %1243 = arith.mulf %611, %1125 : vector<8x128xf32>
      %1244 = arith.addf %490, %1243 : vector<8x128xf32>
      %1245 = arith.mulf %1234, %1244 : vector<8x128xf32>
      %1246 = arith.addf %619, %1245 : vector<8x128xf32>
      %1247 = arith.mulf %1130, %1202 : vector<8x128xf32>
      %1248 = arith.mulf %1246, %1247 : vector<8x128xf32>
      %cst_337 = arith.constant 0.000000e+00 : f32
      %1249 = vector.broadcast %cst_337 : f32 to vector<8x128xf32>
      %1250 = arith.maximumf %1248, %1249 : vector<8x128xf32>
      %1251 = arith.mulf %613, %1125 : vector<8x128xf32>
      %1252 = arith.addf %493, %1251 : vector<8x128xf32>
      %1253 = arith.mulf %1234, %1252 : vector<8x128xf32>
      %1254 = arith.addf %622, %1253 : vector<8x128xf32>
      %1255 = arith.mulf %1132, %1202 : vector<8x128xf32>
      %1256 = arith.mulf %1254, %1255 : vector<8x128xf32>
      %cst_338 = arith.constant 0.000000e+00 : f32
      %1257 = vector.broadcast %cst_338 : f32 to vector<8x128xf32>
      %1258 = arith.maximumf %1256, %1257 : vector<8x128xf32>
      %cst_339 = arith.constant 1.000000e-01 : f32
      %1259 = vector.broadcast %cst_339 : f32 to vector<8x128xf32>
      %1260 = arith.addf %1179, %1259 : vector<8x128xf32>
      %1261 = math.log %1260 : vector<8x128xf32>
      %cst_340 = arith.constant 1.000000e-01 : f32
      %1262 = vector.broadcast %cst_340 : f32 to vector<8x128xf32>
      %1263 = arith.addf %1242, %1262 : vector<8x128xf32>
      %1264 = math.log %1263 : vector<8x128xf32>
      %1265 = arith.subf %1261, %1264 : vector<8x128xf32>
      %1266 = math.absf %1265 : vector<8x128xf32>
      %1267 = arith.addf %1064, %1266 : vector<8x128xf32>
      %cst_341 = arith.constant 1.000000e-01 : f32
      %1268 = vector.broadcast %cst_341 : f32 to vector<8x128xf32>
      %1269 = arith.addf %1187, %1268 : vector<8x128xf32>
      %1270 = math.log %1269 : vector<8x128xf32>
      %cst_342 = arith.constant 1.000000e-01 : f32
      %1271 = vector.broadcast %cst_342 : f32 to vector<8x128xf32>
      %1272 = arith.addf %1250, %1271 : vector<8x128xf32>
      %1273 = math.log %1272 : vector<8x128xf32>
      %1274 = arith.subf %1270, %1273 : vector<8x128xf32>
      %1275 = math.absf %1274 : vector<8x128xf32>
      %1276 = arith.addf %1267, %1275 : vector<8x128xf32>
      %cst_343 = arith.constant 1.000000e-01 : f32
      %1277 = vector.broadcast %cst_343 : f32 to vector<8x128xf32>
      %1278 = arith.addf %1195, %1277 : vector<8x128xf32>
      %1279 = math.log %1278 : vector<8x128xf32>
      %cst_344 = arith.constant 1.000000e-01 : f32
      %1280 = vector.broadcast %cst_344 : f32 to vector<8x128xf32>
      %1281 = arith.addf %1258, %1280 : vector<8x128xf32>
      %1282 = math.log %1281 : vector<8x128xf32>
      %1283 = arith.subf %1279, %1282 : vector<8x128xf32>
      %1284 = math.absf %1283 : vector<8x128xf32>
      %1285 = arith.addf %1276, %1284 : vector<8x128xf32>
      %1286 = vector.broadcast %116 : f32 to vector<8x128xf32>
      %1287 = arith.subf %1286, %394 : vector<8x128xf32>
      %1288 = vector.broadcast %120 : f32 to vector<8x128xf32>
      %1289 = arith.subf %1288, %387 : vector<8x128xf32>
      %1290 = arith.mulf %1287, %1287 : vector<8x128xf32>
      %1291 = arith.mulf %1289, %1289 : vector<8x128xf32>
      %1292 = arith.addf %1290, %1291 : vector<8x128xf32>
      %1293 = arith.mulf %124, %124 : f32
      %1294 = vector.broadcast %1293 : f32 to vector<8x128xf32>
      %1295 = arith.addf %1292, %1294 : vector<8x128xf32>
      %cst_345 = arith.constant 9.99999996E-13 : f32
      %1296 = vector.broadcast %cst_345 : f32 to vector<8x128xf32>
      %1297 = arith.addf %1295, %1296 : vector<8x128xf32>
      %1298 = math.rsqrt %1297 : vector<8x128xf32>
      %1299 = arith.mulf %1287, %1298 : vector<8x128xf32>
      %1300 = arith.mulf %1289, %1298 : vector<8x128xf32>
      %1301 = vector.broadcast %124 : f32 to vector<8x128xf32>
      %1302 = arith.mulf %1301, %1298 : vector<8x128xf32>
      %1303 = vector.broadcast %106 : f32 to vector<8x128xf32>
      %1304 = arith.subf %1303, %394 : vector<8x128xf32>
      %1305 = vector.broadcast %109 : f32 to vector<8x128xf32>
      %1306 = arith.subf %1305, %387 : vector<8x128xf32>
      %1307 = arith.mulf %1304, %1304 : vector<8x128xf32>
      %1308 = arith.mulf %1306, %1306 : vector<8x128xf32>
      %1309 = arith.addf %1307, %1308 : vector<8x128xf32>
      %1310 = arith.mulf %112, %112 : f32
      %1311 = vector.broadcast %1310 : f32 to vector<8x128xf32>
      %1312 = arith.addf %1309, %1311 : vector<8x128xf32>
      %cst_346 = arith.constant 9.99999996E-13 : f32
      %1313 = vector.broadcast %cst_346 : f32 to vector<8x128xf32>
      %1314 = arith.addf %1312, %1313 : vector<8x128xf32>
      %1315 = math.rsqrt %1314 : vector<8x128xf32>
      %1316 = arith.mulf %1304, %1315 : vector<8x128xf32>
      %1317 = arith.mulf %1306, %1315 : vector<8x128xf32>
      %1318 = vector.broadcast %112 : f32 to vector<8x128xf32>
      %1319 = arith.mulf %1318, %1315 : vector<8x128xf32>
      %1320 = arith.addf %1299, %1316 : vector<8x128xf32>
      %1321 = arith.addf %1300, %1317 : vector<8x128xf32>
      %1322 = arith.addf %1302, %1319 : vector<8x128xf32>
      %1323 = arith.mulf %1320, %1320 : vector<8x128xf32>
      %1324 = arith.mulf %1321, %1321 : vector<8x128xf32>
      %1325 = arith.addf %1323, %1324 : vector<8x128xf32>
      %1326 = arith.mulf %1322, %1322 : vector<8x128xf32>
      %1327 = arith.addf %1325, %1326 : vector<8x128xf32>
      %cst_347 = arith.constant 9.99999996E-13 : f32
      %1328 = vector.broadcast %cst_347 : f32 to vector<8x128xf32>
      %1329 = arith.addf %1327, %1328 : vector<8x128xf32>
      %1330 = math.rsqrt %1329 : vector<8x128xf32>
      %1331 = arith.mulf %1320, %1330 : vector<8x128xf32>
      %1332 = arith.mulf %1321, %1330 : vector<8x128xf32>
      %1333 = arith.mulf %1322, %1330 : vector<8x128xf32>
      %1334 = arith.mulf %1316, %1331 : vector<8x128xf32>
      %1335 = arith.mulf %1317, %1332 : vector<8x128xf32>
      %1336 = arith.addf %1334, %1335 : vector<8x128xf32>
      %1337 = arith.mulf %1319, %1333 : vector<8x128xf32>
      %1338 = arith.addf %1336, %1337 : vector<8x128xf32>
      %cst_348 = arith.constant 1.000000e-03 : f32
      %1339 = vector.broadcast %cst_348 : f32 to vector<8x128xf32>
      %1340 = arith.maximumf %1338, %1339 : vector<8x128xf32>
      %cst_349 = arith.constant 1.000000e+00 : f32
      %1341 = vector.broadcast %cst_349 : f32 to vector<8x128xf32>
      %1342 = arith.subf %1341, %1340 : vector<8x128xf32>
      %1343 = arith.mulf %1342, %1342 : vector<8x128xf32>
      %1344 = arith.mulf %1342, %1342 : vector<8x128xf32>
      %1345 = arith.mulf %1343, %1344 : vector<8x128xf32>
      %1346 = arith.mulf %1345, %1342 : vector<8x128xf32>
      %1347 = arith.mulf %1298, %1298 : vector<8x128xf32>
      %1348 = vector.broadcast %128 : f32 to vector<8x128xf32>
      %1349 = arith.mulf %1348, %1347 : vector<8x128xf32>
      %1350 = vector.broadcast %132 : f32 to vector<8x128xf32>
      %1351 = arith.mulf %1350, %1347 : vector<8x128xf32>
      %1352 = vector.broadcast %136 : f32 to vector<8x128xf32>
      %1353 = arith.mulf %1352, %1347 : vector<8x128xf32>
      %1354 = arith.mulf %407, %1299 : vector<8x128xf32>
      %1355 = arith.mulf %408, %1300 : vector<8x128xf32>
      %1356 = arith.addf %1354, %1355 : vector<8x128xf32>
      %1357 = arith.mulf %406, %1302 : vector<8x128xf32>
      %1358 = arith.addf %1356, %1357 : vector<8x128xf32>
      %cst_350 = arith.constant 1.000000e-03 : f32
      %1359 = vector.broadcast %cst_350 : f32 to vector<8x128xf32>
      %1360 = arith.maximumf %1358, %1359 : vector<8x128xf32>
      %1361 = arith.mulf %407, %1316 : vector<8x128xf32>
      %1362 = arith.mulf %408, %1317 : vector<8x128xf32>
      %1363 = arith.addf %1361, %1362 : vector<8x128xf32>
      %1364 = arith.mulf %406, %1319 : vector<8x128xf32>
      %1365 = arith.addf %1363, %1364 : vector<8x128xf32>
      %cst_351 = arith.constant 1.000000e-03 : f32
      %1366 = vector.broadcast %cst_351 : f32 to vector<8x128xf32>
      %1367 = arith.maximumf %1365, %1366 : vector<8x128xf32>
      %1368 = arith.mulf %407, %1331 : vector<8x128xf32>
      %1369 = arith.mulf %408, %1332 : vector<8x128xf32>
      %1370 = arith.addf %1368, %1369 : vector<8x128xf32>
      %1371 = arith.mulf %406, %1333 : vector<8x128xf32>
      %1372 = arith.addf %1370, %1371 : vector<8x128xf32>
      %cst_352 = arith.constant 1.000000e-03 : f32
      %1373 = vector.broadcast %cst_352 : f32 to vector<8x128xf32>
      %1374 = arith.maximumf %1372, %1373 : vector<8x128xf32>
      %1375 = arith.mulf %1374, %1374 : vector<8x128xf32>
      %cst_353 = arith.constant 1.000000e+00 : f32
      %1376 = vector.broadcast %cst_353 : f32 to vector<8x128xf32>
      %1377 = arith.subf %569, %1376 : vector<8x128xf32>
      %1378 = arith.mulf %1375, %1377 : vector<8x128xf32>
      %cst_354 = arith.constant 1.000000e+00 : f32
      %1379 = vector.broadcast %cst_354 : f32 to vector<8x128xf32>
      %1380 = arith.addf %1378, %1379 : vector<8x128xf32>
      %1381 = arith.mulf %1360, %573 : vector<8x128xf32>
      %1382 = arith.addf %1381, %571 : vector<8x128xf32>
      %1383 = arith.mulf %1367, %573 : vector<8x128xf32>
      %1384 = arith.addf %1383, %571 : vector<8x128xf32>
      %cst_355 = arith.constant 2.500000e-01 : f32
      %1385 = vector.broadcast %cst_355 : f32 to vector<8x128xf32>
      %1386 = arith.mulf %1385, %569 : vector<8x128xf32>
      %cst_356 = arith.constant 3.14159274 : f32
      %1387 = vector.broadcast %cst_356 : f32 to vector<8x128xf32>
      %1388 = arith.mulf %1387, %1380 : vector<8x128xf32>
      %1389 = arith.mulf %1388, %1380 : vector<8x128xf32>
      %1390 = arith.mulf %1389, %1382 : vector<8x128xf32>
      %1391 = arith.mulf %1390, %1384 : vector<8x128xf32>
      %1392 = arith.divf %1386, %1391 : vector<8x128xf32>
      %1393 = arith.mulf %575, %1346 : vector<8x128xf32>
      %1394 = arith.addf %443, %1393 : vector<8x128xf32>
      %1395 = arith.mulf %1392, %1394 : vector<8x128xf32>
      %1396 = arith.addf %582, %1395 : vector<8x128xf32>
      %1397 = arith.mulf %1349, %1360 : vector<8x128xf32>
      %1398 = arith.mulf %1396, %1397 : vector<8x128xf32>
      %cst_357 = arith.constant 0.000000e+00 : f32
      %1399 = vector.broadcast %cst_357 : f32 to vector<8x128xf32>
      %1400 = arith.maximumf %1398, %1399 : vector<8x128xf32>
      %1401 = arith.mulf %577, %1346 : vector<8x128xf32>
      %1402 = arith.addf %450, %1401 : vector<8x128xf32>
      %1403 = arith.mulf %1392, %1402 : vector<8x128xf32>
      %1404 = arith.addf %585, %1403 : vector<8x128xf32>
      %1405 = arith.mulf %1351, %1360 : vector<8x128xf32>
      %1406 = arith.mulf %1404, %1405 : vector<8x128xf32>
      %cst_358 = arith.constant 0.000000e+00 : f32
      %1407 = vector.broadcast %cst_358 : f32 to vector<8x128xf32>
      %1408 = arith.maximumf %1406, %1407 : vector<8x128xf32>
      %1409 = arith.mulf %579, %1346 : vector<8x128xf32>
      %1410 = arith.addf %457, %1409 : vector<8x128xf32>
      %1411 = arith.mulf %1392, %1410 : vector<8x128xf32>
      %1412 = arith.addf %588, %1411 : vector<8x128xf32>
      %1413 = arith.mulf %1353, %1360 : vector<8x128xf32>
      %1414 = arith.mulf %1412, %1413 : vector<8x128xf32>
      %cst_359 = arith.constant 0.000000e+00 : f32
      %1415 = vector.broadcast %cst_359 : f32 to vector<8x128xf32>
      %1416 = arith.maximumf %1414, %1415 : vector<8x128xf32>
      %1417 = arith.mulf %597, %1299 : vector<8x128xf32>
      %1418 = arith.mulf %598, %1300 : vector<8x128xf32>
      %1419 = arith.addf %1417, %1418 : vector<8x128xf32>
      %1420 = arith.mulf %599, %1302 : vector<8x128xf32>
      %1421 = arith.addf %1419, %1420 : vector<8x128xf32>
      %cst_360 = arith.constant 1.000000e-03 : f32
      %1422 = vector.broadcast %cst_360 : f32 to vector<8x128xf32>
      %1423 = arith.maximumf %1421, %1422 : vector<8x128xf32>
      %1424 = arith.mulf %597, %1316 : vector<8x128xf32>
      %1425 = arith.mulf %598, %1317 : vector<8x128xf32>
      %1426 = arith.addf %1424, %1425 : vector<8x128xf32>
      %1427 = arith.mulf %599, %1319 : vector<8x128xf32>
      %1428 = arith.addf %1426, %1427 : vector<8x128xf32>
      %cst_361 = arith.constant 1.000000e-03 : f32
      %1429 = vector.broadcast %cst_361 : f32 to vector<8x128xf32>
      %1430 = arith.maximumf %1428, %1429 : vector<8x128xf32>
      %1431 = arith.mulf %597, %1331 : vector<8x128xf32>
      %1432 = arith.mulf %598, %1332 : vector<8x128xf32>
      %1433 = arith.addf %1431, %1432 : vector<8x128xf32>
      %1434 = arith.mulf %599, %1333 : vector<8x128xf32>
      %1435 = arith.addf %1433, %1434 : vector<8x128xf32>
      %cst_362 = arith.constant 1.000000e-03 : f32
      %1436 = vector.broadcast %cst_362 : f32 to vector<8x128xf32>
      %1437 = arith.maximumf %1435, %1436 : vector<8x128xf32>
      %1438 = arith.mulf %1437, %1437 : vector<8x128xf32>
      %cst_363 = arith.constant 1.000000e+00 : f32
      %1439 = vector.broadcast %cst_363 : f32 to vector<8x128xf32>
      %1440 = arith.subf %603, %1439 : vector<8x128xf32>
      %1441 = arith.mulf %1438, %1440 : vector<8x128xf32>
      %cst_364 = arith.constant 1.000000e+00 : f32
      %1442 = vector.broadcast %cst_364 : f32 to vector<8x128xf32>
      %1443 = arith.addf %1441, %1442 : vector<8x128xf32>
      %1444 = arith.mulf %1423, %607 : vector<8x128xf32>
      %1445 = arith.addf %1444, %605 : vector<8x128xf32>
      %1446 = arith.mulf %1430, %607 : vector<8x128xf32>
      %1447 = arith.addf %1446, %605 : vector<8x128xf32>
      %cst_365 = arith.constant 2.500000e-01 : f32
      %1448 = vector.broadcast %cst_365 : f32 to vector<8x128xf32>
      %1449 = arith.mulf %1448, %603 : vector<8x128xf32>
      %cst_366 = arith.constant 3.14159274 : f32
      %1450 = vector.broadcast %cst_366 : f32 to vector<8x128xf32>
      %1451 = arith.mulf %1450, %1443 : vector<8x128xf32>
      %1452 = arith.mulf %1451, %1443 : vector<8x128xf32>
      %1453 = arith.mulf %1452, %1445 : vector<8x128xf32>
      %1454 = arith.mulf %1453, %1447 : vector<8x128xf32>
      %1455 = arith.divf %1449, %1454 : vector<8x128xf32>
      %1456 = arith.mulf %609, %1346 : vector<8x128xf32>
      %1457 = arith.addf %487, %1456 : vector<8x128xf32>
      %1458 = arith.mulf %1455, %1457 : vector<8x128xf32>
      %1459 = arith.addf %616, %1458 : vector<8x128xf32>
      %1460 = arith.mulf %1349, %1423 : vector<8x128xf32>
      %1461 = arith.mulf %1459, %1460 : vector<8x128xf32>
      %cst_367 = arith.constant 0.000000e+00 : f32
      %1462 = vector.broadcast %cst_367 : f32 to vector<8x128xf32>
      %1463 = arith.maximumf %1461, %1462 : vector<8x128xf32>
      %1464 = arith.mulf %611, %1346 : vector<8x128xf32>
      %1465 = arith.addf %490, %1464 : vector<8x128xf32>
      %1466 = arith.mulf %1455, %1465 : vector<8x128xf32>
      %1467 = arith.addf %619, %1466 : vector<8x128xf32>
      %1468 = arith.mulf %1351, %1423 : vector<8x128xf32>
      %1469 = arith.mulf %1467, %1468 : vector<8x128xf32>
      %cst_368 = arith.constant 0.000000e+00 : f32
      %1470 = vector.broadcast %cst_368 : f32 to vector<8x128xf32>
      %1471 = arith.maximumf %1469, %1470 : vector<8x128xf32>
      %1472 = arith.mulf %613, %1346 : vector<8x128xf32>
      %1473 = arith.addf %493, %1472 : vector<8x128xf32>
      %1474 = arith.mulf %1455, %1473 : vector<8x128xf32>
      %1475 = arith.addf %622, %1474 : vector<8x128xf32>
      %1476 = arith.mulf %1353, %1423 : vector<8x128xf32>
      %1477 = arith.mulf %1475, %1476 : vector<8x128xf32>
      %cst_369 = arith.constant 0.000000e+00 : f32
      %1478 = vector.broadcast %cst_369 : f32 to vector<8x128xf32>
      %1479 = arith.maximumf %1477, %1478 : vector<8x128xf32>
      %cst_370 = arith.constant 1.000000e-01 : f32
      %1480 = vector.broadcast %cst_370 : f32 to vector<8x128xf32>
      %1481 = arith.addf %1400, %1480 : vector<8x128xf32>
      %1482 = math.log %1481 : vector<8x128xf32>
      %cst_371 = arith.constant 1.000000e-01 : f32
      %1483 = vector.broadcast %cst_371 : f32 to vector<8x128xf32>
      %1484 = arith.addf %1463, %1483 : vector<8x128xf32>
      %1485 = math.log %1484 : vector<8x128xf32>
      %1486 = arith.subf %1482, %1485 : vector<8x128xf32>
      %1487 = math.absf %1486 : vector<8x128xf32>
      %1488 = arith.addf %1285, %1487 : vector<8x128xf32>
      %cst_372 = arith.constant 1.000000e-01 : f32
      %1489 = vector.broadcast %cst_372 : f32 to vector<8x128xf32>
      %1490 = arith.addf %1408, %1489 : vector<8x128xf32>
      %1491 = math.log %1490 : vector<8x128xf32>
      %cst_373 = arith.constant 1.000000e-01 : f32
      %1492 = vector.broadcast %cst_373 : f32 to vector<8x128xf32>
      %1493 = arith.addf %1471, %1492 : vector<8x128xf32>
      %1494 = math.log %1493 : vector<8x128xf32>
      %1495 = arith.subf %1491, %1494 : vector<8x128xf32>
      %1496 = math.absf %1495 : vector<8x128xf32>
      %1497 = arith.addf %1488, %1496 : vector<8x128xf32>
      %cst_374 = arith.constant 1.000000e-01 : f32
      %1498 = vector.broadcast %cst_374 : f32 to vector<8x128xf32>
      %1499 = arith.addf %1416, %1498 : vector<8x128xf32>
      %1500 = math.log %1499 : vector<8x128xf32>
      %cst_375 = arith.constant 1.000000e-01 : f32
      %1501 = vector.broadcast %cst_375 : f32 to vector<8x128xf32>
      %1502 = arith.addf %1479, %1501 : vector<8x128xf32>
      %1503 = math.log %1502 : vector<8x128xf32>
      %1504 = arith.subf %1500, %1503 : vector<8x128xf32>
      %1505 = math.absf %1504 : vector<8x128xf32>
      %1506 = arith.addf %1497, %1505 : vector<8x128xf32>
      %1507 = vector.broadcast %150 : f32 to vector<8x128xf32>
      %1508 = arith.subf %1507, %394 : vector<8x128xf32>
      %1509 = vector.broadcast %154 : f32 to vector<8x128xf32>
      %1510 = arith.subf %1509, %387 : vector<8x128xf32>
      %1511 = arith.mulf %1508, %1508 : vector<8x128xf32>
      %1512 = arith.mulf %1510, %1510 : vector<8x128xf32>
      %1513 = arith.addf %1511, %1512 : vector<8x128xf32>
      %1514 = arith.mulf %158, %158 : f32
      %1515 = vector.broadcast %1514 : f32 to vector<8x128xf32>
      %1516 = arith.addf %1513, %1515 : vector<8x128xf32>
      %cst_376 = arith.constant 9.99999996E-13 : f32
      %1517 = vector.broadcast %cst_376 : f32 to vector<8x128xf32>
      %1518 = arith.addf %1516, %1517 : vector<8x128xf32>
      %1519 = math.rsqrt %1518 : vector<8x128xf32>
      %1520 = arith.mulf %1508, %1519 : vector<8x128xf32>
      %1521 = arith.mulf %1510, %1519 : vector<8x128xf32>
      %1522 = vector.broadcast %158 : f32 to vector<8x128xf32>
      %1523 = arith.mulf %1522, %1519 : vector<8x128xf32>
      %1524 = vector.broadcast %140 : f32 to vector<8x128xf32>
      %1525 = arith.subf %1524, %394 : vector<8x128xf32>
      %1526 = vector.broadcast %143 : f32 to vector<8x128xf32>
      %1527 = arith.subf %1526, %387 : vector<8x128xf32>
      %1528 = arith.mulf %1525, %1525 : vector<8x128xf32>
      %1529 = arith.mulf %1527, %1527 : vector<8x128xf32>
      %1530 = arith.addf %1528, %1529 : vector<8x128xf32>
      %1531 = arith.mulf %146, %146 : f32
      %1532 = vector.broadcast %1531 : f32 to vector<8x128xf32>
      %1533 = arith.addf %1530, %1532 : vector<8x128xf32>
      %cst_377 = arith.constant 9.99999996E-13 : f32
      %1534 = vector.broadcast %cst_377 : f32 to vector<8x128xf32>
      %1535 = arith.addf %1533, %1534 : vector<8x128xf32>
      %1536 = math.rsqrt %1535 : vector<8x128xf32>
      %1537 = arith.mulf %1525, %1536 : vector<8x128xf32>
      %1538 = arith.mulf %1527, %1536 : vector<8x128xf32>
      %1539 = vector.broadcast %146 : f32 to vector<8x128xf32>
      %1540 = arith.mulf %1539, %1536 : vector<8x128xf32>
      %1541 = arith.addf %1520, %1537 : vector<8x128xf32>
      %1542 = arith.addf %1521, %1538 : vector<8x128xf32>
      %1543 = arith.addf %1523, %1540 : vector<8x128xf32>
      %1544 = arith.mulf %1541, %1541 : vector<8x128xf32>
      %1545 = arith.mulf %1542, %1542 : vector<8x128xf32>
      %1546 = arith.addf %1544, %1545 : vector<8x128xf32>
      %1547 = arith.mulf %1543, %1543 : vector<8x128xf32>
      %1548 = arith.addf %1546, %1547 : vector<8x128xf32>
      %cst_378 = arith.constant 9.99999996E-13 : f32
      %1549 = vector.broadcast %cst_378 : f32 to vector<8x128xf32>
      %1550 = arith.addf %1548, %1549 : vector<8x128xf32>
      %1551 = math.rsqrt %1550 : vector<8x128xf32>
      %1552 = arith.mulf %1541, %1551 : vector<8x128xf32>
      %1553 = arith.mulf %1542, %1551 : vector<8x128xf32>
      %1554 = arith.mulf %1543, %1551 : vector<8x128xf32>
      %1555 = arith.mulf %1537, %1552 : vector<8x128xf32>
      %1556 = arith.mulf %1538, %1553 : vector<8x128xf32>
      %1557 = arith.addf %1555, %1556 : vector<8x128xf32>
      %1558 = arith.mulf %1540, %1554 : vector<8x128xf32>
      %1559 = arith.addf %1557, %1558 : vector<8x128xf32>
      %cst_379 = arith.constant 1.000000e-03 : f32
      %1560 = vector.broadcast %cst_379 : f32 to vector<8x128xf32>
      %1561 = arith.maximumf %1559, %1560 : vector<8x128xf32>
      %cst_380 = arith.constant 1.000000e+00 : f32
      %1562 = vector.broadcast %cst_380 : f32 to vector<8x128xf32>
      %1563 = arith.subf %1562, %1561 : vector<8x128xf32>
      %1564 = arith.mulf %1563, %1563 : vector<8x128xf32>
      %1565 = arith.mulf %1563, %1563 : vector<8x128xf32>
      %1566 = arith.mulf %1564, %1565 : vector<8x128xf32>
      %1567 = arith.mulf %1566, %1563 : vector<8x128xf32>
      %1568 = arith.mulf %1519, %1519 : vector<8x128xf32>
      %1569 = vector.broadcast %162 : f32 to vector<8x128xf32>
      %1570 = arith.mulf %1569, %1568 : vector<8x128xf32>
      %1571 = vector.broadcast %166 : f32 to vector<8x128xf32>
      %1572 = arith.mulf %1571, %1568 : vector<8x128xf32>
      %1573 = vector.broadcast %170 : f32 to vector<8x128xf32>
      %1574 = arith.mulf %1573, %1568 : vector<8x128xf32>
      %1575 = arith.mulf %407, %1520 : vector<8x128xf32>
      %1576 = arith.mulf %408, %1521 : vector<8x128xf32>
      %1577 = arith.addf %1575, %1576 : vector<8x128xf32>
      %1578 = arith.mulf %406, %1523 : vector<8x128xf32>
      %1579 = arith.addf %1577, %1578 : vector<8x128xf32>
      %cst_381 = arith.constant 1.000000e-03 : f32
      %1580 = vector.broadcast %cst_381 : f32 to vector<8x128xf32>
      %1581 = arith.maximumf %1579, %1580 : vector<8x128xf32>
      %1582 = arith.mulf %407, %1537 : vector<8x128xf32>
      %1583 = arith.mulf %408, %1538 : vector<8x128xf32>
      %1584 = arith.addf %1582, %1583 : vector<8x128xf32>
      %1585 = arith.mulf %406, %1540 : vector<8x128xf32>
      %1586 = arith.addf %1584, %1585 : vector<8x128xf32>
      %cst_382 = arith.constant 1.000000e-03 : f32
      %1587 = vector.broadcast %cst_382 : f32 to vector<8x128xf32>
      %1588 = arith.maximumf %1586, %1587 : vector<8x128xf32>
      %1589 = arith.mulf %407, %1552 : vector<8x128xf32>
      %1590 = arith.mulf %408, %1553 : vector<8x128xf32>
      %1591 = arith.addf %1589, %1590 : vector<8x128xf32>
      %1592 = arith.mulf %406, %1554 : vector<8x128xf32>
      %1593 = arith.addf %1591, %1592 : vector<8x128xf32>
      %cst_383 = arith.constant 1.000000e-03 : f32
      %1594 = vector.broadcast %cst_383 : f32 to vector<8x128xf32>
      %1595 = arith.maximumf %1593, %1594 : vector<8x128xf32>
      %1596 = arith.mulf %1595, %1595 : vector<8x128xf32>
      %cst_384 = arith.constant 1.000000e+00 : f32
      %1597 = vector.broadcast %cst_384 : f32 to vector<8x128xf32>
      %1598 = arith.subf %569, %1597 : vector<8x128xf32>
      %1599 = arith.mulf %1596, %1598 : vector<8x128xf32>
      %cst_385 = arith.constant 1.000000e+00 : f32
      %1600 = vector.broadcast %cst_385 : f32 to vector<8x128xf32>
      %1601 = arith.addf %1599, %1600 : vector<8x128xf32>
      %1602 = arith.mulf %1581, %573 : vector<8x128xf32>
      %1603 = arith.addf %1602, %571 : vector<8x128xf32>
      %1604 = arith.mulf %1588, %573 : vector<8x128xf32>
      %1605 = arith.addf %1604, %571 : vector<8x128xf32>
      %cst_386 = arith.constant 2.500000e-01 : f32
      %1606 = vector.broadcast %cst_386 : f32 to vector<8x128xf32>
      %1607 = arith.mulf %1606, %569 : vector<8x128xf32>
      %cst_387 = arith.constant 3.14159274 : f32
      %1608 = vector.broadcast %cst_387 : f32 to vector<8x128xf32>
      %1609 = arith.mulf %1608, %1601 : vector<8x128xf32>
      %1610 = arith.mulf %1609, %1601 : vector<8x128xf32>
      %1611 = arith.mulf %1610, %1603 : vector<8x128xf32>
      %1612 = arith.mulf %1611, %1605 : vector<8x128xf32>
      %1613 = arith.divf %1607, %1612 : vector<8x128xf32>
      %1614 = arith.mulf %575, %1567 : vector<8x128xf32>
      %1615 = arith.addf %443, %1614 : vector<8x128xf32>
      %1616 = arith.mulf %1613, %1615 : vector<8x128xf32>
      %1617 = arith.addf %582, %1616 : vector<8x128xf32>
      %1618 = arith.mulf %1570, %1581 : vector<8x128xf32>
      %1619 = arith.mulf %1617, %1618 : vector<8x128xf32>
      %cst_388 = arith.constant 0.000000e+00 : f32
      %1620 = vector.broadcast %cst_388 : f32 to vector<8x128xf32>
      %1621 = arith.maximumf %1619, %1620 : vector<8x128xf32>
      %1622 = arith.mulf %577, %1567 : vector<8x128xf32>
      %1623 = arith.addf %450, %1622 : vector<8x128xf32>
      %1624 = arith.mulf %1613, %1623 : vector<8x128xf32>
      %1625 = arith.addf %585, %1624 : vector<8x128xf32>
      %1626 = arith.mulf %1572, %1581 : vector<8x128xf32>
      %1627 = arith.mulf %1625, %1626 : vector<8x128xf32>
      %cst_389 = arith.constant 0.000000e+00 : f32
      %1628 = vector.broadcast %cst_389 : f32 to vector<8x128xf32>
      %1629 = arith.maximumf %1627, %1628 : vector<8x128xf32>
      %1630 = arith.mulf %579, %1567 : vector<8x128xf32>
      %1631 = arith.addf %457, %1630 : vector<8x128xf32>
      %1632 = arith.mulf %1613, %1631 : vector<8x128xf32>
      %1633 = arith.addf %588, %1632 : vector<8x128xf32>
      %1634 = arith.mulf %1574, %1581 : vector<8x128xf32>
      %1635 = arith.mulf %1633, %1634 : vector<8x128xf32>
      %cst_390 = arith.constant 0.000000e+00 : f32
      %1636 = vector.broadcast %cst_390 : f32 to vector<8x128xf32>
      %1637 = arith.maximumf %1635, %1636 : vector<8x128xf32>
      %1638 = arith.mulf %597, %1520 : vector<8x128xf32>
      %1639 = arith.mulf %598, %1521 : vector<8x128xf32>
      %1640 = arith.addf %1638, %1639 : vector<8x128xf32>
      %1641 = arith.mulf %599, %1523 : vector<8x128xf32>
      %1642 = arith.addf %1640, %1641 : vector<8x128xf32>
      %cst_391 = arith.constant 1.000000e-03 : f32
      %1643 = vector.broadcast %cst_391 : f32 to vector<8x128xf32>
      %1644 = arith.maximumf %1642, %1643 : vector<8x128xf32>
      %1645 = arith.mulf %597, %1537 : vector<8x128xf32>
      %1646 = arith.mulf %598, %1538 : vector<8x128xf32>
      %1647 = arith.addf %1645, %1646 : vector<8x128xf32>
      %1648 = arith.mulf %599, %1540 : vector<8x128xf32>
      %1649 = arith.addf %1647, %1648 : vector<8x128xf32>
      %cst_392 = arith.constant 1.000000e-03 : f32
      %1650 = vector.broadcast %cst_392 : f32 to vector<8x128xf32>
      %1651 = arith.maximumf %1649, %1650 : vector<8x128xf32>
      %1652 = arith.mulf %597, %1552 : vector<8x128xf32>
      %1653 = arith.mulf %598, %1553 : vector<8x128xf32>
      %1654 = arith.addf %1652, %1653 : vector<8x128xf32>
      %1655 = arith.mulf %599, %1554 : vector<8x128xf32>
      %1656 = arith.addf %1654, %1655 : vector<8x128xf32>
      %cst_393 = arith.constant 1.000000e-03 : f32
      %1657 = vector.broadcast %cst_393 : f32 to vector<8x128xf32>
      %1658 = arith.maximumf %1656, %1657 : vector<8x128xf32>
      %1659 = arith.mulf %1658, %1658 : vector<8x128xf32>
      %cst_394 = arith.constant 1.000000e+00 : f32
      %1660 = vector.broadcast %cst_394 : f32 to vector<8x128xf32>
      %1661 = arith.subf %603, %1660 : vector<8x128xf32>
      %1662 = arith.mulf %1659, %1661 : vector<8x128xf32>
      %cst_395 = arith.constant 1.000000e+00 : f32
      %1663 = vector.broadcast %cst_395 : f32 to vector<8x128xf32>
      %1664 = arith.addf %1662, %1663 : vector<8x128xf32>
      %1665 = arith.mulf %1644, %607 : vector<8x128xf32>
      %1666 = arith.addf %1665, %605 : vector<8x128xf32>
      %1667 = arith.mulf %1651, %607 : vector<8x128xf32>
      %1668 = arith.addf %1667, %605 : vector<8x128xf32>
      %cst_396 = arith.constant 2.500000e-01 : f32
      %1669 = vector.broadcast %cst_396 : f32 to vector<8x128xf32>
      %1670 = arith.mulf %1669, %603 : vector<8x128xf32>
      %cst_397 = arith.constant 3.14159274 : f32
      %1671 = vector.broadcast %cst_397 : f32 to vector<8x128xf32>
      %1672 = arith.mulf %1671, %1664 : vector<8x128xf32>
      %1673 = arith.mulf %1672, %1664 : vector<8x128xf32>
      %1674 = arith.mulf %1673, %1666 : vector<8x128xf32>
      %1675 = arith.mulf %1674, %1668 : vector<8x128xf32>
      %1676 = arith.divf %1670, %1675 : vector<8x128xf32>
      %1677 = arith.mulf %609, %1567 : vector<8x128xf32>
      %1678 = arith.addf %487, %1677 : vector<8x128xf32>
      %1679 = arith.mulf %1676, %1678 : vector<8x128xf32>
      %1680 = arith.addf %616, %1679 : vector<8x128xf32>
      %1681 = arith.mulf %1570, %1644 : vector<8x128xf32>
      %1682 = arith.mulf %1680, %1681 : vector<8x128xf32>
      %cst_398 = arith.constant 0.000000e+00 : f32
      %1683 = vector.broadcast %cst_398 : f32 to vector<8x128xf32>
      %1684 = arith.maximumf %1682, %1683 : vector<8x128xf32>
      %1685 = arith.mulf %611, %1567 : vector<8x128xf32>
      %1686 = arith.addf %490, %1685 : vector<8x128xf32>
      %1687 = arith.mulf %1676, %1686 : vector<8x128xf32>
      %1688 = arith.addf %619, %1687 : vector<8x128xf32>
      %1689 = arith.mulf %1572, %1644 : vector<8x128xf32>
      %1690 = arith.mulf %1688, %1689 : vector<8x128xf32>
      %cst_399 = arith.constant 0.000000e+00 : f32
      %1691 = vector.broadcast %cst_399 : f32 to vector<8x128xf32>
      %1692 = arith.maximumf %1690, %1691 : vector<8x128xf32>
      %1693 = arith.mulf %613, %1567 : vector<8x128xf32>
      %1694 = arith.addf %493, %1693 : vector<8x128xf32>
      %1695 = arith.mulf %1676, %1694 : vector<8x128xf32>
      %1696 = arith.addf %622, %1695 : vector<8x128xf32>
      %1697 = arith.mulf %1574, %1644 : vector<8x128xf32>
      %1698 = arith.mulf %1696, %1697 : vector<8x128xf32>
      %cst_400 = arith.constant 0.000000e+00 : f32
      %1699 = vector.broadcast %cst_400 : f32 to vector<8x128xf32>
      %1700 = arith.maximumf %1698, %1699 : vector<8x128xf32>
      %cst_401 = arith.constant 1.000000e-01 : f32
      %1701 = vector.broadcast %cst_401 : f32 to vector<8x128xf32>
      %1702 = arith.addf %1621, %1701 : vector<8x128xf32>
      %1703 = math.log %1702 : vector<8x128xf32>
      %cst_402 = arith.constant 1.000000e-01 : f32
      %1704 = vector.broadcast %cst_402 : f32 to vector<8x128xf32>
      %1705 = arith.addf %1684, %1704 : vector<8x128xf32>
      %1706 = math.log %1705 : vector<8x128xf32>
      %1707 = arith.subf %1703, %1706 : vector<8x128xf32>
      %1708 = math.absf %1707 : vector<8x128xf32>
      %1709 = arith.addf %1506, %1708 : vector<8x128xf32>
      %cst_403 = arith.constant 1.000000e-01 : f32
      %1710 = vector.broadcast %cst_403 : f32 to vector<8x128xf32>
      %1711 = arith.addf %1629, %1710 : vector<8x128xf32>
      %1712 = math.log %1711 : vector<8x128xf32>
      %cst_404 = arith.constant 1.000000e-01 : f32
      %1713 = vector.broadcast %cst_404 : f32 to vector<8x128xf32>
      %1714 = arith.addf %1692, %1713 : vector<8x128xf32>
      %1715 = math.log %1714 : vector<8x128xf32>
      %1716 = arith.subf %1712, %1715 : vector<8x128xf32>
      %1717 = math.absf %1716 : vector<8x128xf32>
      %1718 = arith.addf %1709, %1717 : vector<8x128xf32>
      %cst_405 = arith.constant 1.000000e-01 : f32
      %1719 = vector.broadcast %cst_405 : f32 to vector<8x128xf32>
      %1720 = arith.addf %1637, %1719 : vector<8x128xf32>
      %1721 = math.log %1720 : vector<8x128xf32>
      %cst_406 = arith.constant 1.000000e-01 : f32
      %1722 = vector.broadcast %cst_406 : f32 to vector<8x128xf32>
      %1723 = arith.addf %1700, %1722 : vector<8x128xf32>
      %1724 = math.log %1723 : vector<8x128xf32>
      %1725 = arith.subf %1721, %1724 : vector<8x128xf32>
      %1726 = math.absf %1725 : vector<8x128xf32>
      %1727 = arith.addf %1718, %1726 : vector<8x128xf32>
      %1728 = vector.broadcast %184 : f32 to vector<8x128xf32>
      %1729 = arith.subf %1728, %394 : vector<8x128xf32>
      %1730 = vector.broadcast %188 : f32 to vector<8x128xf32>
      %1731 = arith.subf %1730, %387 : vector<8x128xf32>
      %1732 = arith.mulf %1729, %1729 : vector<8x128xf32>
      %1733 = arith.mulf %1731, %1731 : vector<8x128xf32>
      %1734 = arith.addf %1732, %1733 : vector<8x128xf32>
      %1735 = arith.mulf %192, %192 : f32
      %1736 = vector.broadcast %1735 : f32 to vector<8x128xf32>
      %1737 = arith.addf %1734, %1736 : vector<8x128xf32>
      %cst_407 = arith.constant 9.99999996E-13 : f32
      %1738 = vector.broadcast %cst_407 : f32 to vector<8x128xf32>
      %1739 = arith.addf %1737, %1738 : vector<8x128xf32>
      %1740 = math.rsqrt %1739 : vector<8x128xf32>
      %1741 = arith.mulf %1729, %1740 : vector<8x128xf32>
      %1742 = arith.mulf %1731, %1740 : vector<8x128xf32>
      %1743 = vector.broadcast %192 : f32 to vector<8x128xf32>
      %1744 = arith.mulf %1743, %1740 : vector<8x128xf32>
      %1745 = vector.broadcast %174 : f32 to vector<8x128xf32>
      %1746 = arith.subf %1745, %394 : vector<8x128xf32>
      %1747 = vector.broadcast %177 : f32 to vector<8x128xf32>
      %1748 = arith.subf %1747, %387 : vector<8x128xf32>
      %1749 = arith.mulf %1746, %1746 : vector<8x128xf32>
      %1750 = arith.mulf %1748, %1748 : vector<8x128xf32>
      %1751 = arith.addf %1749, %1750 : vector<8x128xf32>
      %1752 = arith.mulf %180, %180 : f32
      %1753 = vector.broadcast %1752 : f32 to vector<8x128xf32>
      %1754 = arith.addf %1751, %1753 : vector<8x128xf32>
      %cst_408 = arith.constant 9.99999996E-13 : f32
      %1755 = vector.broadcast %cst_408 : f32 to vector<8x128xf32>
      %1756 = arith.addf %1754, %1755 : vector<8x128xf32>
      %1757 = math.rsqrt %1756 : vector<8x128xf32>
      %1758 = arith.mulf %1746, %1757 : vector<8x128xf32>
      %1759 = arith.mulf %1748, %1757 : vector<8x128xf32>
      %1760 = vector.broadcast %180 : f32 to vector<8x128xf32>
      %1761 = arith.mulf %1760, %1757 : vector<8x128xf32>
      %1762 = arith.addf %1741, %1758 : vector<8x128xf32>
      %1763 = arith.addf %1742, %1759 : vector<8x128xf32>
      %1764 = arith.addf %1744, %1761 : vector<8x128xf32>
      %1765 = arith.mulf %1762, %1762 : vector<8x128xf32>
      %1766 = arith.mulf %1763, %1763 : vector<8x128xf32>
      %1767 = arith.addf %1765, %1766 : vector<8x128xf32>
      %1768 = arith.mulf %1764, %1764 : vector<8x128xf32>
      %1769 = arith.addf %1767, %1768 : vector<8x128xf32>
      %cst_409 = arith.constant 9.99999996E-13 : f32
      %1770 = vector.broadcast %cst_409 : f32 to vector<8x128xf32>
      %1771 = arith.addf %1769, %1770 : vector<8x128xf32>
      %1772 = math.rsqrt %1771 : vector<8x128xf32>
      %1773 = arith.mulf %1762, %1772 : vector<8x128xf32>
      %1774 = arith.mulf %1763, %1772 : vector<8x128xf32>
      %1775 = arith.mulf %1764, %1772 : vector<8x128xf32>
      %1776 = arith.mulf %1758, %1773 : vector<8x128xf32>
      %1777 = arith.mulf %1759, %1774 : vector<8x128xf32>
      %1778 = arith.addf %1776, %1777 : vector<8x128xf32>
      %1779 = arith.mulf %1761, %1775 : vector<8x128xf32>
      %1780 = arith.addf %1778, %1779 : vector<8x128xf32>
      %cst_410 = arith.constant 1.000000e-03 : f32
      %1781 = vector.broadcast %cst_410 : f32 to vector<8x128xf32>
      %1782 = arith.maximumf %1780, %1781 : vector<8x128xf32>
      %cst_411 = arith.constant 1.000000e+00 : f32
      %1783 = vector.broadcast %cst_411 : f32 to vector<8x128xf32>
      %1784 = arith.subf %1783, %1782 : vector<8x128xf32>
      %1785 = arith.mulf %1784, %1784 : vector<8x128xf32>
      %1786 = arith.mulf %1784, %1784 : vector<8x128xf32>
      %1787 = arith.mulf %1785, %1786 : vector<8x128xf32>
      %1788 = arith.mulf %1787, %1784 : vector<8x128xf32>
      %1789 = arith.mulf %1740, %1740 : vector<8x128xf32>
      %1790 = vector.broadcast %196 : f32 to vector<8x128xf32>
      %1791 = arith.mulf %1790, %1789 : vector<8x128xf32>
      %1792 = vector.broadcast %200 : f32 to vector<8x128xf32>
      %1793 = arith.mulf %1792, %1789 : vector<8x128xf32>
      %1794 = vector.broadcast %204 : f32 to vector<8x128xf32>
      %1795 = arith.mulf %1794, %1789 : vector<8x128xf32>
      %1796 = arith.mulf %407, %1741 : vector<8x128xf32>
      %1797 = arith.mulf %408, %1742 : vector<8x128xf32>
      %1798 = arith.addf %1796, %1797 : vector<8x128xf32>
      %1799 = arith.mulf %406, %1744 : vector<8x128xf32>
      %1800 = arith.addf %1798, %1799 : vector<8x128xf32>
      %cst_412 = arith.constant 1.000000e-03 : f32
      %1801 = vector.broadcast %cst_412 : f32 to vector<8x128xf32>
      %1802 = arith.maximumf %1800, %1801 : vector<8x128xf32>
      %1803 = arith.mulf %407, %1758 : vector<8x128xf32>
      %1804 = arith.mulf %408, %1759 : vector<8x128xf32>
      %1805 = arith.addf %1803, %1804 : vector<8x128xf32>
      %1806 = arith.mulf %406, %1761 : vector<8x128xf32>
      %1807 = arith.addf %1805, %1806 : vector<8x128xf32>
      %cst_413 = arith.constant 1.000000e-03 : f32
      %1808 = vector.broadcast %cst_413 : f32 to vector<8x128xf32>
      %1809 = arith.maximumf %1807, %1808 : vector<8x128xf32>
      %1810 = arith.mulf %407, %1773 : vector<8x128xf32>
      %1811 = arith.mulf %408, %1774 : vector<8x128xf32>
      %1812 = arith.addf %1810, %1811 : vector<8x128xf32>
      %1813 = arith.mulf %406, %1775 : vector<8x128xf32>
      %1814 = arith.addf %1812, %1813 : vector<8x128xf32>
      %cst_414 = arith.constant 1.000000e-03 : f32
      %1815 = vector.broadcast %cst_414 : f32 to vector<8x128xf32>
      %1816 = arith.maximumf %1814, %1815 : vector<8x128xf32>
      %1817 = arith.mulf %1816, %1816 : vector<8x128xf32>
      %cst_415 = arith.constant 1.000000e+00 : f32
      %1818 = vector.broadcast %cst_415 : f32 to vector<8x128xf32>
      %1819 = arith.subf %569, %1818 : vector<8x128xf32>
      %1820 = arith.mulf %1817, %1819 : vector<8x128xf32>
      %cst_416 = arith.constant 1.000000e+00 : f32
      %1821 = vector.broadcast %cst_416 : f32 to vector<8x128xf32>
      %1822 = arith.addf %1820, %1821 : vector<8x128xf32>
      %1823 = arith.mulf %1802, %573 : vector<8x128xf32>
      %1824 = arith.addf %1823, %571 : vector<8x128xf32>
      %1825 = arith.mulf %1809, %573 : vector<8x128xf32>
      %1826 = arith.addf %1825, %571 : vector<8x128xf32>
      %cst_417 = arith.constant 2.500000e-01 : f32
      %1827 = vector.broadcast %cst_417 : f32 to vector<8x128xf32>
      %1828 = arith.mulf %1827, %569 : vector<8x128xf32>
      %cst_418 = arith.constant 3.14159274 : f32
      %1829 = vector.broadcast %cst_418 : f32 to vector<8x128xf32>
      %1830 = arith.mulf %1829, %1822 : vector<8x128xf32>
      %1831 = arith.mulf %1830, %1822 : vector<8x128xf32>
      %1832 = arith.mulf %1831, %1824 : vector<8x128xf32>
      %1833 = arith.mulf %1832, %1826 : vector<8x128xf32>
      %1834 = arith.divf %1828, %1833 : vector<8x128xf32>
      %1835 = arith.mulf %575, %1788 : vector<8x128xf32>
      %1836 = arith.addf %443, %1835 : vector<8x128xf32>
      %1837 = arith.mulf %1834, %1836 : vector<8x128xf32>
      %1838 = arith.addf %582, %1837 : vector<8x128xf32>
      %1839 = arith.mulf %1791, %1802 : vector<8x128xf32>
      %1840 = arith.mulf %1838, %1839 : vector<8x128xf32>
      %cst_419 = arith.constant 0.000000e+00 : f32
      %1841 = vector.broadcast %cst_419 : f32 to vector<8x128xf32>
      %1842 = arith.maximumf %1840, %1841 : vector<8x128xf32>
      %1843 = arith.mulf %577, %1788 : vector<8x128xf32>
      %1844 = arith.addf %450, %1843 : vector<8x128xf32>
      %1845 = arith.mulf %1834, %1844 : vector<8x128xf32>
      %1846 = arith.addf %585, %1845 : vector<8x128xf32>
      %1847 = arith.mulf %1793, %1802 : vector<8x128xf32>
      %1848 = arith.mulf %1846, %1847 : vector<8x128xf32>
      %cst_420 = arith.constant 0.000000e+00 : f32
      %1849 = vector.broadcast %cst_420 : f32 to vector<8x128xf32>
      %1850 = arith.maximumf %1848, %1849 : vector<8x128xf32>
      %1851 = arith.mulf %579, %1788 : vector<8x128xf32>
      %1852 = arith.addf %457, %1851 : vector<8x128xf32>
      %1853 = arith.mulf %1834, %1852 : vector<8x128xf32>
      %1854 = arith.addf %588, %1853 : vector<8x128xf32>
      %1855 = arith.mulf %1795, %1802 : vector<8x128xf32>
      %1856 = arith.mulf %1854, %1855 : vector<8x128xf32>
      %cst_421 = arith.constant 0.000000e+00 : f32
      %1857 = vector.broadcast %cst_421 : f32 to vector<8x128xf32>
      %1858 = arith.maximumf %1856, %1857 : vector<8x128xf32>
      %1859 = arith.mulf %597, %1741 : vector<8x128xf32>
      %1860 = arith.mulf %598, %1742 : vector<8x128xf32>
      %1861 = arith.addf %1859, %1860 : vector<8x128xf32>
      %1862 = arith.mulf %599, %1744 : vector<8x128xf32>
      %1863 = arith.addf %1861, %1862 : vector<8x128xf32>
      %cst_422 = arith.constant 1.000000e-03 : f32
      %1864 = vector.broadcast %cst_422 : f32 to vector<8x128xf32>
      %1865 = arith.maximumf %1863, %1864 : vector<8x128xf32>
      %1866 = arith.mulf %597, %1758 : vector<8x128xf32>
      %1867 = arith.mulf %598, %1759 : vector<8x128xf32>
      %1868 = arith.addf %1866, %1867 : vector<8x128xf32>
      %1869 = arith.mulf %599, %1761 : vector<8x128xf32>
      %1870 = arith.addf %1868, %1869 : vector<8x128xf32>
      %cst_423 = arith.constant 1.000000e-03 : f32
      %1871 = vector.broadcast %cst_423 : f32 to vector<8x128xf32>
      %1872 = arith.maximumf %1870, %1871 : vector<8x128xf32>
      %1873 = arith.mulf %597, %1773 : vector<8x128xf32>
      %1874 = arith.mulf %598, %1774 : vector<8x128xf32>
      %1875 = arith.addf %1873, %1874 : vector<8x128xf32>
      %1876 = arith.mulf %599, %1775 : vector<8x128xf32>
      %1877 = arith.addf %1875, %1876 : vector<8x128xf32>
      %cst_424 = arith.constant 1.000000e-03 : f32
      %1878 = vector.broadcast %cst_424 : f32 to vector<8x128xf32>
      %1879 = arith.maximumf %1877, %1878 : vector<8x128xf32>
      %1880 = arith.mulf %1879, %1879 : vector<8x128xf32>
      %cst_425 = arith.constant 1.000000e+00 : f32
      %1881 = vector.broadcast %cst_425 : f32 to vector<8x128xf32>
      %1882 = arith.subf %603, %1881 : vector<8x128xf32>
      %1883 = arith.mulf %1880, %1882 : vector<8x128xf32>
      %cst_426 = arith.constant 1.000000e+00 : f32
      %1884 = vector.broadcast %cst_426 : f32 to vector<8x128xf32>
      %1885 = arith.addf %1883, %1884 : vector<8x128xf32>
      %1886 = arith.mulf %1865, %607 : vector<8x128xf32>
      %1887 = arith.addf %1886, %605 : vector<8x128xf32>
      %1888 = arith.mulf %1872, %607 : vector<8x128xf32>
      %1889 = arith.addf %1888, %605 : vector<8x128xf32>
      %cst_427 = arith.constant 2.500000e-01 : f32
      %1890 = vector.broadcast %cst_427 : f32 to vector<8x128xf32>
      %1891 = arith.mulf %1890, %603 : vector<8x128xf32>
      %cst_428 = arith.constant 3.14159274 : f32
      %1892 = vector.broadcast %cst_428 : f32 to vector<8x128xf32>
      %1893 = arith.mulf %1892, %1885 : vector<8x128xf32>
      %1894 = arith.mulf %1893, %1885 : vector<8x128xf32>
      %1895 = arith.mulf %1894, %1887 : vector<8x128xf32>
      %1896 = arith.mulf %1895, %1889 : vector<8x128xf32>
      %1897 = arith.divf %1891, %1896 : vector<8x128xf32>
      %1898 = arith.mulf %609, %1788 : vector<8x128xf32>
      %1899 = arith.addf %487, %1898 : vector<8x128xf32>
      %1900 = arith.mulf %1897, %1899 : vector<8x128xf32>
      %1901 = arith.addf %616, %1900 : vector<8x128xf32>
      %1902 = arith.mulf %1791, %1865 : vector<8x128xf32>
      %1903 = arith.mulf %1901, %1902 : vector<8x128xf32>
      %cst_429 = arith.constant 0.000000e+00 : f32
      %1904 = vector.broadcast %cst_429 : f32 to vector<8x128xf32>
      %1905 = arith.maximumf %1903, %1904 : vector<8x128xf32>
      %1906 = arith.mulf %611, %1788 : vector<8x128xf32>
      %1907 = arith.addf %490, %1906 : vector<8x128xf32>
      %1908 = arith.mulf %1897, %1907 : vector<8x128xf32>
      %1909 = arith.addf %619, %1908 : vector<8x128xf32>
      %1910 = arith.mulf %1793, %1865 : vector<8x128xf32>
      %1911 = arith.mulf %1909, %1910 : vector<8x128xf32>
      %cst_430 = arith.constant 0.000000e+00 : f32
      %1912 = vector.broadcast %cst_430 : f32 to vector<8x128xf32>
      %1913 = arith.maximumf %1911, %1912 : vector<8x128xf32>
      %1914 = arith.mulf %613, %1788 : vector<8x128xf32>
      %1915 = arith.addf %493, %1914 : vector<8x128xf32>
      %1916 = arith.mulf %1897, %1915 : vector<8x128xf32>
      %1917 = arith.addf %622, %1916 : vector<8x128xf32>
      %1918 = arith.mulf %1795, %1865 : vector<8x128xf32>
      %1919 = arith.mulf %1917, %1918 : vector<8x128xf32>
      %cst_431 = arith.constant 0.000000e+00 : f32
      %1920 = vector.broadcast %cst_431 : f32 to vector<8x128xf32>
      %1921 = arith.maximumf %1919, %1920 : vector<8x128xf32>
      %cst_432 = arith.constant 1.000000e-01 : f32
      %1922 = vector.broadcast %cst_432 : f32 to vector<8x128xf32>
      %1923 = arith.addf %1842, %1922 : vector<8x128xf32>
      %1924 = math.log %1923 : vector<8x128xf32>
      %cst_433 = arith.constant 1.000000e-01 : f32
      %1925 = vector.broadcast %cst_433 : f32 to vector<8x128xf32>
      %1926 = arith.addf %1905, %1925 : vector<8x128xf32>
      %1927 = math.log %1926 : vector<8x128xf32>
      %1928 = arith.subf %1924, %1927 : vector<8x128xf32>
      %1929 = math.absf %1928 : vector<8x128xf32>
      %1930 = arith.addf %1727, %1929 : vector<8x128xf32>
      %cst_434 = arith.constant 1.000000e-01 : f32
      %1931 = vector.broadcast %cst_434 : f32 to vector<8x128xf32>
      %1932 = arith.addf %1850, %1931 : vector<8x128xf32>
      %1933 = math.log %1932 : vector<8x128xf32>
      %cst_435 = arith.constant 1.000000e-01 : f32
      %1934 = vector.broadcast %cst_435 : f32 to vector<8x128xf32>
      %1935 = arith.addf %1913, %1934 : vector<8x128xf32>
      %1936 = math.log %1935 : vector<8x128xf32>
      %1937 = arith.subf %1933, %1936 : vector<8x128xf32>
      %1938 = math.absf %1937 : vector<8x128xf32>
      %1939 = arith.addf %1930, %1938 : vector<8x128xf32>
      %cst_436 = arith.constant 1.000000e-01 : f32
      %1940 = vector.broadcast %cst_436 : f32 to vector<8x128xf32>
      %1941 = arith.addf %1858, %1940 : vector<8x128xf32>
      %1942 = math.log %1941 : vector<8x128xf32>
      %cst_437 = arith.constant 1.000000e-01 : f32
      %1943 = vector.broadcast %cst_437 : f32 to vector<8x128xf32>
      %1944 = arith.addf %1921, %1943 : vector<8x128xf32>
      %1945 = math.log %1944 : vector<8x128xf32>
      %1946 = arith.subf %1942, %1945 : vector<8x128xf32>
      %1947 = math.absf %1946 : vector<8x128xf32>
      %1948 = arith.addf %1939, %1947 : vector<8x128xf32>
      %1949 = vector.broadcast %218 : f32 to vector<8x128xf32>
      %1950 = arith.subf %1949, %394 : vector<8x128xf32>
      %1951 = vector.broadcast %222 : f32 to vector<8x128xf32>
      %1952 = arith.subf %1951, %387 : vector<8x128xf32>
      %1953 = arith.mulf %1950, %1950 : vector<8x128xf32>
      %1954 = arith.mulf %1952, %1952 : vector<8x128xf32>
      %1955 = arith.addf %1953, %1954 : vector<8x128xf32>
      %1956 = arith.mulf %226, %226 : f32
      %1957 = vector.broadcast %1956 : f32 to vector<8x128xf32>
      %1958 = arith.addf %1955, %1957 : vector<8x128xf32>
      %cst_438 = arith.constant 9.99999996E-13 : f32
      %1959 = vector.broadcast %cst_438 : f32 to vector<8x128xf32>
      %1960 = arith.addf %1958, %1959 : vector<8x128xf32>
      %1961 = math.rsqrt %1960 : vector<8x128xf32>
      %1962 = arith.mulf %1950, %1961 : vector<8x128xf32>
      %1963 = arith.mulf %1952, %1961 : vector<8x128xf32>
      %1964 = vector.broadcast %226 : f32 to vector<8x128xf32>
      %1965 = arith.mulf %1964, %1961 : vector<8x128xf32>
      %1966 = vector.broadcast %208 : f32 to vector<8x128xf32>
      %1967 = arith.subf %1966, %394 : vector<8x128xf32>
      %1968 = vector.broadcast %211 : f32 to vector<8x128xf32>
      %1969 = arith.subf %1968, %387 : vector<8x128xf32>
      %1970 = arith.mulf %1967, %1967 : vector<8x128xf32>
      %1971 = arith.mulf %1969, %1969 : vector<8x128xf32>
      %1972 = arith.addf %1970, %1971 : vector<8x128xf32>
      %1973 = arith.mulf %214, %214 : f32
      %1974 = vector.broadcast %1973 : f32 to vector<8x128xf32>
      %1975 = arith.addf %1972, %1974 : vector<8x128xf32>
      %cst_439 = arith.constant 9.99999996E-13 : f32
      %1976 = vector.broadcast %cst_439 : f32 to vector<8x128xf32>
      %1977 = arith.addf %1975, %1976 : vector<8x128xf32>
      %1978 = math.rsqrt %1977 : vector<8x128xf32>
      %1979 = arith.mulf %1967, %1978 : vector<8x128xf32>
      %1980 = arith.mulf %1969, %1978 : vector<8x128xf32>
      %1981 = vector.broadcast %214 : f32 to vector<8x128xf32>
      %1982 = arith.mulf %1981, %1978 : vector<8x128xf32>
      %1983 = arith.addf %1962, %1979 : vector<8x128xf32>
      %1984 = arith.addf %1963, %1980 : vector<8x128xf32>
      %1985 = arith.addf %1965, %1982 : vector<8x128xf32>
      %1986 = arith.mulf %1983, %1983 : vector<8x128xf32>
      %1987 = arith.mulf %1984, %1984 : vector<8x128xf32>
      %1988 = arith.addf %1986, %1987 : vector<8x128xf32>
      %1989 = arith.mulf %1985, %1985 : vector<8x128xf32>
      %1990 = arith.addf %1988, %1989 : vector<8x128xf32>
      %cst_440 = arith.constant 9.99999996E-13 : f32
      %1991 = vector.broadcast %cst_440 : f32 to vector<8x128xf32>
      %1992 = arith.addf %1990, %1991 : vector<8x128xf32>
      %1993 = math.rsqrt %1992 : vector<8x128xf32>
      %1994 = arith.mulf %1983, %1993 : vector<8x128xf32>
      %1995 = arith.mulf %1984, %1993 : vector<8x128xf32>
      %1996 = arith.mulf %1985, %1993 : vector<8x128xf32>
      %1997 = arith.mulf %1979, %1994 : vector<8x128xf32>
      %1998 = arith.mulf %1980, %1995 : vector<8x128xf32>
      %1999 = arith.addf %1997, %1998 : vector<8x128xf32>
      %2000 = arith.mulf %1982, %1996 : vector<8x128xf32>
      %2001 = arith.addf %1999, %2000 : vector<8x128xf32>
      %cst_441 = arith.constant 1.000000e-03 : f32
      %2002 = vector.broadcast %cst_441 : f32 to vector<8x128xf32>
      %2003 = arith.maximumf %2001, %2002 : vector<8x128xf32>
      %cst_442 = arith.constant 1.000000e+00 : f32
      %2004 = vector.broadcast %cst_442 : f32 to vector<8x128xf32>
      %2005 = arith.subf %2004, %2003 : vector<8x128xf32>
      %2006 = arith.mulf %2005, %2005 : vector<8x128xf32>
      %2007 = arith.mulf %2005, %2005 : vector<8x128xf32>
      %2008 = arith.mulf %2006, %2007 : vector<8x128xf32>
      %2009 = arith.mulf %2008, %2005 : vector<8x128xf32>
      %2010 = arith.mulf %1961, %1961 : vector<8x128xf32>
      %2011 = vector.broadcast %230 : f32 to vector<8x128xf32>
      %2012 = arith.mulf %2011, %2010 : vector<8x128xf32>
      %2013 = vector.broadcast %234 : f32 to vector<8x128xf32>
      %2014 = arith.mulf %2013, %2010 : vector<8x128xf32>
      %2015 = vector.broadcast %238 : f32 to vector<8x128xf32>
      %2016 = arith.mulf %2015, %2010 : vector<8x128xf32>
      %2017 = arith.mulf %407, %1962 : vector<8x128xf32>
      %2018 = arith.mulf %408, %1963 : vector<8x128xf32>
      %2019 = arith.addf %2017, %2018 : vector<8x128xf32>
      %2020 = arith.mulf %406, %1965 : vector<8x128xf32>
      %2021 = arith.addf %2019, %2020 : vector<8x128xf32>
      %cst_443 = arith.constant 1.000000e-03 : f32
      %2022 = vector.broadcast %cst_443 : f32 to vector<8x128xf32>
      %2023 = arith.maximumf %2021, %2022 : vector<8x128xf32>
      %2024 = arith.mulf %407, %1979 : vector<8x128xf32>
      %2025 = arith.mulf %408, %1980 : vector<8x128xf32>
      %2026 = arith.addf %2024, %2025 : vector<8x128xf32>
      %2027 = arith.mulf %406, %1982 : vector<8x128xf32>
      %2028 = arith.addf %2026, %2027 : vector<8x128xf32>
      %cst_444 = arith.constant 1.000000e-03 : f32
      %2029 = vector.broadcast %cst_444 : f32 to vector<8x128xf32>
      %2030 = arith.maximumf %2028, %2029 : vector<8x128xf32>
      %2031 = arith.mulf %407, %1994 : vector<8x128xf32>
      %2032 = arith.mulf %408, %1995 : vector<8x128xf32>
      %2033 = arith.addf %2031, %2032 : vector<8x128xf32>
      %2034 = arith.mulf %406, %1996 : vector<8x128xf32>
      %2035 = arith.addf %2033, %2034 : vector<8x128xf32>
      %cst_445 = arith.constant 1.000000e-03 : f32
      %2036 = vector.broadcast %cst_445 : f32 to vector<8x128xf32>
      %2037 = arith.maximumf %2035, %2036 : vector<8x128xf32>
      %2038 = arith.mulf %2037, %2037 : vector<8x128xf32>
      %cst_446 = arith.constant 1.000000e+00 : f32
      %2039 = vector.broadcast %cst_446 : f32 to vector<8x128xf32>
      %2040 = arith.subf %569, %2039 : vector<8x128xf32>
      %2041 = arith.mulf %2038, %2040 : vector<8x128xf32>
      %cst_447 = arith.constant 1.000000e+00 : f32
      %2042 = vector.broadcast %cst_447 : f32 to vector<8x128xf32>
      %2043 = arith.addf %2041, %2042 : vector<8x128xf32>
      %2044 = arith.mulf %2023, %573 : vector<8x128xf32>
      %2045 = arith.addf %2044, %571 : vector<8x128xf32>
      %2046 = arith.mulf %2030, %573 : vector<8x128xf32>
      %2047 = arith.addf %2046, %571 : vector<8x128xf32>
      %cst_448 = arith.constant 2.500000e-01 : f32
      %2048 = vector.broadcast %cst_448 : f32 to vector<8x128xf32>
      %2049 = arith.mulf %2048, %569 : vector<8x128xf32>
      %cst_449 = arith.constant 3.14159274 : f32
      %2050 = vector.broadcast %cst_449 : f32 to vector<8x128xf32>
      %2051 = arith.mulf %2050, %2043 : vector<8x128xf32>
      %2052 = arith.mulf %2051, %2043 : vector<8x128xf32>
      %2053 = arith.mulf %2052, %2045 : vector<8x128xf32>
      %2054 = arith.mulf %2053, %2047 : vector<8x128xf32>
      %2055 = arith.divf %2049, %2054 : vector<8x128xf32>
      %2056 = arith.mulf %575, %2009 : vector<8x128xf32>
      %2057 = arith.addf %443, %2056 : vector<8x128xf32>
      %2058 = arith.mulf %2055, %2057 : vector<8x128xf32>
      %2059 = arith.addf %582, %2058 : vector<8x128xf32>
      %2060 = arith.mulf %2012, %2023 : vector<8x128xf32>
      %2061 = arith.mulf %2059, %2060 : vector<8x128xf32>
      %cst_450 = arith.constant 0.000000e+00 : f32
      %2062 = vector.broadcast %cst_450 : f32 to vector<8x128xf32>
      %2063 = arith.maximumf %2061, %2062 : vector<8x128xf32>
      %2064 = arith.mulf %577, %2009 : vector<8x128xf32>
      %2065 = arith.addf %450, %2064 : vector<8x128xf32>
      %2066 = arith.mulf %2055, %2065 : vector<8x128xf32>
      %2067 = arith.addf %585, %2066 : vector<8x128xf32>
      %2068 = arith.mulf %2014, %2023 : vector<8x128xf32>
      %2069 = arith.mulf %2067, %2068 : vector<8x128xf32>
      %cst_451 = arith.constant 0.000000e+00 : f32
      %2070 = vector.broadcast %cst_451 : f32 to vector<8x128xf32>
      %2071 = arith.maximumf %2069, %2070 : vector<8x128xf32>
      %2072 = arith.mulf %579, %2009 : vector<8x128xf32>
      %2073 = arith.addf %457, %2072 : vector<8x128xf32>
      %2074 = arith.mulf %2055, %2073 : vector<8x128xf32>
      %2075 = arith.addf %588, %2074 : vector<8x128xf32>
      %2076 = arith.mulf %2016, %2023 : vector<8x128xf32>
      %2077 = arith.mulf %2075, %2076 : vector<8x128xf32>
      %cst_452 = arith.constant 0.000000e+00 : f32
      %2078 = vector.broadcast %cst_452 : f32 to vector<8x128xf32>
      %2079 = arith.maximumf %2077, %2078 : vector<8x128xf32>
      %2080 = arith.mulf %597, %1962 : vector<8x128xf32>
      %2081 = arith.mulf %598, %1963 : vector<8x128xf32>
      %2082 = arith.addf %2080, %2081 : vector<8x128xf32>
      %2083 = arith.mulf %599, %1965 : vector<8x128xf32>
      %2084 = arith.addf %2082, %2083 : vector<8x128xf32>
      %cst_453 = arith.constant 1.000000e-03 : f32
      %2085 = vector.broadcast %cst_453 : f32 to vector<8x128xf32>
      %2086 = arith.maximumf %2084, %2085 : vector<8x128xf32>
      %2087 = arith.mulf %597, %1979 : vector<8x128xf32>
      %2088 = arith.mulf %598, %1980 : vector<8x128xf32>
      %2089 = arith.addf %2087, %2088 : vector<8x128xf32>
      %2090 = arith.mulf %599, %1982 : vector<8x128xf32>
      %2091 = arith.addf %2089, %2090 : vector<8x128xf32>
      %cst_454 = arith.constant 1.000000e-03 : f32
      %2092 = vector.broadcast %cst_454 : f32 to vector<8x128xf32>
      %2093 = arith.maximumf %2091, %2092 : vector<8x128xf32>
      %2094 = arith.mulf %597, %1994 : vector<8x128xf32>
      %2095 = arith.mulf %598, %1995 : vector<8x128xf32>
      %2096 = arith.addf %2094, %2095 : vector<8x128xf32>
      %2097 = arith.mulf %599, %1996 : vector<8x128xf32>
      %2098 = arith.addf %2096, %2097 : vector<8x128xf32>
      %cst_455 = arith.constant 1.000000e-03 : f32
      %2099 = vector.broadcast %cst_455 : f32 to vector<8x128xf32>
      %2100 = arith.maximumf %2098, %2099 : vector<8x128xf32>
      %2101 = arith.mulf %2100, %2100 : vector<8x128xf32>
      %cst_456 = arith.constant 1.000000e+00 : f32
      %2102 = vector.broadcast %cst_456 : f32 to vector<8x128xf32>
      %2103 = arith.subf %603, %2102 : vector<8x128xf32>
      %2104 = arith.mulf %2101, %2103 : vector<8x128xf32>
      %cst_457 = arith.constant 1.000000e+00 : f32
      %2105 = vector.broadcast %cst_457 : f32 to vector<8x128xf32>
      %2106 = arith.addf %2104, %2105 : vector<8x128xf32>
      %2107 = arith.mulf %2086, %607 : vector<8x128xf32>
      %2108 = arith.addf %2107, %605 : vector<8x128xf32>
      %2109 = arith.mulf %2093, %607 : vector<8x128xf32>
      %2110 = arith.addf %2109, %605 : vector<8x128xf32>
      %cst_458 = arith.constant 2.500000e-01 : f32
      %2111 = vector.broadcast %cst_458 : f32 to vector<8x128xf32>
      %2112 = arith.mulf %2111, %603 : vector<8x128xf32>
      %cst_459 = arith.constant 3.14159274 : f32
      %2113 = vector.broadcast %cst_459 : f32 to vector<8x128xf32>
      %2114 = arith.mulf %2113, %2106 : vector<8x128xf32>
      %2115 = arith.mulf %2114, %2106 : vector<8x128xf32>
      %2116 = arith.mulf %2115, %2108 : vector<8x128xf32>
      %2117 = arith.mulf %2116, %2110 : vector<8x128xf32>
      %2118 = arith.divf %2112, %2117 : vector<8x128xf32>
      %2119 = arith.mulf %609, %2009 : vector<8x128xf32>
      %2120 = arith.addf %487, %2119 : vector<8x128xf32>
      %2121 = arith.mulf %2118, %2120 : vector<8x128xf32>
      %2122 = arith.addf %616, %2121 : vector<8x128xf32>
      %2123 = arith.mulf %2012, %2086 : vector<8x128xf32>
      %2124 = arith.mulf %2122, %2123 : vector<8x128xf32>
      %cst_460 = arith.constant 0.000000e+00 : f32
      %2125 = vector.broadcast %cst_460 : f32 to vector<8x128xf32>
      %2126 = arith.maximumf %2124, %2125 : vector<8x128xf32>
      %2127 = arith.mulf %611, %2009 : vector<8x128xf32>
      %2128 = arith.addf %490, %2127 : vector<8x128xf32>
      %2129 = arith.mulf %2118, %2128 : vector<8x128xf32>
      %2130 = arith.addf %619, %2129 : vector<8x128xf32>
      %2131 = arith.mulf %2014, %2086 : vector<8x128xf32>
      %2132 = arith.mulf %2130, %2131 : vector<8x128xf32>
      %cst_461 = arith.constant 0.000000e+00 : f32
      %2133 = vector.broadcast %cst_461 : f32 to vector<8x128xf32>
      %2134 = arith.maximumf %2132, %2133 : vector<8x128xf32>
      %2135 = arith.mulf %613, %2009 : vector<8x128xf32>
      %2136 = arith.addf %493, %2135 : vector<8x128xf32>
      %2137 = arith.mulf %2118, %2136 : vector<8x128xf32>
      %2138 = arith.addf %622, %2137 : vector<8x128xf32>
      %2139 = arith.mulf %2016, %2086 : vector<8x128xf32>
      %2140 = arith.mulf %2138, %2139 : vector<8x128xf32>
      %cst_462 = arith.constant 0.000000e+00 : f32
      %2141 = vector.broadcast %cst_462 : f32 to vector<8x128xf32>
      %2142 = arith.maximumf %2140, %2141 : vector<8x128xf32>
      %cst_463 = arith.constant 1.000000e-01 : f32
      %2143 = vector.broadcast %cst_463 : f32 to vector<8x128xf32>
      %2144 = arith.addf %2063, %2143 : vector<8x128xf32>
      %2145 = math.log %2144 : vector<8x128xf32>
      %cst_464 = arith.constant 1.000000e-01 : f32
      %2146 = vector.broadcast %cst_464 : f32 to vector<8x128xf32>
      %2147 = arith.addf %2126, %2146 : vector<8x128xf32>
      %2148 = math.log %2147 : vector<8x128xf32>
      %2149 = arith.subf %2145, %2148 : vector<8x128xf32>
      %2150 = math.absf %2149 : vector<8x128xf32>
      %2151 = arith.addf %1948, %2150 : vector<8x128xf32>
      %cst_465 = arith.constant 1.000000e-01 : f32
      %2152 = vector.broadcast %cst_465 : f32 to vector<8x128xf32>
      %2153 = arith.addf %2071, %2152 : vector<8x128xf32>
      %2154 = math.log %2153 : vector<8x128xf32>
      %cst_466 = arith.constant 1.000000e-01 : f32
      %2155 = vector.broadcast %cst_466 : f32 to vector<8x128xf32>
      %2156 = arith.addf %2134, %2155 : vector<8x128xf32>
      %2157 = math.log %2156 : vector<8x128xf32>
      %2158 = arith.subf %2154, %2157 : vector<8x128xf32>
      %2159 = math.absf %2158 : vector<8x128xf32>
      %2160 = arith.addf %2151, %2159 : vector<8x128xf32>
      %cst_467 = arith.constant 1.000000e-01 : f32
      %2161 = vector.broadcast %cst_467 : f32 to vector<8x128xf32>
      %2162 = arith.addf %2079, %2161 : vector<8x128xf32>
      %2163 = math.log %2162 : vector<8x128xf32>
      %cst_468 = arith.constant 1.000000e-01 : f32
      %2164 = vector.broadcast %cst_468 : f32 to vector<8x128xf32>
      %2165 = arith.addf %2142, %2164 : vector<8x128xf32>
      %2166 = math.log %2165 : vector<8x128xf32>
      %2167 = arith.subf %2163, %2166 : vector<8x128xf32>
      %2168 = math.absf %2167 : vector<8x128xf32>
      %2169 = arith.addf %2160, %2168 : vector<8x128xf32>
      %2170 = vector.broadcast %252 : f32 to vector<8x128xf32>
      %2171 = arith.subf %2170, %394 : vector<8x128xf32>
      %2172 = vector.broadcast %256 : f32 to vector<8x128xf32>
      %2173 = arith.subf %2172, %387 : vector<8x128xf32>
      %2174 = arith.mulf %2171, %2171 : vector<8x128xf32>
      %2175 = arith.mulf %2173, %2173 : vector<8x128xf32>
      %2176 = arith.addf %2174, %2175 : vector<8x128xf32>
      %2177 = arith.mulf %260, %260 : f32
      %2178 = vector.broadcast %2177 : f32 to vector<8x128xf32>
      %2179 = arith.addf %2176, %2178 : vector<8x128xf32>
      %cst_469 = arith.constant 9.99999996E-13 : f32
      %2180 = vector.broadcast %cst_469 : f32 to vector<8x128xf32>
      %2181 = arith.addf %2179, %2180 : vector<8x128xf32>
      %2182 = math.rsqrt %2181 : vector<8x128xf32>
      %2183 = arith.mulf %2171, %2182 : vector<8x128xf32>
      %2184 = arith.mulf %2173, %2182 : vector<8x128xf32>
      %2185 = vector.broadcast %260 : f32 to vector<8x128xf32>
      %2186 = arith.mulf %2185, %2182 : vector<8x128xf32>
      %2187 = vector.broadcast %242 : f32 to vector<8x128xf32>
      %2188 = arith.subf %2187, %394 : vector<8x128xf32>
      %2189 = vector.broadcast %245 : f32 to vector<8x128xf32>
      %2190 = arith.subf %2189, %387 : vector<8x128xf32>
      %2191 = arith.mulf %2188, %2188 : vector<8x128xf32>
      %2192 = arith.mulf %2190, %2190 : vector<8x128xf32>
      %2193 = arith.addf %2191, %2192 : vector<8x128xf32>
      %2194 = arith.mulf %248, %248 : f32
      %2195 = vector.broadcast %2194 : f32 to vector<8x128xf32>
      %2196 = arith.addf %2193, %2195 : vector<8x128xf32>
      %cst_470 = arith.constant 9.99999996E-13 : f32
      %2197 = vector.broadcast %cst_470 : f32 to vector<8x128xf32>
      %2198 = arith.addf %2196, %2197 : vector<8x128xf32>
      %2199 = math.rsqrt %2198 : vector<8x128xf32>
      %2200 = arith.mulf %2188, %2199 : vector<8x128xf32>
      %2201 = arith.mulf %2190, %2199 : vector<8x128xf32>
      %2202 = vector.broadcast %248 : f32 to vector<8x128xf32>
      %2203 = arith.mulf %2202, %2199 : vector<8x128xf32>
      %2204 = arith.addf %2183, %2200 : vector<8x128xf32>
      %2205 = arith.addf %2184, %2201 : vector<8x128xf32>
      %2206 = arith.addf %2186, %2203 : vector<8x128xf32>
      %2207 = arith.mulf %2204, %2204 : vector<8x128xf32>
      %2208 = arith.mulf %2205, %2205 : vector<8x128xf32>
      %2209 = arith.addf %2207, %2208 : vector<8x128xf32>
      %2210 = arith.mulf %2206, %2206 : vector<8x128xf32>
      %2211 = arith.addf %2209, %2210 : vector<8x128xf32>
      %cst_471 = arith.constant 9.99999996E-13 : f32
      %2212 = vector.broadcast %cst_471 : f32 to vector<8x128xf32>
      %2213 = arith.addf %2211, %2212 : vector<8x128xf32>
      %2214 = math.rsqrt %2213 : vector<8x128xf32>
      %2215 = arith.mulf %2204, %2214 : vector<8x128xf32>
      %2216 = arith.mulf %2205, %2214 : vector<8x128xf32>
      %2217 = arith.mulf %2206, %2214 : vector<8x128xf32>
      %2218 = arith.mulf %2200, %2215 : vector<8x128xf32>
      %2219 = arith.mulf %2201, %2216 : vector<8x128xf32>
      %2220 = arith.addf %2218, %2219 : vector<8x128xf32>
      %2221 = arith.mulf %2203, %2217 : vector<8x128xf32>
      %2222 = arith.addf %2220, %2221 : vector<8x128xf32>
      %cst_472 = arith.constant 1.000000e-03 : f32
      %2223 = vector.broadcast %cst_472 : f32 to vector<8x128xf32>
      %2224 = arith.maximumf %2222, %2223 : vector<8x128xf32>
      %cst_473 = arith.constant 1.000000e+00 : f32
      %2225 = vector.broadcast %cst_473 : f32 to vector<8x128xf32>
      %2226 = arith.subf %2225, %2224 : vector<8x128xf32>
      %2227 = arith.mulf %2226, %2226 : vector<8x128xf32>
      %2228 = arith.mulf %2226, %2226 : vector<8x128xf32>
      %2229 = arith.mulf %2227, %2228 : vector<8x128xf32>
      %2230 = arith.mulf %2229, %2226 : vector<8x128xf32>
      %2231 = arith.mulf %2182, %2182 : vector<8x128xf32>
      %2232 = vector.broadcast %264 : f32 to vector<8x128xf32>
      %2233 = arith.mulf %2232, %2231 : vector<8x128xf32>
      %2234 = vector.broadcast %268 : f32 to vector<8x128xf32>
      %2235 = arith.mulf %2234, %2231 : vector<8x128xf32>
      %2236 = vector.broadcast %272 : f32 to vector<8x128xf32>
      %2237 = arith.mulf %2236, %2231 : vector<8x128xf32>
      %2238 = arith.mulf %407, %2183 : vector<8x128xf32>
      %2239 = arith.mulf %408, %2184 : vector<8x128xf32>
      %2240 = arith.addf %2238, %2239 : vector<8x128xf32>
      %2241 = arith.mulf %406, %2186 : vector<8x128xf32>
      %2242 = arith.addf %2240, %2241 : vector<8x128xf32>
      %cst_474 = arith.constant 1.000000e-03 : f32
      %2243 = vector.broadcast %cst_474 : f32 to vector<8x128xf32>
      %2244 = arith.maximumf %2242, %2243 : vector<8x128xf32>
      %2245 = arith.mulf %407, %2200 : vector<8x128xf32>
      %2246 = arith.mulf %408, %2201 : vector<8x128xf32>
      %2247 = arith.addf %2245, %2246 : vector<8x128xf32>
      %2248 = arith.mulf %406, %2203 : vector<8x128xf32>
      %2249 = arith.addf %2247, %2248 : vector<8x128xf32>
      %cst_475 = arith.constant 1.000000e-03 : f32
      %2250 = vector.broadcast %cst_475 : f32 to vector<8x128xf32>
      %2251 = arith.maximumf %2249, %2250 : vector<8x128xf32>
      %2252 = arith.mulf %407, %2215 : vector<8x128xf32>
      %2253 = arith.mulf %408, %2216 : vector<8x128xf32>
      %2254 = arith.addf %2252, %2253 : vector<8x128xf32>
      %2255 = arith.mulf %406, %2217 : vector<8x128xf32>
      %2256 = arith.addf %2254, %2255 : vector<8x128xf32>
      %cst_476 = arith.constant 1.000000e-03 : f32
      %2257 = vector.broadcast %cst_476 : f32 to vector<8x128xf32>
      %2258 = arith.maximumf %2256, %2257 : vector<8x128xf32>
      %2259 = arith.mulf %2258, %2258 : vector<8x128xf32>
      %cst_477 = arith.constant 1.000000e+00 : f32
      %2260 = vector.broadcast %cst_477 : f32 to vector<8x128xf32>
      %2261 = arith.subf %569, %2260 : vector<8x128xf32>
      %2262 = arith.mulf %2259, %2261 : vector<8x128xf32>
      %cst_478 = arith.constant 1.000000e+00 : f32
      %2263 = vector.broadcast %cst_478 : f32 to vector<8x128xf32>
      %2264 = arith.addf %2262, %2263 : vector<8x128xf32>
      %2265 = arith.mulf %2244, %573 : vector<8x128xf32>
      %2266 = arith.addf %2265, %571 : vector<8x128xf32>
      %2267 = arith.mulf %2251, %573 : vector<8x128xf32>
      %2268 = arith.addf %2267, %571 : vector<8x128xf32>
      %cst_479 = arith.constant 2.500000e-01 : f32
      %2269 = vector.broadcast %cst_479 : f32 to vector<8x128xf32>
      %2270 = arith.mulf %2269, %569 : vector<8x128xf32>
      %cst_480 = arith.constant 3.14159274 : f32
      %2271 = vector.broadcast %cst_480 : f32 to vector<8x128xf32>
      %2272 = arith.mulf %2271, %2264 : vector<8x128xf32>
      %2273 = arith.mulf %2272, %2264 : vector<8x128xf32>
      %2274 = arith.mulf %2273, %2266 : vector<8x128xf32>
      %2275 = arith.mulf %2274, %2268 : vector<8x128xf32>
      %2276 = arith.divf %2270, %2275 : vector<8x128xf32>
      %2277 = arith.mulf %575, %2230 : vector<8x128xf32>
      %2278 = arith.addf %443, %2277 : vector<8x128xf32>
      %2279 = arith.mulf %2276, %2278 : vector<8x128xf32>
      %2280 = arith.addf %582, %2279 : vector<8x128xf32>
      %2281 = arith.mulf %2233, %2244 : vector<8x128xf32>
      %2282 = arith.mulf %2280, %2281 : vector<8x128xf32>
      %cst_481 = arith.constant 0.000000e+00 : f32
      %2283 = vector.broadcast %cst_481 : f32 to vector<8x128xf32>
      %2284 = arith.maximumf %2282, %2283 : vector<8x128xf32>
      %2285 = arith.mulf %577, %2230 : vector<8x128xf32>
      %2286 = arith.addf %450, %2285 : vector<8x128xf32>
      %2287 = arith.mulf %2276, %2286 : vector<8x128xf32>
      %2288 = arith.addf %585, %2287 : vector<8x128xf32>
      %2289 = arith.mulf %2235, %2244 : vector<8x128xf32>
      %2290 = arith.mulf %2288, %2289 : vector<8x128xf32>
      %cst_482 = arith.constant 0.000000e+00 : f32
      %2291 = vector.broadcast %cst_482 : f32 to vector<8x128xf32>
      %2292 = arith.maximumf %2290, %2291 : vector<8x128xf32>
      %2293 = arith.mulf %579, %2230 : vector<8x128xf32>
      %2294 = arith.addf %457, %2293 : vector<8x128xf32>
      %2295 = arith.mulf %2276, %2294 : vector<8x128xf32>
      %2296 = arith.addf %588, %2295 : vector<8x128xf32>
      %2297 = arith.mulf %2237, %2244 : vector<8x128xf32>
      %2298 = arith.mulf %2296, %2297 : vector<8x128xf32>
      %cst_483 = arith.constant 0.000000e+00 : f32
      %2299 = vector.broadcast %cst_483 : f32 to vector<8x128xf32>
      %2300 = arith.maximumf %2298, %2299 : vector<8x128xf32>
      %2301 = arith.mulf %597, %2183 : vector<8x128xf32>
      %2302 = arith.mulf %598, %2184 : vector<8x128xf32>
      %2303 = arith.addf %2301, %2302 : vector<8x128xf32>
      %2304 = arith.mulf %599, %2186 : vector<8x128xf32>
      %2305 = arith.addf %2303, %2304 : vector<8x128xf32>
      %cst_484 = arith.constant 1.000000e-03 : f32
      %2306 = vector.broadcast %cst_484 : f32 to vector<8x128xf32>
      %2307 = arith.maximumf %2305, %2306 : vector<8x128xf32>
      %2308 = arith.mulf %597, %2200 : vector<8x128xf32>
      %2309 = arith.mulf %598, %2201 : vector<8x128xf32>
      %2310 = arith.addf %2308, %2309 : vector<8x128xf32>
      %2311 = arith.mulf %599, %2203 : vector<8x128xf32>
      %2312 = arith.addf %2310, %2311 : vector<8x128xf32>
      %cst_485 = arith.constant 1.000000e-03 : f32
      %2313 = vector.broadcast %cst_485 : f32 to vector<8x128xf32>
      %2314 = arith.maximumf %2312, %2313 : vector<8x128xf32>
      %2315 = arith.mulf %597, %2215 : vector<8x128xf32>
      %2316 = arith.mulf %598, %2216 : vector<8x128xf32>
      %2317 = arith.addf %2315, %2316 : vector<8x128xf32>
      %2318 = arith.mulf %599, %2217 : vector<8x128xf32>
      %2319 = arith.addf %2317, %2318 : vector<8x128xf32>
      %cst_486 = arith.constant 1.000000e-03 : f32
      %2320 = vector.broadcast %cst_486 : f32 to vector<8x128xf32>
      %2321 = arith.maximumf %2319, %2320 : vector<8x128xf32>
      %2322 = arith.mulf %2321, %2321 : vector<8x128xf32>
      %cst_487 = arith.constant 1.000000e+00 : f32
      %2323 = vector.broadcast %cst_487 : f32 to vector<8x128xf32>
      %2324 = arith.subf %603, %2323 : vector<8x128xf32>
      %2325 = arith.mulf %2322, %2324 : vector<8x128xf32>
      %cst_488 = arith.constant 1.000000e+00 : f32
      %2326 = vector.broadcast %cst_488 : f32 to vector<8x128xf32>
      %2327 = arith.addf %2325, %2326 : vector<8x128xf32>
      %2328 = arith.mulf %2307, %607 : vector<8x128xf32>
      %2329 = arith.addf %2328, %605 : vector<8x128xf32>
      %2330 = arith.mulf %2314, %607 : vector<8x128xf32>
      %2331 = arith.addf %2330, %605 : vector<8x128xf32>
      %cst_489 = arith.constant 2.500000e-01 : f32
      %2332 = vector.broadcast %cst_489 : f32 to vector<8x128xf32>
      %2333 = arith.mulf %2332, %603 : vector<8x128xf32>
      %cst_490 = arith.constant 3.14159274 : f32
      %2334 = vector.broadcast %cst_490 : f32 to vector<8x128xf32>
      %2335 = arith.mulf %2334, %2327 : vector<8x128xf32>
      %2336 = arith.mulf %2335, %2327 : vector<8x128xf32>
      %2337 = arith.mulf %2336, %2329 : vector<8x128xf32>
      %2338 = arith.mulf %2337, %2331 : vector<8x128xf32>
      %2339 = arith.divf %2333, %2338 : vector<8x128xf32>
      %2340 = arith.mulf %609, %2230 : vector<8x128xf32>
      %2341 = arith.addf %487, %2340 : vector<8x128xf32>
      %2342 = arith.mulf %2339, %2341 : vector<8x128xf32>
      %2343 = arith.addf %616, %2342 : vector<8x128xf32>
      %2344 = arith.mulf %2233, %2307 : vector<8x128xf32>
      %2345 = arith.mulf %2343, %2344 : vector<8x128xf32>
      %cst_491 = arith.constant 0.000000e+00 : f32
      %2346 = vector.broadcast %cst_491 : f32 to vector<8x128xf32>
      %2347 = arith.maximumf %2345, %2346 : vector<8x128xf32>
      %2348 = arith.mulf %611, %2230 : vector<8x128xf32>
      %2349 = arith.addf %490, %2348 : vector<8x128xf32>
      %2350 = arith.mulf %2339, %2349 : vector<8x128xf32>
      %2351 = arith.addf %619, %2350 : vector<8x128xf32>
      %2352 = arith.mulf %2235, %2307 : vector<8x128xf32>
      %2353 = arith.mulf %2351, %2352 : vector<8x128xf32>
      %cst_492 = arith.constant 0.000000e+00 : f32
      %2354 = vector.broadcast %cst_492 : f32 to vector<8x128xf32>
      %2355 = arith.maximumf %2353, %2354 : vector<8x128xf32>
      %2356 = arith.mulf %613, %2230 : vector<8x128xf32>
      %2357 = arith.addf %493, %2356 : vector<8x128xf32>
      %2358 = arith.mulf %2339, %2357 : vector<8x128xf32>
      %2359 = arith.addf %622, %2358 : vector<8x128xf32>
      %2360 = arith.mulf %2237, %2307 : vector<8x128xf32>
      %2361 = arith.mulf %2359, %2360 : vector<8x128xf32>
      %cst_493 = arith.constant 0.000000e+00 : f32
      %2362 = vector.broadcast %cst_493 : f32 to vector<8x128xf32>
      %2363 = arith.maximumf %2361, %2362 : vector<8x128xf32>
      %cst_494 = arith.constant 1.000000e-01 : f32
      %2364 = vector.broadcast %cst_494 : f32 to vector<8x128xf32>
      %2365 = arith.addf %2284, %2364 : vector<8x128xf32>
      %2366 = math.log %2365 : vector<8x128xf32>
      %cst_495 = arith.constant 1.000000e-01 : f32
      %2367 = vector.broadcast %cst_495 : f32 to vector<8x128xf32>
      %2368 = arith.addf %2347, %2367 : vector<8x128xf32>
      %2369 = math.log %2368 : vector<8x128xf32>
      %2370 = arith.subf %2366, %2369 : vector<8x128xf32>
      %2371 = math.absf %2370 : vector<8x128xf32>
      %2372 = arith.addf %2169, %2371 : vector<8x128xf32>
      %cst_496 = arith.constant 1.000000e-01 : f32
      %2373 = vector.broadcast %cst_496 : f32 to vector<8x128xf32>
      %2374 = arith.addf %2292, %2373 : vector<8x128xf32>
      %2375 = math.log %2374 : vector<8x128xf32>
      %cst_497 = arith.constant 1.000000e-01 : f32
      %2376 = vector.broadcast %cst_497 : f32 to vector<8x128xf32>
      %2377 = arith.addf %2355, %2376 : vector<8x128xf32>
      %2378 = math.log %2377 : vector<8x128xf32>
      %2379 = arith.subf %2375, %2378 : vector<8x128xf32>
      %2380 = math.absf %2379 : vector<8x128xf32>
      %2381 = arith.addf %2372, %2380 : vector<8x128xf32>
      %cst_498 = arith.constant 1.000000e-01 : f32
      %2382 = vector.broadcast %cst_498 : f32 to vector<8x128xf32>
      %2383 = arith.addf %2300, %2382 : vector<8x128xf32>
      %2384 = math.log %2383 : vector<8x128xf32>
      %cst_499 = arith.constant 1.000000e-01 : f32
      %2385 = vector.broadcast %cst_499 : f32 to vector<8x128xf32>
      %2386 = arith.addf %2363, %2385 : vector<8x128xf32>
      %2387 = math.log %2386 : vector<8x128xf32>
      %2388 = arith.subf %2384, %2387 : vector<8x128xf32>
      %2389 = math.absf %2388 : vector<8x128xf32>
      %2390 = arith.addf %2381, %2389 : vector<8x128xf32>
      %2391 = vector.broadcast %286 : f32 to vector<8x128xf32>
      %2392 = arith.subf %2391, %394 : vector<8x128xf32>
      %2393 = vector.broadcast %290 : f32 to vector<8x128xf32>
      %2394 = arith.subf %2393, %387 : vector<8x128xf32>
      %2395 = arith.mulf %2392, %2392 : vector<8x128xf32>
      %2396 = arith.mulf %2394, %2394 : vector<8x128xf32>
      %2397 = arith.addf %2395, %2396 : vector<8x128xf32>
      %2398 = arith.mulf %294, %294 : f32
      %2399 = vector.broadcast %2398 : f32 to vector<8x128xf32>
      %2400 = arith.addf %2397, %2399 : vector<8x128xf32>
      %cst_500 = arith.constant 9.99999996E-13 : f32
      %2401 = vector.broadcast %cst_500 : f32 to vector<8x128xf32>
      %2402 = arith.addf %2400, %2401 : vector<8x128xf32>
      %2403 = math.rsqrt %2402 : vector<8x128xf32>
      %2404 = arith.mulf %2392, %2403 : vector<8x128xf32>
      %2405 = arith.mulf %2394, %2403 : vector<8x128xf32>
      %2406 = vector.broadcast %294 : f32 to vector<8x128xf32>
      %2407 = arith.mulf %2406, %2403 : vector<8x128xf32>
      %2408 = vector.broadcast %276 : f32 to vector<8x128xf32>
      %2409 = arith.subf %2408, %394 : vector<8x128xf32>
      %2410 = vector.broadcast %279 : f32 to vector<8x128xf32>
      %2411 = arith.subf %2410, %387 : vector<8x128xf32>
      %2412 = arith.mulf %2409, %2409 : vector<8x128xf32>
      %2413 = arith.mulf %2411, %2411 : vector<8x128xf32>
      %2414 = arith.addf %2412, %2413 : vector<8x128xf32>
      %2415 = arith.mulf %282, %282 : f32
      %2416 = vector.broadcast %2415 : f32 to vector<8x128xf32>
      %2417 = arith.addf %2414, %2416 : vector<8x128xf32>
      %cst_501 = arith.constant 9.99999996E-13 : f32
      %2418 = vector.broadcast %cst_501 : f32 to vector<8x128xf32>
      %2419 = arith.addf %2417, %2418 : vector<8x128xf32>
      %2420 = math.rsqrt %2419 : vector<8x128xf32>
      %2421 = arith.mulf %2409, %2420 : vector<8x128xf32>
      %2422 = arith.mulf %2411, %2420 : vector<8x128xf32>
      %2423 = vector.broadcast %282 : f32 to vector<8x128xf32>
      %2424 = arith.mulf %2423, %2420 : vector<8x128xf32>
      %2425 = arith.addf %2404, %2421 : vector<8x128xf32>
      %2426 = arith.addf %2405, %2422 : vector<8x128xf32>
      %2427 = arith.addf %2407, %2424 : vector<8x128xf32>
      %2428 = arith.mulf %2425, %2425 : vector<8x128xf32>
      %2429 = arith.mulf %2426, %2426 : vector<8x128xf32>
      %2430 = arith.addf %2428, %2429 : vector<8x128xf32>
      %2431 = arith.mulf %2427, %2427 : vector<8x128xf32>
      %2432 = arith.addf %2430, %2431 : vector<8x128xf32>
      %cst_502 = arith.constant 9.99999996E-13 : f32
      %2433 = vector.broadcast %cst_502 : f32 to vector<8x128xf32>
      %2434 = arith.addf %2432, %2433 : vector<8x128xf32>
      %2435 = math.rsqrt %2434 : vector<8x128xf32>
      %2436 = arith.mulf %2425, %2435 : vector<8x128xf32>
      %2437 = arith.mulf %2426, %2435 : vector<8x128xf32>
      %2438 = arith.mulf %2427, %2435 : vector<8x128xf32>
      %2439 = arith.mulf %2421, %2436 : vector<8x128xf32>
      %2440 = arith.mulf %2422, %2437 : vector<8x128xf32>
      %2441 = arith.addf %2439, %2440 : vector<8x128xf32>
      %2442 = arith.mulf %2424, %2438 : vector<8x128xf32>
      %2443 = arith.addf %2441, %2442 : vector<8x128xf32>
      %cst_503 = arith.constant 1.000000e-03 : f32
      %2444 = vector.broadcast %cst_503 : f32 to vector<8x128xf32>
      %2445 = arith.maximumf %2443, %2444 : vector<8x128xf32>
      %cst_504 = arith.constant 1.000000e+00 : f32
      %2446 = vector.broadcast %cst_504 : f32 to vector<8x128xf32>
      %2447 = arith.subf %2446, %2445 : vector<8x128xf32>
      %2448 = arith.mulf %2447, %2447 : vector<8x128xf32>
      %2449 = arith.mulf %2447, %2447 : vector<8x128xf32>
      %2450 = arith.mulf %2448, %2449 : vector<8x128xf32>
      %2451 = arith.mulf %2450, %2447 : vector<8x128xf32>
      %2452 = arith.mulf %2403, %2403 : vector<8x128xf32>
      %2453 = vector.broadcast %298 : f32 to vector<8x128xf32>
      %2454 = arith.mulf %2453, %2452 : vector<8x128xf32>
      %2455 = vector.broadcast %302 : f32 to vector<8x128xf32>
      %2456 = arith.mulf %2455, %2452 : vector<8x128xf32>
      %2457 = vector.broadcast %306 : f32 to vector<8x128xf32>
      %2458 = arith.mulf %2457, %2452 : vector<8x128xf32>
      %2459 = arith.mulf %407, %2404 : vector<8x128xf32>
      %2460 = arith.mulf %408, %2405 : vector<8x128xf32>
      %2461 = arith.addf %2459, %2460 : vector<8x128xf32>
      %2462 = arith.mulf %406, %2407 : vector<8x128xf32>
      %2463 = arith.addf %2461, %2462 : vector<8x128xf32>
      %cst_505 = arith.constant 1.000000e-03 : f32
      %2464 = vector.broadcast %cst_505 : f32 to vector<8x128xf32>
      %2465 = arith.maximumf %2463, %2464 : vector<8x128xf32>
      %2466 = arith.mulf %407, %2421 : vector<8x128xf32>
      %2467 = arith.mulf %408, %2422 : vector<8x128xf32>
      %2468 = arith.addf %2466, %2467 : vector<8x128xf32>
      %2469 = arith.mulf %406, %2424 : vector<8x128xf32>
      %2470 = arith.addf %2468, %2469 : vector<8x128xf32>
      %cst_506 = arith.constant 1.000000e-03 : f32
      %2471 = vector.broadcast %cst_506 : f32 to vector<8x128xf32>
      %2472 = arith.maximumf %2470, %2471 : vector<8x128xf32>
      %2473 = arith.mulf %407, %2436 : vector<8x128xf32>
      %2474 = arith.mulf %408, %2437 : vector<8x128xf32>
      %2475 = arith.addf %2473, %2474 : vector<8x128xf32>
      %2476 = arith.mulf %406, %2438 : vector<8x128xf32>
      %2477 = arith.addf %2475, %2476 : vector<8x128xf32>
      %cst_507 = arith.constant 1.000000e-03 : f32
      %2478 = vector.broadcast %cst_507 : f32 to vector<8x128xf32>
      %2479 = arith.maximumf %2477, %2478 : vector<8x128xf32>
      %2480 = arith.mulf %2479, %2479 : vector<8x128xf32>
      %cst_508 = arith.constant 1.000000e+00 : f32
      %2481 = vector.broadcast %cst_508 : f32 to vector<8x128xf32>
      %2482 = arith.subf %569, %2481 : vector<8x128xf32>
      %2483 = arith.mulf %2480, %2482 : vector<8x128xf32>
      %cst_509 = arith.constant 1.000000e+00 : f32
      %2484 = vector.broadcast %cst_509 : f32 to vector<8x128xf32>
      %2485 = arith.addf %2483, %2484 : vector<8x128xf32>
      %2486 = arith.mulf %2465, %573 : vector<8x128xf32>
      %2487 = arith.addf %2486, %571 : vector<8x128xf32>
      %2488 = arith.mulf %2472, %573 : vector<8x128xf32>
      %2489 = arith.addf %2488, %571 : vector<8x128xf32>
      %cst_510 = arith.constant 2.500000e-01 : f32
      %2490 = vector.broadcast %cst_510 : f32 to vector<8x128xf32>
      %2491 = arith.mulf %2490, %569 : vector<8x128xf32>
      %cst_511 = arith.constant 3.14159274 : f32
      %2492 = vector.broadcast %cst_511 : f32 to vector<8x128xf32>
      %2493 = arith.mulf %2492, %2485 : vector<8x128xf32>
      %2494 = arith.mulf %2493, %2485 : vector<8x128xf32>
      %2495 = arith.mulf %2494, %2487 : vector<8x128xf32>
      %2496 = arith.mulf %2495, %2489 : vector<8x128xf32>
      %2497 = arith.divf %2491, %2496 : vector<8x128xf32>
      %2498 = arith.mulf %575, %2451 : vector<8x128xf32>
      %2499 = arith.addf %443, %2498 : vector<8x128xf32>
      %2500 = arith.mulf %2497, %2499 : vector<8x128xf32>
      %2501 = arith.addf %582, %2500 : vector<8x128xf32>
      %2502 = arith.mulf %2454, %2465 : vector<8x128xf32>
      %2503 = arith.mulf %2501, %2502 : vector<8x128xf32>
      %cst_512 = arith.constant 0.000000e+00 : f32
      %2504 = vector.broadcast %cst_512 : f32 to vector<8x128xf32>
      %2505 = arith.maximumf %2503, %2504 : vector<8x128xf32>
      %2506 = arith.mulf %577, %2451 : vector<8x128xf32>
      %2507 = arith.addf %450, %2506 : vector<8x128xf32>
      %2508 = arith.mulf %2497, %2507 : vector<8x128xf32>
      %2509 = arith.addf %585, %2508 : vector<8x128xf32>
      %2510 = arith.mulf %2456, %2465 : vector<8x128xf32>
      %2511 = arith.mulf %2509, %2510 : vector<8x128xf32>
      %cst_513 = arith.constant 0.000000e+00 : f32
      %2512 = vector.broadcast %cst_513 : f32 to vector<8x128xf32>
      %2513 = arith.maximumf %2511, %2512 : vector<8x128xf32>
      %2514 = arith.mulf %579, %2451 : vector<8x128xf32>
      %2515 = arith.addf %457, %2514 : vector<8x128xf32>
      %2516 = arith.mulf %2497, %2515 : vector<8x128xf32>
      %2517 = arith.addf %588, %2516 : vector<8x128xf32>
      %2518 = arith.mulf %2458, %2465 : vector<8x128xf32>
      %2519 = arith.mulf %2517, %2518 : vector<8x128xf32>
      %cst_514 = arith.constant 0.000000e+00 : f32
      %2520 = vector.broadcast %cst_514 : f32 to vector<8x128xf32>
      %2521 = arith.maximumf %2519, %2520 : vector<8x128xf32>
      %2522 = arith.mulf %597, %2404 : vector<8x128xf32>
      %2523 = arith.mulf %598, %2405 : vector<8x128xf32>
      %2524 = arith.addf %2522, %2523 : vector<8x128xf32>
      %2525 = arith.mulf %599, %2407 : vector<8x128xf32>
      %2526 = arith.addf %2524, %2525 : vector<8x128xf32>
      %cst_515 = arith.constant 1.000000e-03 : f32
      %2527 = vector.broadcast %cst_515 : f32 to vector<8x128xf32>
      %2528 = arith.maximumf %2526, %2527 : vector<8x128xf32>
      %2529 = arith.mulf %597, %2421 : vector<8x128xf32>
      %2530 = arith.mulf %598, %2422 : vector<8x128xf32>
      %2531 = arith.addf %2529, %2530 : vector<8x128xf32>
      %2532 = arith.mulf %599, %2424 : vector<8x128xf32>
      %2533 = arith.addf %2531, %2532 : vector<8x128xf32>
      %cst_516 = arith.constant 1.000000e-03 : f32
      %2534 = vector.broadcast %cst_516 : f32 to vector<8x128xf32>
      %2535 = arith.maximumf %2533, %2534 : vector<8x128xf32>
      %2536 = arith.mulf %597, %2436 : vector<8x128xf32>
      %2537 = arith.mulf %598, %2437 : vector<8x128xf32>
      %2538 = arith.addf %2536, %2537 : vector<8x128xf32>
      %2539 = arith.mulf %599, %2438 : vector<8x128xf32>
      %2540 = arith.addf %2538, %2539 : vector<8x128xf32>
      %cst_517 = arith.constant 1.000000e-03 : f32
      %2541 = vector.broadcast %cst_517 : f32 to vector<8x128xf32>
      %2542 = arith.maximumf %2540, %2541 : vector<8x128xf32>
      %2543 = arith.mulf %2542, %2542 : vector<8x128xf32>
      %cst_518 = arith.constant 1.000000e+00 : f32
      %2544 = vector.broadcast %cst_518 : f32 to vector<8x128xf32>
      %2545 = arith.subf %603, %2544 : vector<8x128xf32>
      %2546 = arith.mulf %2543, %2545 : vector<8x128xf32>
      %cst_519 = arith.constant 1.000000e+00 : f32
      %2547 = vector.broadcast %cst_519 : f32 to vector<8x128xf32>
      %2548 = arith.addf %2546, %2547 : vector<8x128xf32>
      %2549 = arith.mulf %2528, %607 : vector<8x128xf32>
      %2550 = arith.addf %2549, %605 : vector<8x128xf32>
      %2551 = arith.mulf %2535, %607 : vector<8x128xf32>
      %2552 = arith.addf %2551, %605 : vector<8x128xf32>
      %cst_520 = arith.constant 2.500000e-01 : f32
      %2553 = vector.broadcast %cst_520 : f32 to vector<8x128xf32>
      %2554 = arith.mulf %2553, %603 : vector<8x128xf32>
      %cst_521 = arith.constant 3.14159274 : f32
      %2555 = vector.broadcast %cst_521 : f32 to vector<8x128xf32>
      %2556 = arith.mulf %2555, %2548 : vector<8x128xf32>
      %2557 = arith.mulf %2556, %2548 : vector<8x128xf32>
      %2558 = arith.mulf %2557, %2550 : vector<8x128xf32>
      %2559 = arith.mulf %2558, %2552 : vector<8x128xf32>
      %2560 = arith.divf %2554, %2559 : vector<8x128xf32>
      %2561 = arith.mulf %609, %2451 : vector<8x128xf32>
      %2562 = arith.addf %487, %2561 : vector<8x128xf32>
      %2563 = arith.mulf %2560, %2562 : vector<8x128xf32>
      %2564 = arith.addf %616, %2563 : vector<8x128xf32>
      %2565 = arith.mulf %2454, %2528 : vector<8x128xf32>
      %2566 = arith.mulf %2564, %2565 : vector<8x128xf32>
      %cst_522 = arith.constant 0.000000e+00 : f32
      %2567 = vector.broadcast %cst_522 : f32 to vector<8x128xf32>
      %2568 = arith.maximumf %2566, %2567 : vector<8x128xf32>
      %2569 = arith.mulf %611, %2451 : vector<8x128xf32>
      %2570 = arith.addf %490, %2569 : vector<8x128xf32>
      %2571 = arith.mulf %2560, %2570 : vector<8x128xf32>
      %2572 = arith.addf %619, %2571 : vector<8x128xf32>
      %2573 = arith.mulf %2456, %2528 : vector<8x128xf32>
      %2574 = arith.mulf %2572, %2573 : vector<8x128xf32>
      %cst_523 = arith.constant 0.000000e+00 : f32
      %2575 = vector.broadcast %cst_523 : f32 to vector<8x128xf32>
      %2576 = arith.maximumf %2574, %2575 : vector<8x128xf32>
      %2577 = arith.mulf %613, %2451 : vector<8x128xf32>
      %2578 = arith.addf %493, %2577 : vector<8x128xf32>
      %2579 = arith.mulf %2560, %2578 : vector<8x128xf32>
      %2580 = arith.addf %622, %2579 : vector<8x128xf32>
      %2581 = arith.mulf %2458, %2528 : vector<8x128xf32>
      %2582 = arith.mulf %2580, %2581 : vector<8x128xf32>
      %cst_524 = arith.constant 0.000000e+00 : f32
      %2583 = vector.broadcast %cst_524 : f32 to vector<8x128xf32>
      %2584 = arith.maximumf %2582, %2583 : vector<8x128xf32>
      %cst_525 = arith.constant 1.000000e-01 : f32
      %2585 = vector.broadcast %cst_525 : f32 to vector<8x128xf32>
      %2586 = arith.addf %2505, %2585 : vector<8x128xf32>
      %2587 = math.log %2586 : vector<8x128xf32>
      %cst_526 = arith.constant 1.000000e-01 : f32
      %2588 = vector.broadcast %cst_526 : f32 to vector<8x128xf32>
      %2589 = arith.addf %2568, %2588 : vector<8x128xf32>
      %2590 = math.log %2589 : vector<8x128xf32>
      %2591 = arith.subf %2587, %2590 : vector<8x128xf32>
      %2592 = math.absf %2591 : vector<8x128xf32>
      %2593 = arith.addf %2390, %2592 : vector<8x128xf32>
      %cst_527 = arith.constant 1.000000e-01 : f32
      %2594 = vector.broadcast %cst_527 : f32 to vector<8x128xf32>
      %2595 = arith.addf %2513, %2594 : vector<8x128xf32>
      %2596 = math.log %2595 : vector<8x128xf32>
      %cst_528 = arith.constant 1.000000e-01 : f32
      %2597 = vector.broadcast %cst_528 : f32 to vector<8x128xf32>
      %2598 = arith.addf %2576, %2597 : vector<8x128xf32>
      %2599 = math.log %2598 : vector<8x128xf32>
      %2600 = arith.subf %2596, %2599 : vector<8x128xf32>
      %2601 = math.absf %2600 : vector<8x128xf32>
      %2602 = arith.addf %2593, %2601 : vector<8x128xf32>
      %cst_529 = arith.constant 1.000000e-01 : f32
      %2603 = vector.broadcast %cst_529 : f32 to vector<8x128xf32>
      %2604 = arith.addf %2521, %2603 : vector<8x128xf32>
      %2605 = math.log %2604 : vector<8x128xf32>
      %cst_530 = arith.constant 1.000000e-01 : f32
      %2606 = vector.broadcast %cst_530 : f32 to vector<8x128xf32>
      %2607 = arith.addf %2584, %2606 : vector<8x128xf32>
      %2608 = math.log %2607 : vector<8x128xf32>
      %2609 = arith.subf %2605, %2608 : vector<8x128xf32>
      %2610 = math.absf %2609 : vector<8x128xf32>
      %2611 = arith.addf %2602, %2610 : vector<8x128xf32>
      scf.yield %502, %553, %556, %565, %2611 : vector<8x128xf32>, vector<8x128xf32>, vector<8x128xf32>, vector<8x128xf32>, vector<8x128xf32>
    }
    %c2_i32_134 = arith.constant 2 : i32
    %310 = vector.shape_cast %309#0 : vector<8x128xf32> to vector<1x8x128xf32>
    %cst_135 = arith.constant dense<0.000000e+00> : vector<1xf32>
    %311 = vector.multi_reduction <add>, %310, %cst_135 [1, 2] : vector<1x8x128xf32> to vector<1xf32>
    %312 = vector.shape_cast %311 : vector<1xf32> to vector<1x1x1xf32>
    %313 = vector.extract %312[0, 0, 0] : f32 from vector<1x1x1xf32>
    %314 = vector.broadcast %313 : f32 to vector<1x1xf32>
    %315 = vector.shape_cast %309#1 : vector<8x128xf32> to vector<1x8x128xf32>
    %cst_136 = arith.constant dense<0.000000e+00> : vector<1xf32>
    %316 = vector.multi_reduction <add>, %315, %cst_136 [1, 2] : vector<1x8x128xf32> to vector<1xf32>
    %317 = vector.shape_cast %316 : vector<1xf32> to vector<1x1x1xf32>
    %318 = vector.extract %317[0, 0, 0] : f32 from vector<1x1x1xf32>
    %319 = vector.broadcast %318 : f32 to vector<1x1xf32>
    %320 = vector.shape_cast %309#2 : vector<8x128xf32> to vector<1x8x128xf32>
    %cst_137 = arith.constant dense<0.000000e+00> : vector<1xf32>
    %321 = vector.multi_reduction <add>, %320, %cst_137 [1, 2] : vector<1x8x128xf32> to vector<1xf32>
    %322 = vector.shape_cast %321 : vector<1xf32> to vector<1x1x1xf32>
    %323 = vector.extract %322[0, 0, 0] : f32 from vector<1x1x1xf32>
    %324 = vector.broadcast %323 : f32 to vector<1x1xf32>
    %325 = vector.shape_cast %309#3 : vector<8x128xf32> to vector<1x8x128xf32>
    %cst_138 = arith.constant dense<0.000000e+00> : vector<1xf32>
    %326 = vector.multi_reduction <add>, %325, %cst_138 [1, 2] : vector<1x8x128xf32> to vector<1xf32>
    %327 = vector.shape_cast %326 : vector<1xf32> to vector<1x1x1xf32>
    %328 = vector.extract %327[0, 0, 0] : f32 from vector<1x1x1xf32>
    %329 = vector.broadcast %328 : f32 to vector<1x1xf32>
    %330 = vector.shape_cast %309#4 : vector<8x128xf32> to vector<1x8x128xf32>
    %cst_139 = arith.constant dense<0.000000e+00> : vector<1xf32>
    %331 = vector.multi_reduction <add>, %330, %cst_139 [1, 2] : vector<1x8x128xf32> to vector<1xf32>
    %332 = vector.shape_cast %331 : vector<1xf32> to vector<1x1x1xf32>
    %333 = vector.extract %332[0, 0, 0] : f32 from vector<1x1x1xf32>
    %334 = vector.broadcast %333 : f32 to vector<1x1xf32>
    %335 = tpu.iota {dimensions = array<i32: 0>} : vector<8x128xi32>
    %c0_i32_140 = arith.constant 0 : i32
    %336 = vector.broadcast %c0_i32_140 : i32 to vector<8x128xi32>
    %337 = arith.cmpi eq, %335, %336 : vector<8x128xi32>
    %338 = arith.extui %337 : vector<8x128xi1> to vector<8x128xi32>
    %339 = arith.sitofp %338 : vector<8x128xi32> to vector<8x128xf32>
    %340 = vector.broadcast %314 : vector<1x1xf32> to vector<8x128xf32>
    %341 = arith.mulf %339, %340 : vector<8x128xf32>
    %c1_i32_141 = arith.constant 1 : i32
    %342 = vector.broadcast %c1_i32_141 : i32 to vector<8x128xi32>
    %343 = arith.cmpi eq, %335, %342 : vector<8x128xi32>
    %344 = arith.extui %343 : vector<8x128xi1> to vector<8x128xi32>
    %345 = arith.sitofp %344 : vector<8x128xi32> to vector<8x128xf32>
    %346 = vector.broadcast %319 : vector<1x1xf32> to vector<8x128xf32>
    %347 = arith.mulf %345, %346 : vector<8x128xf32>
    %348 = arith.addf %341, %347 : vector<8x128xf32>
    %c2_i32_142 = arith.constant 2 : i32
    %349 = vector.broadcast %c2_i32_142 : i32 to vector<8x128xi32>
    %350 = arith.cmpi eq, %335, %349 : vector<8x128xi32>
    %351 = arith.extui %350 : vector<8x128xi1> to vector<8x128xi32>
    %352 = arith.sitofp %351 : vector<8x128xi32> to vector<8x128xf32>
    %353 = vector.broadcast %324 : vector<1x1xf32> to vector<8x128xf32>
    %354 = arith.mulf %352, %353 : vector<8x128xf32>
    %355 = arith.addf %348, %354 : vector<8x128xf32>
    %c3_i32_143 = arith.constant 3 : i32
    %356 = vector.broadcast %c3_i32_143 : i32 to vector<8x128xi32>
    %357 = arith.cmpi eq, %335, %356 : vector<8x128xi32>
    %358 = arith.extui %357 : vector<8x128xi1> to vector<8x128xi32>
    %359 = arith.sitofp %358 : vector<8x128xi32> to vector<8x128xf32>
    %360 = vector.broadcast %329 : vector<1x1xf32> to vector<8x128xf32>
    %361 = arith.mulf %359, %360 : vector<8x128xf32>
    %362 = arith.addf %355, %361 : vector<8x128xf32>
    %c4_i32 = arith.constant 4 : i32
    %363 = vector.broadcast %c4_i32 : i32 to vector<8x128xi32>
    %364 = arith.cmpi eq, %335, %363 : vector<8x128xi32>
    %365 = arith.extui %364 : vector<8x128xi1> to vector<8x128xi32>
    %366 = arith.sitofp %365 : vector<8x128xi32> to vector<8x128xf32>
    %367 = vector.broadcast %334 : vector<1x1xf32> to vector<8x128xf32>
    %368 = arith.mulf %366, %367 : vector<8x128xf32>
    %369 = arith.addf %362, %368 : vector<8x128xf32>
    %370 = vector.shape_cast %369 : vector<8x128xf32> to vector<1x1x8x128xf32>
    %c0 = arith.constant 0 : index
    %c0_144 = arith.constant 0 : index
    %c0_145 = arith.constant 0 : index
    %c0_146 = arith.constant 0 : index
    %371 = vector.load %arg5[%c0, %c0_144, %c0_145, %c0_146] : memref<1x1x8x128xf32, #tpu.memory_space<vmem>>, vector<1x1x8x128xf32>
    tpu.vector_store %arg5[%c0, %c0_144, %c0_145, %c0_146], %370 {strides = array<i32>} : memref<1x1x8x128xf32, #tpu.memory_space<vmem>>, vector<1x1x8x128xf32>,
    return
  }
  func.func @transform_0(%arg0: i32, %arg1: i32) -> i32 {
    %c0_i32 = arith.constant 0 : i32
    %c0_i32_0 = arith.constant 0 : i32
    return %c0_i32 : i32
  }
  func.func @transform_1(%arg0: i32, %arg1: i32) -> (i32, i32, i32, i32) {
    %c0_i32 = arith.constant 0 : i32
    %c0_i32_0 = arith.constant 0 : i32
    %c0_i32_1 = arith.constant 0 : i32
    return %arg0, %c0_i32, %arg1, %c0_i32_0 : i32, i32, i32, i32
  }
  func.func @transform_2(%arg0: i32, %arg1: i32) -> (i32, i32, i32, i32) {
    %c0_i32 = arith.constant 0 : i32
    %c0_i32_0 = arith.constant 0 : i32
    %c0_i32_1 = arith.constant 0 : i32
    return %arg0, %c0_i32, %arg1, %c0_i32_0 : i32, i32, i32, i32
  }
  func.func @transform_3(%arg0: i32, %arg1: i32) -> (i32, i32, i32, i32) {
    %c0_i32 = arith.constant 0 : i32
    %c0_i32_0 = arith.constant 0 : i32
    %c0_i32_1 = arith.constant 0 : i32
    return %arg0, %arg1, %c0_i32, %c0_i32_0 : i32, i32, i32, i32
  }
}

</mosaic_0001>

<llo_original>
// kernel: tpu_custom_call.1
$region0: #{tpu_custom_call.1}
  #allocation0 [shape = 'u32[]', space=smem, size = 0x4, offset = 0x4, fixed_abs, tag = 'smem constant byte address 0x4 - core index']
  #allocation1 [shape = 'u32[144,128]{1,0:T(1,128)}', space=vmem, size = 0x12000, scoped, tag = 'internal scratch']
  #allocation10 [shape = 's32[]', space=sflag, size = 0x4, offset = 0, fixed_abs, tag = 'sflag constant byte address 0x0 - dummy sync flag']
  #allocation12 [shape = 's32[]', space=sflag, size = 0x4, offset = 0, fixed_abs, tag = 'sflag constant byte address 0x0 - dummy sync flag']
  %s0 = inlined_call_operand.hbm [shape: f32[162], index: 0, kind: input, shape index: {}]
  %s1 = inlined_call_operand.hbm [shape: f32[2,9,32,128], index: 1, kind: input, shape index: {}]
  %s2 = inlined_call_operand.hbm [shape: f32[2,12,32,128], index: 2, kind: input, shape index: {}]
  %s3 = inlined_call_operand.hbm [shape: f32[2,2,8,128], index: 3, kind: output, shape index: {}]
  %s4 = sld [smem:[#allocation0]]
  $region64: #{tpu_custom_call.1} parent=0
    _
  %s6 = ssub.s32 1, %s4
  %s7 = scalar_select 0, %s6, %s4
  $region1: #{tpu_custom_call.1} parent=0
    #allocation2 [shape = 'u8[1024]{0}', space=smem, size = 0x400, scoped, tag = 'input window, operand 0, single buffered']
    #allocation3 [shape = 's32[2]{0}', space=sflag, size = 0x8, scoped, tag = 'scoped memory for tpu_custom_call.1']
    #allocation4 [shape = 's32[2]{0}', space=sflag, size = 0x8, scoped, tag = 'scoped memory for tpu_custom_call.1']
    #allocation5 [shape = 's32[2]{0}', space=sflag, size = 0x8, scoped, tag = 'scoped memory for tpu_custom_call.1']
    #allocation6 [shape = 'u8[147456]{0}', space=vmem, size = 0x24000, scoped, tag = 'input window, operand 1']
    #allocation7 [shape = 'u8[196608]{0}', space=vmem, size = 0x30000, scoped, tag = 'input window, operand 2']
    #allocation8 [shape = 's32[2]{0}', space=sflag, size = 0x8, scoped, tag = 'scoped memory for tpu_custom_call.1']
    #allocation9 [shape = 'u8[8192]{0}', space=vmem, size = 0x2000, scoped, tag = 'output window, operand 0']
    %8 = vsyncpa [#allocation5], 0
    %9 = vsyncpa [#allocation3], 0
    %s10 = scalar_lea.sflag [#allocation3], 1
    %11 = vsyncpa %s10, 0
    %12 = vsyncpa [#allocation8], 0
    %s13 = scalar_lea.sflag [#allocation8], 1
    %14 = vsyncpa %s13, 0
    %15 = vsyncpa [#allocation4], 0
    %s16 = scalar_lea.sflag [#allocation4], 1
    %17 = vsyncpa %s16, 0
    loop: start=0, step=1, limit=6
    $region2: #{tpu_custom_call.1} parent=1 // loop_pre_header
      _
    $region3: #{tpu_custom_call.1} parent=1 // loop_header
      %s19 = sphi 0, %s23
      %p20 = scmp.ge.s32.totalorder %s19, 6
      %s26 = sphi 0, %s38
      %s27 = sphi 0, %s34
      %s28 = sphi 0, %s26
      %s29 = sphi 0, %s27
      %s30 = sphi 0, %s28
      %s31 = sphi 0, %s29
      %s39 = sphi 0, %s39
      %s41 = sphi 0, %s39
      %s42 = sphi 0, %s41
      %s56 = sphi 0, %s42
      %s64 = sphi 0, %s66
      %s67 = sphi 0, %s64
      %s68 = sphi 0, %s67
      %s84 = sphi 0, %s68
      %s92 = sphi 0, %s94
      %s95 = sphi 0, %s92
      %s96 = sphi 0, %s95
      %s112 = sphi 0, %s96
      %s120 = sphi 0, %s122
      %s123 = sphi 0, %s120
      %s124 = sphi 0, %s123
      %s140 = sphi 0, %s124
    $region4: #{tpu_custom_call.1} parent=1 // loop_header_branch
      %22 = sbr.rel (%p20) target = $region8
    $region5: #{tpu_custom_call.1} parent=1 // loop_body
      %s24 = ssub.s32 %s19, 1
      %s25 = ssub.s32 %s19, 2
      %s32 = sadd.s32 1, %s27
      %p33 = scmp.ge.s32.totalorder %s32, 2
      %s34 = scalar_select %p33, 0, %s32
      %s35 = sadd.s32 1, %s26
      %s36 = scalar_select %p33, %s35, %s26
      %p37 = scmp.ge.s32.totalorder %s36, 2
      %s38 = scalar_select %p37, 0, %s36
      %s40 = sadd.s32 %s39, 1
      %p43 = scmp.eq.s32.totalorder %s19, 3
      %p44 = scmp.ne.s32.totalorder %s39, %s41
      %p45 = scmp.eq.s32.totalorder %s19, 0
      %p46 = por %p44, %p45
      %p47 = scmp.ne.s32.totalorder %s39, %s41
      %p48 = scmp.eq.s32.totalorder %s24, 3
      %p49 = por %p47, %p48
      %p50 = scmp.ne.s32.totalorder %s41, %s42
      %p51 = scmp.eq.s32.totalorder %s24, 0
      %p52 = por %p50, %p51
      %p53 = scmp.ne.s32.totalorder %s41, %s42
      %p54 = scmp.eq.s32.totalorder %s25, 3
      %p55 = por %p53, %p54
      %p57 = scmp.ne.s32.totalorder %s42, %s56
      %p58 = scmp.eq.s32.totalorder %s25, 0
      %p59 = por %p57, %p58
      %s60 = ssub.s32 %s26, %s38
      %s61 = ssub.s32 %s27, %s34
      %s62 = sor.u32 %s60, %s61
      %p63 = scmp.eq.s32.totalorder %s62, 0
      %s65 = sadd.s32 %s64, 1
      %s66 = scalar_select %p63, %s64, %s65
      %p69 = pneg %p63
      %p70 = scmp.eq.s32.totalorder %s19, 3
      %p71 = por %p69, %p70
      %p72 = scmp.ne.s32.totalorder %s64, %s67
      %p73 = scmp.eq.s32.totalorder %s19, 0
      %p74 = por %p72, %p73
      %p75 = scmp.ne.s32.totalorder %s64, %s67
      %p76 = scmp.eq.s32.totalorder %s24, 3
      %p77 = por %p75, %p76
      %p78 = scmp.ne.s32.totalorder %s67, %s68
      %p79 = scmp.eq.s32.totalorder %s24, 0
      %p80 = por %p78, %p79
      %p81 = scmp.ne.s32.totalorder %s67, %s68
      %p82 = scmp.eq.s32.totalorder %s25, 3
      %p83 = por %p81, %p82
      %p85 = scmp.ne.s32.totalorder %s68, %s84
      %p86 = scmp.eq.s32.totalorder %s25, 0
      %p87 = por %p85, %p86
      %s88 = ssub.s32 %s26, %s38
      %s89 = ssub.s32 %s27, %s34
      %s90 = sor.u32 %s88, %s89
      %p91 = scmp.eq.s32.totalorder %s90, 0
      %s93 = sadd.s32 %s92, 1
      %s94 = scalar_select %p91, %s92, %s93
      %p97 = pneg %p91
      %p98 = scmp.eq.s32.totalorder %s19, 3
      %p99 = por %p97, %p98
      %p100 = scmp.ne.s32.totalorder %s92, %s95
      %p101 = scmp.eq.s32.totalorder %s19, 0
      %p102 = por %p100, %p101
      %p103 = scmp.ne.s32.totalorder %s92, %s95
      %p104 = scmp.eq.s32.totalorder %s24, 3
      %p105 = por %p103, %p104
      %p106 = scmp.ne.s32.totalorder %s95, %s96
      %p107 = scmp.eq.s32.totalorder %s24, 0
      %p108 = por %p106, %p107
      %p109 = scmp.ne.s32.totalorder %s95, %s96
      %p110 = scmp.eq.s32.totalorder %s25, 3
      %p111 = por %p109, %p110
      %p113 = scmp.ne.s32.totalorder %s96, %s112
      %p114 = scmp.eq.s32.totalorder %s25, 0
      %p115 = por %p113, %p114
      %s116 = ssub.s32 %s26, %s38
      %s117 = ssub.s32 %s27, %s34
      %s118 = sor.u32 %s116, %s117
      %p119 = scmp.eq.s32.totalorder %s118, 0
      %s121 = sadd.s32 %s120, 1
      %s122 = scalar_select %p119, %s120, %s121
      %p125 = pneg %p119
      %p126 = scmp.eq.s32.totalorder %s19, 3
      %p127 = por %p125, %p126
      %p128 = scmp.ne.s32.totalorder %s120, %s123
      %p129 = scmp.eq.s32.totalorder %s19, 0
      %p130 = por %p128, %p129
      %p131 = scmp.ne.s32.totalorder %s120, %s123
      %p132 = scmp.eq.s32.totalorder %s24, 3
      %p133 = por %p131, %p132
      %p134 = scmp.ne.s32.totalorder %s123, %s124
      %p135 = scmp.eq.s32.totalorder %s24, 0
      %p136 = por %p134, %p135
      %p137 = scmp.ne.s32.totalorder %s123, %s124
      %p138 = scmp.eq.s32.totalorder %s25, 3
      %p139 = por %p137, %p138
      %p141 = scmp.ne.s32.totalorder %s124, %s140
      %p142 = scmp.eq.s32.totalorder %s25, 0
      %p143 = por %p141, %p142
      %p144 = scmp.le.s32.totalorder 1, %s19
      %p145 = scmp.lt.s32.totalorder %s19, 5
      %p146 = pnand %p144, %p145
      %p147 = pneg %p146
      // Predicated region
      $region9: #{tpu_custom_call.1} parent=5 // pred_check
        _
      $region10: #{tpu_custom_call.1} parent=5 // pred_check_branch
        %149 = sbr.rel (%p146) target = $region12
      $region11: #{tpu_custom_call.1} parent=5 // pred_region
        %s150 = ssub.s32 %s19, 1
        // Predicated region
        $region13: #{tpu_custom_call.1} parent=11 // pred_check
          %p151 = pneg %p52
        $region14: #{tpu_custom_call.1} parent=11 // pred_check_branch
          %153 = sbr.rel (%p151) target = $region16
        $region15: #{tpu_custom_call.1} parent=11 // pred_region
          %s155 = ssub.s32 32, 32
          %156 = vsyncadd [#allocation5], %s155
          %159 = dma.hbm_to_smem %s0, 32, [#allocation2], [#allocation5]
        $region16: #{tpu_custom_call.1} parent=11 // pred_fallthru
          _
      $region12: #{tpu_custom_call.1} parent=5 // pred_fallthru
        _
      %p160 = scmp.lt.s32.totalorder %s19, 4
      // Predicated region
      $region17: #{tpu_custom_call.1} parent=5 // pred_check
        %p161 = pneg %p160
      $region18: #{tpu_custom_call.1} parent=5 // pred_check_branch
        %163 = sbr.rel (%p161) target = $region20
      $region19: #{tpu_custom_call.1} parent=5 // pred_region
        // Predicated region
        $region21: #{tpu_custom_call.1} parent=19 // pred_check
          %p164 = pneg %p74
        $region22: #{tpu_custom_call.1} parent=19 // pred_check_branch
          %166 = sbr.rel (%p164) target = $region24
        $region23: #{tpu_custom_call.1} parent=19 // pred_region
          #allocation11 [shape = 'u32[6]{0}', space=smem, size = 0x18, scoped, tag = 'DMA stride descriptor']
          %s167 = sand.u32 %s64, 1
          %s168 = scalar_lea.sflag [#allocation3], %s167
          %s169 = sand.u32 %s64, 1
          %s170 = smul.addr %s169, 144
          %s171 = scalar_lea.vmem [#allocation6], %s170
          %s172 = smul.u32 2, %s27
          %s174 = ssub.s32 2304, 2304
          %175 = vsyncadd %s168, %s174
          %s176 = smul.addr %s26, 36
          %s177 = sadd.s32 %s172, %s176
          %s178 = smul.addr %s177, 128
          %s179 = scalar_lea.hbm %s1, %s178
          %s181 = sshll.u32 1, 14
          %s182 = sxor.u32 4294967295, %s181
          %s184 = sld [smem:[#allocation0]]
          %s185 = sadd.s32 2, %s184
          %s187 = sshll.u32 7, 26
          %s188 = sxor.u32 4294967295, %s187
          %s189 = sand.u32 0, %s188
          %s190 = sshll.u32 %s185, 26
          %s191 = sor.u32 %s189, %s190
          %s192 = sshll.u32 %s171, 4
          %s193 = int_to_ptr.vmem [resolvable:$true] %s192
          %199 = sst [smem:[#allocation11]] 512
          %s200 = scalar_lea.smem [#allocation11], 1
          %201 = sst [smem:[%s200]] 256
          %s202 = scalar_lea.smem [#allocation11], 2
          %203 = sst [smem:[%s202]] 2
          %s204 = scalar_lea.smem [#allocation11], 3
          %205 = sst [smem:[%s204]] 128
          %s206 = scalar_lea.smem [#allocation11], 4
          %207 = sst [smem:[%s206]] 128
          %s208 = scalar_lea.smem [#allocation11], 5
          %209 = sst [smem:[%s208]] 8
          %211 = dma.general %s179, 2304, %s193, %s168, 131072, [#allocation11], %s191, 0
        $region24: #{tpu_custom_call.1} parent=19 // pred_fallthru
          _
        // Predicated region
        $region25: #{tpu_custom_call.1} parent=19 // pred_check
          %p212 = pneg %p102
        $region26: #{tpu_custom_call.1} parent=19 // pred_check_branch
          %214 = sbr.rel (%p212) target = $region28
        $region27: #{tpu_custom_call.1} parent=19 // pred_region
          #allocation13 [shape = 'u32[6]{0}', space=smem, size = 0x18, scoped, tag = 'DMA stride descriptor']
          %s215 = sand.u32 %s92, 1
          %s216 = scalar_lea.sflag [#allocation8], %s215
          %s217 = sand.u32 %s92, 1
          %s218 = smul.addr %s217, 192
          %s219 = scalar_lea.vmem [#allocation7], %s218
          %s220 = smul.u32 2, %s27
          %s222 = ssub.s32 3072, 3072
          %223 = vsyncadd %s216, %s222
          %s224 = smul.addr %s26, 48
          %s225 = sadd.s32 %s220, %s224
          %s226 = smul.addr %s225, 128
          %s227 = scalar_lea.hbm %s2, %s226
          %s229 = sshll.u32 1, 14
          %s230 = sxor.u32 4294967295, %s229
          %s232 = sld [smem:[#allocation0]]
          %s233 = sadd.s32 2, %s232
          %s235 = sshll.u32 7, 26
          %s236 = sxor.u32 4294967295, %s235
          %s237 = sand.u32 0, %s236
          %s238 = sshll.u32 %s233, 26
          %s239 = sor.u32 %s237, %s238
          %s240 = sshll.u32 %s219, 4
          %s241 = int_to_ptr.vmem [resolvable:$true] %s240
          %247 = sst [smem:[#allocation13]] 512
          %s248 = scalar_lea.smem [#allocation13], 1
          %249 = sst [smem:[%s248]] 256
          %s250 = scalar_lea.smem [#allocation13], 2
          %251 = sst [smem:[%s250]] 2
          %s252 = scalar_lea.smem [#allocation13], 3
          %253 = sst [smem:[%s252]] 128
          %s254 = scalar_lea.smem [#allocation13], 4
          %255 = sst [smem:[%s254]] 128
          %s256 = scalar_lea.smem [#allocation13], 5
          %257 = sst [smem:[%s256]] 8
          %259 = dma.general %s227, 3072, %s241, %s216, 131072, [#allocation13], %s239, 0
        $region28: #{tpu_custom_call.1} parent=19 // pred_fallthru
          _
      $region20: #{tpu_custom_call.1} parent=5 // pred_fallthru
        _
      %p260 = scmp.le.s32.totalorder 1, %s19
      %p261 = scmp.lt.s32.totalorder %s19, 5
      %p262 = pnand %p260, %p261
      %p263 = pneg %p262
      // Predicated region
      $region29: #{tpu_custom_call.1} parent=5 // pred_check
        _
      $region30: #{tpu_custom_call.1} parent=5 // pred_check_branch
        %265 = sbr.rel (%p262) target = $region32
      $region31: #{tpu_custom_call.1} parent=5 // pred_region
        %s266 = ssub.s32 %s19, 1
        // Predicated region
        $region33: #{tpu_custom_call.1} parent=31 // pred_check
          %p267 = pneg %p52
        $region34: #{tpu_custom_call.1} parent=31 // pred_check_branch
          %269 = sbr.rel (%p267) target = $region36
        $region35: #{tpu_custom_call.1} parent=31 // pred_region
          %270 = dma.done [#allocation5], 32
        $region36: #{tpu_custom_call.1} parent=31 // pred_fallthru
          _
        %s271 = sand.u32 %s67, 1
        %s272 = scalar_lea.sflag [#allocation3], %s271
        %s273 = sand.u32 %s67, 1
        %s274 = smul.addr %s273, 144
        %s275 = scalar_lea.vmem [#allocation6], %s274
        // Predicated region
        $region37: #{tpu_custom_call.1} parent=31 // pred_check
          %p276 = pneg %p80
        $region38: #{tpu_custom_call.1} parent=31 // pred_check_branch
          %278 = sbr.rel (%p276) target = $region40
        $region39: #{tpu_custom_call.1} parent=31 // pred_region
          %279 = dma.done %s272, 2304
        $region40: #{tpu_custom_call.1} parent=31 // pred_fallthru
          _
        %s280 = sand.u32 %s95, 1
        %s281 = scalar_lea.sflag [#allocation8], %s280
        %s282 = sand.u32 %s95, 1
        %s283 = smul.addr %s282, 192
        %s284 = scalar_lea.vmem [#allocation7], %s283
        // Predicated region
        $region41: #{tpu_custom_call.1} parent=31 // pred_check
          %p285 = pneg %p108
        $region42: #{tpu_custom_call.1} parent=31 // pred_check_branch
          %287 = sbr.rel (%p285) target = $region44
        $region43: #{tpu_custom_call.1} parent=31 // pred_region
          %288 = dma.done %s281, 3072
        $region44: #{tpu_custom_call.1} parent=31 // pred_fallthru
          _
        %289 = sfence
        %p290 = pneg %p52
        %p291 = pneg %p49
        %s292 = sand.u32 %s67, 1
        %s293 = scalar_lea.sflag [#allocation3], %s292
        %s294 = sand.u32 %s67, 1
        %s295 = smul.addr %s294, 144
        %s296 = scalar_lea.vmem [#allocation6], %s295
        %p297 = pneg %p80
        %p298 = pneg %p77
        %s299 = sand.u32 %s95, 1
        %s300 = scalar_lea.sflag [#allocation8], %s299
        %s301 = sand.u32 %s95, 1
        %s302 = smul.addr %s301, 192
        %s303 = scalar_lea.vmem [#allocation7], %s302
        %p304 = pneg %p108
        %p305 = pneg %p105
        %p306 = pneg %p136
        %p307 = pneg %p133
        %s308 = sand.u32 %s123, 1
        %s309 = scalar_lea.sflag [#allocation4], %s308
        %s310 = sand.u32 %s123, 1
        %s311 = smul.addr %s310, 8
        %s312 = scalar_lea.vmem [#allocation9], %s311
        %s313 = smul.u32 2, %s29
        %s314 = smul.u32 2, %s29
        %s315 = smul.u32 %s28, 81
        %s316 = sld [smem:[#allocation2 + %s315]]
        %s317 = sadd.s32 %s315, 1
        %s318 = sld [smem:[#allocation2 + %s317]]
        %s319 = sadd.s32 %s315, 2
        %s320 = sld [smem:[#allocation2 + %s319]]
        %s321 = sadd.s32 %s315, 3
        %s322 = sld [smem:[#allocation2 + %s321]]
        %s323 = sadd.s32 %s315, 4
        %s324 = sld [smem:[#allocation2 + %s323]]
        %s325 = sadd.s32 %s315, 5
        %s326 = sld [smem:[#allocation2 + %s325]]
        %s327 = sadd.s32 %s315, 6
        %s328 = sld [smem:[#allocation2 + %s327]]
        %s329 = sadd.s32 %s315, 7
        %s330 = sld [smem:[#allocation2 + %s329]]
        %s331 = sadd.s32 %s315, 8
        %s332 = sld [smem:[#allocation2 + %s331]]
        %s333 = sadd.s32 %s315, 9
        %s334 = sld [smem:[#allocation2 + %s333]]
        %s335 = sadd.s32 %s315, 10
        %s336 = sld [smem:[#allocation2 + %s335]]
        %s337 = sadd.s32 %s315, 11
        %s338 = sld [smem:[#allocation2 + %s337]]
        %s339 = sadd.s32 %s315, 12
        %s340 = sld [smem:[#allocation2 + %s339]]
        %s341 = sadd.s32 %s315, 13
        %s342 = sld [smem:[#allocation2 + %s341]]
        %s343 = sadd.s32 %s315, 14
        %s344 = sld [smem:[#allocation2 + %s343]]
        %s345 = sadd.s32 %s315, 15
        %s346 = sld [smem:[#allocation2 + %s345]]
        %s347 = sadd.s32 %s315, 16
        %s348 = sld [smem:[#allocation2 + %s347]]
        %s349 = sadd.s32 %s315, 17
        %s350 = sld [smem:[#allocation2 + %s349]]
        %s351 = sadd.s32 %s315, 18
        %s352 = sld [smem:[#allocation2 + %s351]]
        %s353 = sadd.s32 %s315, 19
        %s354 = sld [smem:[#allocation2 + %s353]]
        %s355 = sadd.s32 %s315, 20
        %s356 = sld [smem:[#allocation2 + %s355]]
        %s357 = sadd.s32 %s315, 21
        %s358 = sld [smem:[#allocation2 + %s357]]
        %s359 = sadd.s32 %s315, 22
        %s360 = sld [smem:[#allocation2 + %s359]]
        %s361 = sadd.s32 %s315, 23
        %s362 = sld [smem:[#allocation2 + %s361]]
        %s363 = sadd.s32 %s315, 24
        %s364 = sld [smem:[#allocation2 + %s363]]
        %s365 = sadd.s32 %s315, 25
        %s366 = sld [smem:[#allocation2 + %s365]]
        %s367 = sadd.s32 %s315, 26
        %s368 = sld [smem:[#allocation2 + %s367]]
        %s369 = sadd.s32 %s315, 27
        %s370 = sld [smem:[#allocation2 + %s369]]
        %s371 = sadd.s32 %s315, 28
        %s372 = sld [smem:[#allocation2 + %s371]]
        %s373 = sadd.s32 %s315, 29
        %s374 = sld [smem:[#allocation2 + %s373]]
        %s375 = sadd.s32 %s315, 30
        %s376 = sld [smem:[#allocation2 + %s375]]
        %s377 = sadd.s32 %s315, 31
        %s378 = sld [smem:[#allocation2 + %s377]]
        %s379 = sadd.s32 %s315, 32
        %s380 = sld [smem:[#allocation2 + %s379]]
        %s381 = sadd.s32 %s315, 33
        %s382 = sld [smem:[#allocation2 + %s381]]
        %s383 = sadd.s32 %s315, 34
        %s384 = sld [smem:[#allocation2 + %s383]]
        %s385 = sadd.s32 %s315, 35
        %s386 = sld [smem:[#allocation2 + %s385]]
        %s387 = sadd.s32 %s315, 36
        %s388 = sld [smem:[#allocation2 + %s387]]
        %s389 = sadd.s32 %s315, 37
        %s390 = sld [smem:[#allocation2 + %s389]]
        %s391 = sadd.s32 %s315, 38
        %s392 = sld [smem:[#allocation2 + %s391]]
        %s393 = sadd.s32 %s315, 39
        %s394 = sld [smem:[#allocation2 + %s393]]
        %s395 = sadd.s32 %s315, 40
        %s396 = sld [smem:[#allocation2 + %s395]]
        %s397 = sadd.s32 %s315, 41
        %s398 = sld [smem:[#allocation2 + %s397]]
        %s399 = sadd.s32 %s315, 42
        %s400 = sld [smem:[#allocation2 + %s399]]
        %s401 = sadd.s32 %s315, 43
        %s402 = sld [smem:[#allocation2 + %s401]]
        %s403 = sadd.s32 %s315, 44
        %s404 = sld [smem:[#allocation2 + %s403]]
        %s405 = sadd.s32 %s315, 45
        %s406 = sld [smem:[#allocation2 + %s405]]
        %s407 = sadd.s32 %s315, 46
        %s408 = sld [smem:[#allocation2 + %s407]]
        %s409 = sadd.s32 %s315, 47
        %s410 = sld [smem:[#allocation2 + %s409]]
        %s411 = sadd.s32 %s315, 48
        %s412 = sld [smem:[#allocation2 + %s411]]
        %s413 = sadd.s32 %s315, 49
        %s414 = sld [smem:[#allocation2 + %s413]]
        %s415 = sadd.s32 %s315, 50
        %s416 = sld [smem:[#allocation2 + %s415]]
        %s417 = sadd.s32 %s315, 51
        %s418 = sld [smem:[#allocation2 + %s417]]
        %s419 = sadd.s32 %s315, 52
        %s420 = sld [smem:[#allocation2 + %s419]]
        %s421 = sadd.s32 %s315, 53
        %s422 = sld [smem:[#allocation2 + %s421]]
        %s423 = sadd.s32 %s315, 54
        %s424 = sld [smem:[#allocation2 + %s423]]
        %s425 = sadd.s32 %s315, 55
        %s426 = sld [smem:[#allocation2 + %s425]]
        %s427 = sadd.s32 %s315, 56
        %s428 = sld [smem:[#allocation2 + %s427]]
        %s429 = sadd.s32 %s315, 57
        %s430 = sld [smem:[#allocation2 + %s429]]
        %s431 = sadd.s32 %s315, 58
        %s432 = sld [smem:[#allocation2 + %s431]]
        %s433 = sadd.s32 %s315, 59
        %s434 = sld [smem:[#allocation2 + %s433]]
        %s435 = sadd.s32 %s315, 60
        %s436 = sld [smem:[#allocation2 + %s435]]
        %s437 = sadd.s32 %s315, 61
        %s438 = sld [smem:[#allocation2 + %s437]]
        %s439 = sadd.s32 %s315, 62
        %s440 = sld [smem:[#allocation2 + %s439]]
        %s441 = sadd.s32 %s315, 63
        %s442 = sld [smem:[#allocation2 + %s441]]
        %s443 = sadd.s32 %s315, 64
        %s444 = sld [smem:[#allocation2 + %s443]]
        %s445 = sadd.s32 %s315, 65
        %s446 = sld [smem:[#allocation2 + %s445]]
        %s447 = sadd.s32 %s315, 66
        %s448 = sld [smem:[#allocation2 + %s447]]
        %s449 = sadd.s32 %s315, 67
        %s450 = sld [smem:[#allocation2 + %s449]]
        %s451 = sadd.s32 %s315, 68
        %s452 = sld [smem:[#allocation2 + %s451]]
        %s453 = sadd.s32 %s315, 69
        %s454 = sld [smem:[#allocation2 + %s453]]
        %s455 = sadd.s32 %s315, 70
        %s456 = sld [smem:[#allocation2 + %s455]]
        %s457 = sadd.s32 %s315, 71
        %s458 = sld [smem:[#allocation2 + %s457]]
        %s459 = sadd.s32 %s315, 72
        %s460 = sld [smem:[#allocation2 + %s459]]
        %s461 = sadd.s32 %s315, 73
        %s462 = sld [smem:[#allocation2 + %s461]]
        %s463 = sadd.s32 %s315, 74
        %s464 = sld [smem:[#allocation2 + %s463]]
        %s465 = sadd.s32 %s315, 75
        %s466 = sld [smem:[#allocation2 + %s465]]
        %s467 = sadd.s32 %s315, 76
        %s468 = sld [smem:[#allocation2 + %s467]]
        %s469 = sadd.s32 %s315, 77
        %s470 = sld [smem:[#allocation2 + %s469]]
        %s471 = sadd.s32 %s315, 78
        %s472 = sld [smem:[#allocation2 + %s471]]
        %s473 = sadd.s32 %s315, 79
        %s474 = sld [smem:[#allocation2 + %s473]]
        %s475 = sadd.s32 %s315, 80
        %s476 = sld [smem:[#allocation2 + %s475]]
        loop: start=0, step=1, limit=2
        $region45: #{tpu_custom_call.1} parent=31 // loop_pre_header
          _
        $region46: #{tpu_custom_call.1} parent=31 // loop_header
          %s478 = sphi 0, %s482
          %p479 = scmp.ge.s32.totalorder %s478, 2
          %v483 = vphi 0.0, %v587
          %v484 = vphi 0.0, %v638
          %v485 = vphi 0.0, %v641
          %v486 = vphi 0.0, %v650
          %v487 = vphi 0.0, %v2429
        $region47: #{tpu_custom_call.1} parent=31 // loop_header_branch
          %481 = sbr.rel (%p479) target = $region51
        $region48: #{tpu_custom_call.1} parent=31 // loop_body
          %s488 = smul.u32 %s478, 8
          %v489 = vlaneseq
          %v490 = vshrl.u32 %v489, 7
          %v491 = vlaneseq
          %v492 = vand.u32 %v491, 127
          %s493 = smul.u32 %s29, 16
          %s494 = sadd.s32 %s493, %s488
          %v495 = vstv %s494
          %v496 = vadd.s32 %v490, %v495
          %v497 = vcvt.s32.f32 %v496
          %v498 = vadd.f32 %v497, 0.5
          %v499 = vmul.f32 %v498, 0.0625
          %v500 = vsub.f32 %v499, 1.0
          %v501 = vcvt.s32.f32 %v492
          %v502 = vadd.f32 %v501, 0.5
          %v503 = vmul.f32 %v502, 0.015625
          %v504 = vsub.f32 %v503, 1.0
          %s505 = scalar_lea.vmem %s275, %s488 [#allocation6]
          %v506 = vld [vmem:[%s505] sm:$0xff]
          %s507 = sadd.s32 %s488, 16
          %s508 = scalar_lea.vmem %s275, %s507 [#allocation6]
          %v509 = vld [vmem:[%s508] sm:$0xff]
          %v510 = vmul.f32 %v506, %v506
          %v511 = vmul.f32 %v509, %v509
          %v512 = vadd.f32 %v510, %v511
          %v513 = vadd.f32 %v512, 1.0
          %v514 = vrsqrt.pop %v513
          %v515 = vmul.f32 %v506, %v514
          %v516 = vmul.f32 %v509, %v514
          %s517 = sadd.s32 %s488, 32
          %s518 = scalar_lea.vmem %s275, %s517 [#allocation6]
          %v519 = vld [vmem:[%s518] sm:$0xff]
          %v520 = vadd.f32 %v519, 1.0
          %v521 = vmul.f32 %v520, 0.5
          %s522 = sadd.s32 %s488, 48
          %s523 = scalar_lea.vmem %s275, %s522 [#allocation6]
          %v524 = vld [vmem:[%s523] sm:$0xff]
          %v525 = vadd.f32 %v524, 1.0
          %v526 = vmul.f32 %v525, 0.5
          %s527 = sadd.s32 %s488, 64
          %s528 = scalar_lea.vmem %s275, %s527 [#allocation6]
          %v529 = vld [vmem:[%s528] sm:$0xff]
          %v530 = vadd.f32 %v529, 1.0
          %v531 = vmul.f32 %v530, 0.5
          %s532 = sadd.s32 %s488, 80
          %s533 = scalar_lea.vmem %s275, %s532 [#allocation6]
          %v534 = vld [vmem:[%s533] sm:$0xff]
          %v535 = vadd.f32 %v534, 1.0
          %v536 = vmul.f32 %v535, 0.5
          %s537 = sadd.s32 %s488, 96
          %s538 = scalar_lea.vmem %s275, %s537 [#allocation6]
          %v539 = vld [vmem:[%s538] sm:$0xff]
          %v540 = vadd.f32 %v539, 1.0
          %v541 = vmul.f32 %v540, 0.5
          %s542 = sadd.s32 %s488, 112
          %s543 = scalar_lea.vmem %s275, %s542 [#allocation6]
          %v544 = vld [vmem:[%s543] sm:$0xff]
          %v545 = vadd.f32 %v544, 1.0
          %v546 = vmul.f32 %v545, 0.5
          %s547 = sadd.s32 %s488, 128
          %s548 = scalar_lea.vmem %s275, %s547 [#allocation6]
          %v549 = vld [vmem:[%s548] sm:$0xff]
          %v550 = vadd.f32 %v549, 1.0
          %v551 = vmul.f32 %v550, 0.5
          %s552 = scalar_lea.vmem %s284, %s488 [#allocation7]
          %v553 = vld [vmem:[%s552] sm:$0xff]
          %s554 = scalar_lea.vmem %s284, %s507 [#allocation7]
          %v555 = vld [vmem:[%s554] sm:$0xff]
          %s556 = scalar_lea.vmem %s284, %s517 [#allocation7]
          %v557 = vld [vmem:[%s556] sm:$0xff]
          %s558 = scalar_lea.vmem %s284, %s522 [#allocation7]
          %v559 = vld [vmem:[%s558] sm:$0xff]
          %s560 = scalar_lea.vmem %s284, %s527 [#allocation7]
          %v561 = vld [vmem:[%s560] sm:$0xff]
          %s562 = scalar_lea.vmem %s284, %s532 [#allocation7]
          %v563 = vld [vmem:[%s562] sm:$0xff]
          %s564 = scalar_lea.vmem %s284, %s537 [#allocation7]
          %v565 = vld [vmem:[%s564] sm:$0xff]
          %s566 = scalar_lea.vmem %s284, %s542 [#allocation7]
          %v567 = vld [vmem:[%s566] sm:$0xff]
          %s568 = scalar_lea.vmem %s284, %s547 [#allocation7]
          %v569 = vld [vmem:[%s568] sm:$0xff]
          %s570 = sadd.s32 %s488, 144
          %s571 = scalar_lea.vmem %s284, %s570 [#allocation7]
          %v572 = vld [vmem:[%s571] sm:$0xff]
          %s573 = sadd.s32 %s488, 160
          %s574 = scalar_lea.vmem %s284, %s573 [#allocation7]
          %v575 = vld [vmem:[%s574] sm:$0xff]
          %s576 = sadd.s32 %s488, 176
          %s577 = scalar_lea.vmem %s284, %s576 [#allocation7]
          %v578 = vld [vmem:[%s577] sm:$0xff]
          %v579 = vsub.f32 %v515, %v553
          %v580 = vand.u32 2147483647, %v579
          %v581 = vadd.f32 %v483, %v580
          %v582 = vsub.f32 %v516, %v555
          %v583 = vand.u32 2147483647, %v582
          %v584 = vadd.f32 %v581, %v583
          %v585 = vsub.f32 %v514, %v557
          %v586 = vand.u32 2147483647, %v585
          %v587 = vadd.f32 %v584, %v586
          %v588 = vadd.f32 %v521, 0.01
          %v589 = vlog2.pop %v588
          %v590 = vmul.f32 %v589, 0.6931472
          %v591 = vadd.f32 %v559, 0.01
          %v592 = vlog2.pop %v591
          %v593 = vmul.f32 %v592, 0.6931472
          %v594 = vsub.f32 %v590, %v593
          %v595 = vand.u32 2147483647, %v594
          %v596 = vadd.f32 %v484, %v595
          %v597 = vsub.f32 %v536, %v565
          %v598 = vand.u32 2147483647, %v597
          %v599 = vadd.f32 %v485, %v598
          %v600 = vadd.f32 %v541, 0.01
          %v601 = vlog2.pop %v600
          %v602 = vmul.f32 %v601, 0.6931472
          %v603 = vadd.f32 %v572, 0.01
          %v604 = vlog2.pop %v603
          %v605 = vmul.f32 %v604, 0.6931472
          %v606 = vsub.f32 %v602, %v605
          %v607 = vand.u32 2147483647, %v606
          %v608 = vadd.f32 %v486, %v607
          %v609 = vadd.f32 %v526, 0.01
          %v610 = vlog2.pop %v609
          %v611 = vmul.f32 %v610, 0.6931472
          %v612 = vadd.f32 %v561, 0.01
          %v613 = vlog2.pop %v612
          %v614 = vmul.f32 %v613, 0.6931472
          %v615 = vsub.f32 %v611, %v614
          %v616 = vand.u32 2147483647, %v615
          %v617 = vadd.f32 %v596, %v616
          %v618 = vsub.f32 %v536, %v567
          %v619 = vand.u32 2147483647, %v618
          %v620 = vadd.f32 %v599, %v619
          %v621 = vadd.f32 %v546, 0.01
          %v622 = vlog2.pop %v621
          %v623 = vmul.f32 %v622, 0.6931472
          %v624 = vadd.f32 %v575, 0.01
          %v625 = vlog2.pop %v624
          %v626 = vmul.f32 %v625, 0.6931472
          %v627 = vsub.f32 %v623, %v626
          %v628 = vand.u32 2147483647, %v627
          %v629 = vadd.f32 %v608, %v628
          %v630 = vadd.f32 %v531, 0.01
          %v631 = vlog2.pop %v630
          %v632 = vmul.f32 %v631, 0.6931472
          %v633 = vadd.f32 %v563, 0.01
          %v634 = vlog2.pop %v633
          %v635 = vmul.f32 %v634, 0.6931472
          %v636 = vsub.f32 %v632, %v635
          %v637 = vand.u32 2147483647, %v636
          %v638 = vadd.f32 %v617, %v637
          %v639 = vsub.f32 %v536, %v569
          %v640 = vand.u32 2147483647, %v639
          %v641 = vadd.f32 %v620, %v640
          %v642 = vadd.f32 %v551, 0.01
          %v643 = vlog2.pop %v642
          %v644 = vmul.f32 %v643, 0.6931472
          %v645 = vadd.f32 %v578, 0.01
          %v646 = vlog2.pop %v645
          %v647 = vmul.f32 %v646, 0.6931472
          %v648 = vsub.f32 %v644, %v647
          %v649 = vand.u32 2147483647, %v648
          %v650 = vadd.f32 %v629, %v649
          %v651 = vmax.f32 %v536, 0.001
          %v652 = vmul.f32 %v651, %v651
          %v653 = vmul.f32 %v652, %v652
          %v654 = vmul.f32 %v652, 0.5
          %v655 = vsub.f32 1.0, %v654
          %v656 = vsub.f32 1.0, %v541
          %v657 = vsub.f32 1.0, %v546
          %v658 = vsub.f32 1.0, %v551
          %v659 = vmul.f32 %v521, %v656
          %v660 = vmul.f32 %v659, 0.31830987
          %v661 = vmul.f32 %v526, %v657
          %v662 = vmul.f32 %v661, 0.31830987
          %v663 = vmul.f32 %v531, %v658
          %v664 = vmul.f32 %v663, 0.31830987
          %v665 = vmul.f32 %v553, %v553
          %v666 = vmul.f32 %v555, %v555
          %v667 = vadd.f32 %v665, %v666
          %v668 = vmul.f32 %v557, %v557
          %v669 = vadd.f32 %v667, %v668
          %v670 = vadd.f32 %v669, 1e-12
          %v671 = vrsqrt.pop %v670
          %v672 = vmul.f32 %v553, %v671
          %v673 = vmul.f32 %v555, %v671
          %v674 = vmul.f32 %v557, %v671
          %v675 = vmax.f32 %v565, 0.001
          %v676 = vmul.f32 %v675, %v675
          %v677 = vmul.f32 %v676, %v676
          %v678 = vmul.f32 %v676, 0.5
          %v679 = vsub.f32 1.0, %v678
          %v680 = vsub.f32 1.0, %v572
          %v681 = vsub.f32 1.0, %v575
          %v682 = vsub.f32 1.0, %v578
          %v683 = vmul.f32 %v559, %v680
          %v684 = vmul.f32 %v683, 0.31830987
          %v685 = vmul.f32 %v561, %v681
          %v686 = vmul.f32 %v685, 0.31830987
          %v687 = vmul.f32 %v563, %v682
          %v688 = vmul.f32 %v687, 0.31830987
          %v689 = vstv %s322
          %v690 = vsub.f32 %v689, %v504
          %v691 = vstv %s324
          %v692 = vsub.f32 %v691, %v500
          %v693 = vmul.f32 %v690, %v690
          %v694 = vmul.f32 %v692, %v692
          %v695 = vadd.f32 %v693, %v694
          %s696 = smul.f32 %s326, %s326
          %v697 = vstv %s696
          %v698 = vadd.f32 %v695, %v697
          %v699 = vadd.f32 %v698, 1e-12
          %v700 = vrsqrt.pop %v699
          %v701 = vmul.f32 %v690, %v700
          %v702 = vmul.f32 %v692, %v700
          %v703 = vstv %s326
          %v704 = vmul.f32 %v703, %v700
          %v705 = vstv %s316
          %v706 = vsub.f32 %v705, %v504
          %v707 = vstv %s318
          %v708 = vsub.f32 %v707, %v500
          %v709 = vmul.f32 %v706, %v706
          %v710 = vmul.f32 %v708, %v708
          %v711 = vadd.f32 %v709, %v710
          %s712 = smul.f32 %s320, %s320
          %v713 = vstv %s712
          %v714 = vadd.f32 %v711, %v713
          %v715 = vadd.f32 %v714, 1e-12
          %v716 = vrsqrt.pop %v715
          %v717 = vmul.f32 %v706, %v716
          %v718 = vmul.f32 %v708, %v716
          %v719 = vstv %s320
          %v720 = vmul.f32 %v719, %v716
          %v721 = vadd.f32 %v701, %v717
          %v722 = vadd.f32 %v702, %v718
          %v723 = vadd.f32 %v704, %v720
          %v724 = vmul.f32 %v721, %v721
          %v725 = vmul.f32 %v722, %v722
          %v726 = vadd.f32 %v724, %v725
          %v727 = vmul.f32 %v723, %v723
          %v728 = vadd.f32 %v726, %v727
          %v729 = vadd.f32 %v728, 1e-12
          %v730 = vrsqrt.pop %v729
          %v731 = vmul.f32 %v721, %v730
          %v732 = vmul.f32 %v722, %v730
          %v733 = vmul.f32 %v723, %v730
          %v734 = vmul.f32 %v717, %v731
          %v735 = vmul.f32 %v718, %v732
          %v736 = vadd.f32 %v734, %v735
          %v737 = vmul.f32 %v720, %v733
          %v738 = vadd.f32 %v736, %v737
          %v739 = vmax.f32 %v738, 0.001
          %v740 = vsub.f32 1.0, %v739
          %v741 = vmul.f32 %v740, %v740
          %v742 = vmul.f32 %v741, %v741
          %v743 = vmul.f32 %v742, %v740
          %v744 = vmul.f32 %v700, %v700
          %v745 = vstv %s328
          %v746 = vmul.f32 %v745, %v744
          %v747 = vstv %s330
          %v748 = vmul.f32 %v747, %v744
          %v749 = vstv %s332
          %v750 = vmul.f32 %v749, %v744
          %v751 = vmul.f32 %v515, %v701
          %v752 = vmul.f32 %v516, %v702
          %v753 = vadd.f32 %v751, %v752
          %v754 = vmul.f32 %v514, %v704
          %v755 = vadd.f32 %v753, %v754
          %v756 = vmax.f32 %v755, 0.001
          %v757 = vmul.f32 %v515, %v717
          %v758 = vmul.f32 %v516, %v718
          %v759 = vadd.f32 %v757, %v758
          %v760 = vmul.f32 %v514, %v720
          %v761 = vadd.f32 %v759, %v760
          %v762 = vmax.f32 %v761, 0.001
          %v763 = vmul.f32 %v515, %v731
          %v764 = vmul.f32 %v516, %v732
          %v765 = vadd.f32 %v763, %v764
          %v766 = vmul.f32 %v514, %v733
          %v767 = vadd.f32 %v765, %v766
          %v768 = vmax.f32 %v767, 0.001
          %v769 = vmul.f32 %v768, %v768
          %v770 = vsub.f32 %v653, 1.0
          %v771 = vmul.f32 %v769, %v770
          %v772 = vadd.f32 %v771, 1.0
          %v773 = vmul.f32 %v756, %v655
          %v774 = vadd.f32 %v773, %v654
          %v775 = vmul.f32 %v762, %v655
          %v776 = vadd.f32 %v775, %v654
          %v777 = vmul.f32 %v653, 0.25
          %v778 = vmul.f32 %v772, 3.1415927
          %v779 = vmul.f32 %v778, %v772
          %v780 = vmul.f32 %v779, %v774
          %v781 = vmul.f32 %v780, %v776
          %v782 = vrcp.pop %v781
          %v783 = vmul.f32 %v777, %v782
          %v784 = vmul.f32 %v656, %v743
          %v785 = vadd.f32 %v541, %v784
          %v786 = vmul.f32 %v783, %v785
          %v787 = vadd.f32 %v660, %v786
          %v788 = vmul.f32 %v746, %v756
          %v789 = vmul.f32 %v787, %v788
          %v790 = vmax.f32 %v789, 0.0
          %v791 = vmul.f32 %v657, %v743
          %v792 = vadd.f32 %v546, %v791
          %v793 = vmul.f32 %v783, %v792
          %v794 = vadd.f32 %v662, %v793
          %v795 = vmul.f32 %v748, %v756
          %v796 = vmul.f32 %v794, %v795
          %v797 = vmax.f32 %v796, 0.0
          %v798 = vmul.f32 %v658, %v743
          %v799 = vadd.f32 %v551, %v798
          %v800 = vmul.f32 %v783, %v799
          %v801 = vadd.f32 %v664, %v800
          %v802 = vmul.f32 %v750, %v756
          %v803 = vmul.f32 %v801, %v802
          %v804 = vmax.f32 %v803, 0.0
          %v805 = vmul.f32 %v672, %v701
          %v806 = vmul.f32 %v673, %v702
          %v807 = vadd.f32 %v805, %v806
          %v808 = vmul.f32 %v674, %v704
          %v809 = vadd.f32 %v807, %v808
          %v810 = vmax.f32 %v809, 0.001
          %v811 = vmul.f32 %v672, %v717
          %v812 = vmul.f32 %v673, %v718
          %v813 = vadd.f32 %v811, %v812
          %v814 = vmul.f32 %v674, %v720
          %v815 = vadd.f32 %v813, %v814
          %v816 = vmax.f32 %v815, 0.001
          %v817 = vmul.f32 %v672, %v731
          %v818 = vmul.f32 %v673, %v732
          %v819 = vadd.f32 %v817, %v818
          %v820 = vmul.f32 %v674, %v733
          %v821 = vadd.f32 %v819, %v820
          %v822 = vmax.f32 %v821, 0.001
          %v823 = vmul.f32 %v822, %v822
          %v824 = vsub.f32 %v677, 1.0
          %v825 = vmul.f32 %v823, %v824
          %v826 = vadd.f32 %v825, 1.0
          %v827 = vmul.f32 %v810, %v679
          %v828 = vadd.f32 %v827, %v678
          %v829 = vmul.f32 %v816, %v679
          %v830 = vadd.f32 %v829, %v678
          %v831 = vmul.f32 %v677, 0.25
          %v832 = vmul.f32 %v826, 3.1415927
          %v833 = vmul.f32 %v832, %v826
          %v834 = vmul.f32 %v833, %v828
          %v835 = vmul.f32 %v834, %v830
          %v836 = vrcp.pop %v835
          %v837 = vmul.f32 %v831, %v836
          %v838 = vmul.f32 %v680, %v743
          %v839 = vadd.f32 %v572, %v838
          %v840 = vmul.f32 %v837, %v839
          %v841 = vadd.f32 %v684, %v840
          %v842 = vmul.f32 %v746, %v810
          %v843 = vmul.f32 %v841, %v842
          %v844 = vmax.f32 %v843, 0.0
          %v845 = vmul.f32 %v681, %v743
          %v846 = vadd.f32 %v575, %v845
          %v847 = vmul.f32 %v837, %v846
          %v848 = vadd.f32 %v686, %v847
          %v849 = vmul.f32 %v748, %v810
          %v850 = vmul.f32 %v848, %v849
          %v851 = vmax.f32 %v850, 0.0
          %v852 = vmul.f32 %v682, %v743
          %v853 = vadd.f32 %v578, %v852
          %v854 = vmul.f32 %v837, %v853
          %v855 = vadd.f32 %v688, %v854
          %v856 = vmul.f32 %v750, %v810
          %v857 = vmul.f32 %v855, %v856
          %v858 = vmax.f32 %v857, 0.0
          %v859 = vadd.f32 %v790, 0.1
          %v860 = vlog2.pop %v859
          %v861 = vmul.f32 %v860, 0.6931472
          %v862 = vadd.f32 %v844, 0.1
          %v863 = vlog2.pop %v862
          %v864 = vmul.f32 %v863, 0.6931472
          %v865 = vsub.f32 %v861, %v864
          %v866 = vand.u32 2147483647, %v865
          %v867 = vadd.f32 %v487, %v866
          %v868 = vadd.f32 %v797, 0.1
          %v869 = vlog2.pop %v868
          %v870 = vmul.f32 %v869, 0.6931472
          %v871 = vadd.f32 %v851, 0.1
          %v872 = vlog2.pop %v871
          %v873 = vmul.f32 %v872, 0.6931472
          %v874 = vsub.f32 %v870, %v873
          %v875 = vand.u32 2147483647, %v874
          %v876 = vadd.f32 %v867, %v875
          %v877 = vadd.f32 %v804, 0.1
          %v878 = vlog2.pop %v877
          %v879 = vmul.f32 %v878, 0.6931472
          %v880 = vadd.f32 %v858, 0.1
          %v881 = vlog2.pop %v880
          %v882 = vmul.f32 %v881, 0.6931472
          %v883 = vsub.f32 %v879, %v882
          %v884 = vand.u32 2147483647, %v883
          %v885 = vadd.f32 %v876, %v884
          %v886 = vstv %s340
          %v887 = vsub.f32 %v886, %v504
          %v888 = vstv %s342
          %v889 = vsub.f32 %v888, %v500
          %v890 = vmul.f32 %v887, %v887
          %v891 = vmul.f32 %v889, %v889
          %v892 = vadd.f32 %v890, %v891
          %s893 = smul.f32 %s344, %s344
          %v894 = vstv %s893
          %v895 = vadd.f32 %v892, %v894
          %v896 = vadd.f32 %v895, 1e-12
          %v897 = vrsqrt.pop %v896
          %v898 = vmul.f32 %v887, %v897
          %v899 = vmul.f32 %v889, %v897
          %v900 = vstv %s344
          %v901 = vmul.f32 %v900, %v897
          %v902 = vstv %s334
          %v903 = vsub.f32 %v902, %v504
          %v904 = vstv %s336
          %v905 = vsub.f32 %v904, %v500
          %v906 = vmul.f32 %v903, %v903
          %v907 = vmul.f32 %v905, %v905
          %v908 = vadd.f32 %v906, %v907
          %s909 = smul.f32 %s338, %s338
          %v910 = vstv %s909
          %v911 = vadd.f32 %v908, %v910
          %v912 = vadd.f32 %v911, 1e-12
          %v913 = vrsqrt.pop %v912
          %v914 = vmul.f32 %v903, %v913
          %v915 = vmul.f32 %v905, %v913
          %v916 = vstv %s338
          %v917 = vmul.f32 %v916, %v913
          %v918 = vadd.f32 %v898, %v914
          %v919 = vadd.f32 %v899, %v915
          %v920 = vadd.f32 %v901, %v917
          %v921 = vmul.f32 %v918, %v918
          %v922 = vmul.f32 %v919, %v919
          %v923 = vadd.f32 %v921, %v922
          %v924 = vmul.f32 %v920, %v920
          %v925 = vadd.f32 %v923, %v924
          %v926 = vadd.f32 %v925, 1e-12
          %v927 = vrsqrt.pop %v926
          %v928 = vmul.f32 %v918, %v927
          %v929 = vmul.f32 %v919, %v927
          %v930 = vmul.f32 %v920, %v927
          %v931 = vmul.f32 %v914, %v928
          %v932 = vmul.f32 %v915, %v929
          %v933 = vadd.f32 %v931, %v932
          %v934 = vmul.f32 %v917, %v930
          %v935 = vadd.f32 %v933, %v934
          %v936 = vmax.f32 %v935, 0.001
          %v937 = vsub.f32 1.0, %v936
          %v938 = vmul.f32 %v937, %v937
          %v939 = vmul.f32 %v938, %v938
          %v940 = vmul.f32 %v939, %v937
          %v941 = vmul.f32 %v897, %v897
          %v942 = vstv %s346
          %v943 = vmul.f32 %v942, %v941
          %v944 = vstv %s348
          %v945 = vmul.f32 %v944, %v941
          %v946 = vstv %s350
          %v947 = vmul.f32 %v946, %v941
          %v948 = vmul.f32 %v515, %v898
          %v949 = vmul.f32 %v516, %v899
          %v950 = vadd.f32 %v948, %v949
          %v951 = vmul.f32 %v514, %v901
          %v952 = vadd.f32 %v950, %v951
          %v953 = vmax.f32 %v952, 0.001
          %v954 = vmul.f32 %v515, %v914
          %v955 = vmul.f32 %v516, %v915
          %v956 = vadd.f32 %v954, %v955
          %v957 = vmul.f32 %v514, %v917
          %v958 = vadd.f32 %v956, %v957
          %v959 = vmax.f32 %v958, 0.001
          %v960 = vmul.f32 %v515, %v928
          %v961 = vmul.f32 %v516, %v929
          %v962 = vadd.f32 %v960, %v961
          %v963 = vmul.f32 %v514, %v930
          %v964 = vadd.f32 %v962, %v963
          %v965 = vmax.f32 %v964, 0.001
          %v966 = vmul.f32 %v965, %v965
          %v967 = vmul.f32 %v966, %v770
          %v968 = vadd.f32 %v967, 1.0
          %v969 = vmul.f32 %v953, %v655
          %v970 = vadd.f32 %v969, %v654
          %v971 = vmul.f32 %v959, %v655
          %v972 = vadd.f32 %v971, %v654
          %v973 = vmul.f32 %v968, 3.1415927
          %v974 = vmul.f32 %v973, %v968
          %v975 = vmul.f32 %v974, %v970
          %v976 = vmul.f32 %v975, %v972
          %v977 = vrcp.pop %v976
          %v978 = vmul.f32 %v777, %v977
          %v979 = vmul.f32 %v656, %v940
          %v980 = vadd.f32 %v541, %v979
          %v981 = vmul.f32 %v978, %v980
          %v982 = vadd.f32 %v660, %v981
          %v983 = vmul.f32 %v943, %v953
          %v984 = vmul.f32 %v982, %v983
          %v985 = vmax.f32 %v984, 0.0
          %v986 = vmul.f32 %v657, %v940
          %v987 = vadd.f32 %v546, %v986
          %v988 = vmul.f32 %v978, %v987
          %v989 = vadd.f32 %v662, %v988
          %v990 = vmul.f32 %v945, %v953
          %v991 = vmul.f32 %v989, %v990
          %v992 = vmax.f32 %v991, 0.0
          %v993 = vmul.f32 %v658, %v940
          %v994 = vadd.f32 %v551, %v993
          %v995 = vmul.f32 %v978, %v994
          %v996 = vadd.f32 %v664, %v995
          %v997 = vmul.f32 %v947, %v953
          %v998 = vmul.f32 %v996, %v997
          %v999 = vmax.f32 %v998, 0.0
          %v1000 = vmul.f32 %v672, %v898
          %v1001 = vmul.f32 %v673, %v899
          %v1002 = vadd.f32 %v1000, %v1001
          %v1003 = vmul.f32 %v674, %v901
          %v1004 = vadd.f32 %v1002, %v1003
          %v1005 = vmax.f32 %v1004, 0.001
          %v1006 = vmul.f32 %v672, %v914
          %v1007 = vmul.f32 %v673, %v915
          %v1008 = vadd.f32 %v1006, %v1007
          %v1009 = vmul.f32 %v674, %v917
          %v1010 = vadd.f32 %v1008, %v1009
          %v1011 = vmax.f32 %v1010, 0.001
          %v1012 = vmul.f32 %v672, %v928
          %v1013 = vmul.f32 %v673, %v929
          %v1014 = vadd.f32 %v1012, %v1013
          %v1015 = vmul.f32 %v674, %v930
          %v1016 = vadd.f32 %v1014, %v1015
          %v1017 = vmax.f32 %v1016, 0.001
          %v1018 = vmul.f32 %v1017, %v1017
          %v1019 = vmul.f32 %v1018, %v824
          %v1020 = vadd.f32 %v1019, 1.0
          %v1021 = vmul.f32 %v1005, %v679
          %v1022 = vadd.f32 %v1021, %v678
          %v1023 = vmul.f32 %v1011, %v679
          %v1024 = vadd.f32 %v1023, %v678
          %v1025 = vmul.f32 %v1020, 3.1415927
          %v1026 = vmul.f32 %v1025, %v1020
          %v1027 = vmul.f32 %v1026, %v1022
          %v1028 = vmul.f32 %v1027, %v1024
          %v1029 = vrcp.pop %v1028
          %v1030 = vmul.f32 %v831, %v1029
          %v1031 = vmul.f32 %v680, %v940
          %v1032 = vadd.f32 %v572, %v1031
          %v1033 = vmul.f32 %v1030, %v1032
          %v1034 = vadd.f32 %v684, %v1033
          %v1035 = vmul.f32 %v943, %v1005
          %v1036 = vmul.f32 %v1034, %v1035
          %v1037 = vmax.f32 %v1036, 0.0
          %v1038 = vmul.f32 %v681, %v940
          %v1039 = vadd.f32 %v575, %v1038
          %v1040 = vmul.f32 %v1030, %v1039
          %v1041 = vadd.f32 %v686, %v1040
          %v1042 = vmul.f32 %v945, %v1005
          %v1043 = vmul.f32 %v1041, %v1042
          %v1044 = vmax.f32 %v1043, 0.0
          %v1045 = vmul.f32 %v682, %v940
          %v1046 = vadd.f32 %v578, %v1045
          %v1047 = vmul.f32 %v1030, %v1046
          %v1048 = vadd.f32 %v688, %v1047
          %v1049 = vmul.f32 %v947, %v1005
          %v1050 = vmul.f32 %v1048, %v1049
          %v1051 = vmax.f32 %v1050, 0.0
          %v1052 = vadd.f32 %v985, 0.1
          %v1053 = vlog2.pop %v1052
          %v1054 = vmul.f32 %v1053, 0.6931472
          %v1055 = vadd.f32 %v1037, 0.1
          %v1056 = vlog2.pop %v1055
          %v1057 = vmul.f32 %v1056, 0.6931472
          %v1058 = vsub.f32 %v1054, %v1057
          %v1059 = vand.u32 2147483647, %v1058
          %v1060 = vadd.f32 %v885, %v1059
          %v1061 = vadd.f32 %v992, 0.1
          %v1062 = vlog2.pop %v1061
          %v1063 = vmul.f32 %v1062, 0.6931472
          %v1064 = vadd.f32 %v1044, 0.1
          %v1065 = vlog2.pop %v1064
          %v1066 = vmul.f32 %v1065, 0.6931472
          %v1067 = vsub.f32 %v1063, %v1066
          %v1068 = vand.u32 2147483647, %v1067
          %v1069 = vadd.f32 %v1060, %v1068
          %v1070 = vadd.f32 %v999, 0.1
          %v1071 = vlog2.pop %v1070
          %v1072 = vmul.f32 %v1071, 0.6931472
          %v1073 = vadd.f32 %v1051, 0.1
          %v1074 = vlog2.pop %v1073
          %v1075 = vmul.f32 %v1074, 0.6931472
          %v1076 = vsub.f32 %v1072, %v1075
          %v1077 = vand.u32 2147483647, %v1076
          %v1078 = vadd.f32 %v1069, %v1077
          %v1079 = vstv %s358
          %v1080 = vsub.f32 %v1079, %v504
          %v1081 = vstv %s360
          %v1082 = vsub.f32 %v1081, %v500
          %v1083 = vmul.f32 %v1080, %v1080
          %v1084 = vmul.f32 %v1082, %v1082
          %v1085 = vadd.f32 %v1083, %v1084
          %s1086 = smul.f32 %s362, %s362
          %v1087 = vstv %s1086
          %v1088 = vadd.f32 %v1085, %v1087
          %v1089 = vadd.f32 %v1088, 1e-12
          %v1090 = vrsqrt.pop %v1089
          %v1091 = vmul.f32 %v1080, %v1090
          %v1092 = vmul.f32 %v1082, %v1090
          %v1093 = vstv %s362
          %v1094 = vmul.f32 %v1093, %v1090
          %v1095 = vstv %s352
          %v1096 = vsub.f32 %v1095, %v504
          %v1097 = vstv %s354
          %v1098 = vsub.f32 %v1097, %v500
          %v1099 = vmul.f32 %v1096, %v1096
          %v1100 = vmul.f32 %v1098, %v1098
          %v1101 = vadd.f32 %v1099, %v1100
          %s1102 = smul.f32 %s356, %s356
          %v1103 = vstv %s1102
          %v1104 = vadd.f32 %v1101, %v1103
          %v1105 = vadd.f32 %v1104, 1e-12
          %v1106 = vrsqrt.pop %v1105
          %v1107 = vmul.f32 %v1096, %v1106
          %v1108 = vmul.f32 %v1098, %v1106
          %v1109 = vstv %s356
          %v1110 = vmul.f32 %v1109, %v1106
          %v1111 = vadd.f32 %v1091, %v1107
          %v1112 = vadd.f32 %v1092, %v1108
          %v1113 = vadd.f32 %v1094, %v1110
          %v1114 = vmul.f32 %v1111, %v1111
          %v1115 = vmul.f32 %v1112, %v1112
          %v1116 = vadd.f32 %v1114, %v1115
          %v1117 = vmul.f32 %v1113, %v1113
          %v1118 = vadd.f32 %v1116, %v1117
          %v1119 = vadd.f32 %v1118, 1e-12
          %v1120 = vrsqrt.pop %v1119
          %v1121 = vmul.f32 %v1111, %v1120
          %v1122 = vmul.f32 %v1112, %v1120
          %v1123 = vmul.f32 %v1113, %v1120
          %v1124 = vmul.f32 %v1107, %v1121
          %v1125 = vmul.f32 %v1108, %v1122
          %v1126 = vadd.f32 %v1124, %v1125
          %v1127 = vmul.f32 %v1110, %v1123
          %v1128 = vadd.f32 %v1126, %v1127
          %v1129 = vmax.f32 %v1128, 0.001
          %v1130 = vsub.f32 1.0, %v1129
          %v1131 = vmul.f32 %v1130, %v1130
          %v1132 = vmul.f32 %v1131, %v1131
          %v1133 = vmul.f32 %v1132, %v1130
          %v1134 = vmul.f32 %v1090, %v1090
          %v1135 = vstv %s364
          %v1136 = vmul.f32 %v1135, %v1134
          %v1137 = vstv %s366
          %v1138 = vmul.f32 %v1137, %v1134
          %v1139 = vstv %s368
          %v1140 = vmul.f32 %v1139, %v1134
          %v1141 = vmul.f32 %v515, %v1091
          %v1142 = vmul.f32 %v516, %v1092
          %v1143 = vadd.f32 %v1141, %v1142
          %v1144 = vmul.f32 %v514, %v1094
          %v1145 = vadd.f32 %v1143, %v1144
          %v1146 = vmax.f32 %v1145, 0.001
          %v1147 = vmul.f32 %v515, %v1107
          %v1148 = vmul.f32 %v516, %v1108
          %v1149 = vadd.f32 %v1147, %v1148
          %v1150 = vmul.f32 %v514, %v1110
          %v1151 = vadd.f32 %v1149, %v1150
          %v1152 = vmax.f32 %v1151, 0.001
          %v1153 = vmul.f32 %v515, %v1121
          %v1154 = vmul.f32 %v516, %v1122
          %v1155 = vadd.f32 %v1153, %v1154
          %v1156 = vmul.f32 %v514, %v1123
          %v1157 = vadd.f32 %v1155, %v1156
          %v1158 = vmax.f32 %v1157, 0.001
          %v1159 = vmul.f32 %v1158, %v1158
          %v1160 = vmul.f32 %v1159, %v770
          %v1161 = vadd.f32 %v1160, 1.0
          %v1162 = vmul.f32 %v1146, %v655
          %v1163 = vadd.f32 %v1162, %v654
          %v1164 = vmul.f32 %v1152, %v655
          %v1165 = vadd.f32 %v1164, %v654
          %v1166 = vmul.f32 %v1161, 3.1415927
          %v1167 = vmul.f32 %v1166, %v1161
          %v1168 = vmul.f32 %v1167, %v1163
          %v1169 = vmul.f32 %v1168, %v1165
          %v1170 = vrcp.pop %v1169
          %v1171 = vmul.f32 %v777, %v1170
          %v1172 = vmul.f32 %v656, %v1133
          %v1173 = vadd.f32 %v541, %v1172
          %v1174 = vmul.f32 %v1171, %v1173
          %v1175 = vadd.f32 %v660, %v1174
          %v1176 = vmul.f32 %v1136, %v1146
          %v1177 = vmul.f32 %v1175, %v1176
          %v1178 = vmax.f32 %v1177, 0.0
          %v1179 = vmul.f32 %v657, %v1133
          %v1180 = vadd.f32 %v546, %v1179
          %v1181 = vmul.f32 %v1171, %v1180
          %v1182 = vadd.f32 %v662, %v1181
          %v1183 = vmul.f32 %v1138, %v1146
          %v1184 = vmul.f32 %v1182, %v1183
          %v1185 = vmax.f32 %v1184, 0.0
          %v1186 = vmul.f32 %v658, %v1133
          %v1187 = vadd.f32 %v551, %v1186
          %v1188 = vmul.f32 %v1171, %v1187
          %v1189 = vadd.f32 %v664, %v1188
          %v1190 = vmul.f32 %v1140, %v1146
          %v1191 = vmul.f32 %v1189, %v1190
          %v1192 = vmax.f32 %v1191, 0.0
          %v1193 = vmul.f32 %v672, %v1091
          %v1194 = vmul.f32 %v673, %v1092
          %v1195 = vadd.f32 %v1193, %v1194
          %v1196 = vmul.f32 %v674, %v1094
          %v1197 = vadd.f32 %v1195, %v1196
          %v1198 = vmax.f32 %v1197, 0.001
          %v1199 = vmul.f32 %v672, %v1107
          %v1200 = vmul.f32 %v673, %v1108
          %v1201 = vadd.f32 %v1199, %v1200
          %v1202 = vmul.f32 %v674, %v1110
          %v1203 = vadd.f32 %v1201, %v1202
          %v1204 = vmax.f32 %v1203, 0.001
          %v1205 = vmul.f32 %v672, %v1121
          %v1206 = vmul.f32 %v673, %v1122
          %v1207 = vadd.f32 %v1205, %v1206
          %v1208 = vmul.f32 %v674, %v1123
          %v1209 = vadd.f32 %v1207, %v1208
          %v1210 = vmax.f32 %v1209, 0.001
          %v1211 = vmul.f32 %v1210, %v1210
          %v1212 = vmul.f32 %v1211, %v824
          %v1213 = vadd.f32 %v1212, 1.0
          %v1214 = vmul.f32 %v1198, %v679
          %v1215 = vadd.f32 %v1214, %v678
          %v1216 = vmul.f32 %v1204, %v679
          %v1217 = vadd.f32 %v1216, %v678
          %v1218 = vmul.f32 %v1213, 3.1415927
          %v1219 = vmul.f32 %v1218, %v1213
          %v1220 = vmul.f32 %v1219, %v1215
          %v1221 = vmul.f32 %v1220, %v1217
          %v1222 = vrcp.pop %v1221
          %v1223 = vmul.f32 %v831, %v1222
          %v1224 = vmul.f32 %v680, %v1133
          %v1225 = vadd.f32 %v572, %v1224
          %v1226 = vmul.f32 %v1223, %v1225
          %v1227 = vadd.f32 %v684, %v1226
          %v1228 = vmul.f32 %v1136, %v1198
          %v1229 = vmul.f32 %v1227, %v1228
          %v1230 = vmax.f32 %v1229, 0.0
          %v1231 = vmul.f32 %v681, %v1133
          %v1232 = vadd.f32 %v575, %v1231
          %v1233 = vmul.f32 %v1223, %v1232
          %v1234 = vadd.f32 %v686, %v1233
          %v1235 = vmul.f32 %v1138, %v1198
          %v1236 = vmul.f32 %v1234, %v1235
          %v1237 = vmax.f32 %v1236, 0.0
          %v1238 = vmul.f32 %v682, %v1133
          %v1239 = vadd.f32 %v578, %v1238
          %v1240 = vmul.f32 %v1223, %v1239
          %v1241 = vadd.f32 %v688, %v1240
          %v1242 = vmul.f32 %v1140, %v1198
          %v1243 = vmul.f32 %v1241, %v1242
          %v1244 = vmax.f32 %v1243, 0.0
          %v1245 = vadd.f32 %v1178, 0.1
          %v1246 = vlog2.pop %v1245
          %v1247 = vmul.f32 %v1246, 0.6931472
          %v1248 = vadd.f32 %v1230, 0.1
          %v1249 = vlog2.pop %v1248
          %v1250 = vmul.f32 %v1249, 0.6931472
          %v1251 = vsub.f32 %v1247, %v1250
          %v1252 = vand.u32 2147483647, %v1251
          %v1253 = vadd.f32 %v1078, %v1252
          %v1254 = vadd.f32 %v1185, 0.1
          %v1255 = vlog2.pop %v1254
          %v1256 = vmul.f32 %v1255, 0.6931472
          %v1257 = vadd.f32 %v1237, 0.1
          %v1258 = vlog2.pop %v1257
          %v1259 = vmul.f32 %v1258, 0.6931472
          %v1260 = vsub.f32 %v1256, %v1259
          %v1261 = vand.u32 2147483647, %v1260
          %v1262 = vadd.f32 %v1253, %v1261
          %v1263 = vadd.f32 %v1192, 0.1
          %v1264 = vlog2.pop %v1263
          %v1265 = vmul.f32 %v1264, 0.6931472
          %v1266 = vadd.f32 %v1244, 0.1
          %v1267 = vlog2.pop %v1266
          %v1268 = vmul.f32 %v1267, 0.6931472
          %v1269 = vsub.f32 %v1265, %v1268
          %v1270 = vand.u32 2147483647, %v1269
          %v1271 = vadd.f32 %v1262, %v1270
          %v1272 = vstv %s376
          %v1273 = vsub.f32 %v1272, %v504
          %v1274 = vstv %s378
          %v1275 = vsub.f32 %v1274, %v500
          %v1276 = vmul.f32 %v1273, %v1273
          %v1277 = vmul.f32 %v1275, %v1275
          %v1278 = vadd.f32 %v1276, %v1277
          %s1279 = smul.f32 %s380, %s380
          %v1280 = vstv %s1279
          %v1281 = vadd.f32 %v1278, %v1280
          %v1282 = vadd.f32 %v1281, 1e-12
          %v1283 = vrsqrt.pop %v1282
          %v1284 = vmul.f32 %v1273, %v1283
          %v1285 = vmul.f32 %v1275, %v1283
          %v1286 = vstv %s380
          %v1287 = vmul.f32 %v1286, %v1283
          %v1288 = vstv %s370
          %v1289 = vsub.f32 %v1288, %v504
          %v1290 = vstv %s372
          %v1291 = vsub.f32 %v1290, %v500
          %v1292 = vmul.f32 %v1289, %v1289
          %v1293 = vmul.f32 %v1291, %v1291
          %v1294 = vadd.f32 %v1292, %v1293
          %s1295 = smul.f32 %s374, %s374
          %v1296 = vstv %s1295
          %v1297 = vadd.f32 %v1294, %v1296
          %v1298 = vadd.f32 %v1297, 1e-12
          %v1299 = vrsqrt.pop %v1298
          %v1300 = vmul.f32 %v1289, %v1299
          %v1301 = vmul.f32 %v1291, %v1299
          %v1302 = vstv %s374
          %v1303 = vmul.f32 %v1302, %v1299
          %v1304 = vadd.f32 %v1284, %v1300
          %v1305 = vadd.f32 %v1285, %v1301
          %v1306 = vadd.f32 %v1287, %v1303
          %v1307 = vmul.f32 %v1304, %v1304
          %v1308 = vmul.f32 %v1305, %v1305
          %v1309 = vadd.f32 %v1307, %v1308
          %v1310 = vmul.f32 %v1306, %v1306
          %v1311 = vadd.f32 %v1309, %v1310
          %v1312 = vadd.f32 %v1311, 1e-12
          %v1313 = vrsqrt.pop %v1312
          %v1314 = vmul.f32 %v1304, %v1313
          %v1315 = vmul.f32 %v1305, %v1313
          %v1316 = vmul.f32 %v1306, %v1313
          %v1317 = vmul.f32 %v1300, %v1314
          %v1318 = vmul.f32 %v1301, %v1315
          %v1319 = vadd.f32 %v1317, %v1318
          %v1320 = vmul.f32 %v1303, %v1316
          %v1321 = vadd.f32 %v1319, %v1320
          %v1322 = vmax.f32 %v1321, 0.001
          %v1323 = vsub.f32 1.0, %v1322
          %v1324 = vmul.f32 %v1323, %v1323
          %v1325 = vmul.f32 %v1324, %v1324
          %v1326 = vmul.f32 %v1325, %v1323
          %v1327 = vmul.f32 %v1283, %v1283
          %v1328 = vstv %s382
          %v1329 = vmul.f32 %v1328, %v1327
          %v1330 = vstv %s384
          %v1331 = vmul.f32 %v1330, %v1327
          %v1332 = vstv %s386
          %v1333 = vmul.f32 %v1332, %v1327
          %v1334 = vmul.f32 %v515, %v1284
          %v1335 = vmul.f32 %v516, %v1285
          %v1336 = vadd.f32 %v1334, %v1335
          %v1337 = vmul.f32 %v514, %v1287
          %v1338 = vadd.f32 %v1336, %v1337
          %v1339 = vmax.f32 %v1338, 0.001
          %v1340 = vmul.f32 %v515, %v1300
          %v1341 = vmul.f32 %v516, %v1301
          %v1342 = vadd.f32 %v1340, %v1341
          %v1343 = vmul.f32 %v514, %v1303
          %v1344 = vadd.f32 %v1342, %v1343
          %v1345 = vmax.f32 %v1344, 0.001
          %v1346 = vmul.f32 %v515, %v1314
          %v1347 = vmul.f32 %v516, %v1315
          %v1348 = vadd.f32 %v1346, %v1347
          %v1349 = vmul.f32 %v514, %v1316
          %v1350 = vadd.f32 %v1348, %v1349
          %v1351 = vmax.f32 %v1350, 0.001
          %v1352 = vmul.f32 %v1351, %v1351
          %v1353 = vmul.f32 %v1352, %v770
          %v1354 = vadd.f32 %v1353, 1.0
          %v1355 = vmul.f32 %v1339, %v655
          %v1356 = vadd.f32 %v1355, %v654
          %v1357 = vmul.f32 %v1345, %v655
          %v1358 = vadd.f32 %v1357, %v654
          %v1359 = vmul.f32 %v1354, 3.1415927
          %v1360 = vmul.f32 %v1359, %v1354
          %v1361 = vmul.f32 %v1360, %v1356
          %v1362 = vmul.f32 %v1361, %v1358
          %v1363 = vrcp.pop %v1362
          %v1364 = vmul.f32 %v777, %v1363
          %v1365 = vmul.f32 %v656, %v1326
          %v1366 = vadd.f32 %v541, %v1365
          %v1367 = vmul.f32 %v1364, %v1366
          %v1368 = vadd.f32 %v660, %v1367
          %v1369 = vmul.f32 %v1329, %v1339
          %v1370 = vmul.f32 %v1368, %v1369
          %v1371 = vmax.f32 %v1370, 0.0
          %v1372 = vmul.f32 %v657, %v1326
          %v1373 = vadd.f32 %v546, %v1372
          %v1374 = vmul.f32 %v1364, %v1373
          %v1375 = vadd.f32 %v662, %v1374
          %v1376 = vmul.f32 %v1331, %v1339
          %v1377 = vmul.f32 %v1375, %v1376
          %v1378 = vmax.f32 %v1377, 0.0
          %v1379 = vmul.f32 %v658, %v1326
          %v1380 = vadd.f32 %v551, %v1379
          %v1381 = vmul.f32 %v1364, %v1380
          %v1382 = vadd.f32 %v664, %v1381
          %v1383 = vmul.f32 %v1333, %v1339
          %v1384 = vmul.f32 %v1382, %v1383
          %v1385 = vmax.f32 %v1384, 0.0
          %v1386 = vmul.f32 %v672, %v1284
          %v1387 = vmul.f32 %v673, %v1285
          %v1388 = vadd.f32 %v1386, %v1387
          %v1389 = vmul.f32 %v674, %v1287
          %v1390 = vadd.f32 %v1388, %v1389
          %v1391 = vmax.f32 %v1390, 0.001
          %v1392 = vmul.f32 %v672, %v1300
          %v1393 = vmul.f32 %v673, %v1301
          %v1394 = vadd.f32 %v1392, %v1393
          %v1395 = vmul.f32 %v674, %v1303
          %v1396 = vadd.f32 %v1394, %v1395
          %v1397 = vmax.f32 %v1396, 0.001
          %v1398 = vmul.f32 %v672, %v1314
          %v1399 = vmul.f32 %v673, %v1315
          %v1400 = vadd.f32 %v1398, %v1399
          %v1401 = vmul.f32 %v674, %v1316
          %v1402 = vadd.f32 %v1400, %v1401
          %v1403 = vmax.f32 %v1402, 0.001
          %v1404 = vmul.f32 %v1403, %v1403
          %v1405 = vmul.f32 %v1404, %v824
          %v1406 = vadd.f32 %v1405, 1.0
          %v1407 = vmul.f32 %v1391, %v679
          %v1408 = vadd.f32 %v1407, %v678
          %v1409 = vmul.f32 %v1397, %v679
          %v1410 = vadd.f32 %v1409, %v678
          %v1411 = vmul.f32 %v1406, 3.1415927
          %v1412 = vmul.f32 %v1411, %v1406
          %v1413 = vmul.f32 %v1412, %v1408
          %v1414 = vmul.f32 %v1413, %v1410
          %v1415 = vrcp.pop %v1414
          %v1416 = vmul.f32 %v831, %v1415
          %v1417 = vmul.f32 %v680, %v1326
          %v1418 = vadd.f32 %v572, %v1417
          %v1419 = vmul.f32 %v1416, %v1418
          %v1420 = vadd.f32 %v684, %v1419
          %v1421 = vmul.f32 %v1329, %v1391
          %v1422 = vmul.f32 %v1420, %v1421
          %v1423 = vmax.f32 %v1422, 0.0
          %v1424 = vmul.f32 %v681, %v1326
          %v1425 = vadd.f32 %v575, %v1424
          %v1426 = vmul.f32 %v1416, %v1425
          %v1427 = vadd.f32 %v686, %v1426
          %v1428 = vmul.f32 %v1331, %v1391
          %v1429 = vmul.f32 %v1427, %v1428
          %v1430 = vmax.f32 %v1429, 0.0
          %v1431 = vmul.f32 %v682, %v1326
          %v1432 = vadd.f32 %v578, %v1431
          %v1433 = vmul.f32 %v1416, %v1432
          %v1434 = vadd.f32 %v688, %v1433
          %v1435 = vmul.f32 %v1333, %v1391
          %v1436 = vmul.f32 %v1434, %v1435
          %v1437 = vmax.f32 %v1436, 0.0
          %v1438 = vadd.f32 %v1371, 0.1
          %v1439 = vlog2.pop %v1438
          %v1440 = vmul.f32 %v1439, 0.6931472
          %v1441 = vadd.f32 %v1423, 0.1
          %v1442 = vlog2.pop %v1441
          %v1443 = vmul.f32 %v1442, 0.6931472
          %v1444 = vsub.f32 %v1440, %v1443
          %v1445 = vand.u32 2147483647, %v1444
          %v1446 = vadd.f32 %v1271, %v1445
          %v1447 = vadd.f32 %v1378, 0.1
          %v1448 = vlog2.pop %v1447
          %v1449 = vmul.f32 %v1448, 0.6931472
          %v1450 = vadd.f32 %v1430, 0.1
          %v1451 = vlog2.pop %v1450
          %v1452 = vmul.f32 %v1451, 0.6931472
          %v1453 = vsub.f32 %v1449, %v1452
          %v1454 = vand.u32 2147483647, %v1453
          %v1455 = vadd.f32 %v1446, %v1454
          %v1456 = vadd.f32 %v1385, 0.1
          %v1457 = vlog2.pop %v1456
          %v1458 = vmul.f32 %v1457, 0.6931472
          %v1459 = vadd.f32 %v1437, 0.1
          %v1460 = vlog2.pop %v1459
          %v1461 = vmul.f32 %v1460, 0.6931472
          %v1462 = vsub.f32 %v1458, %v1461
          %v1463 = vand.u32 2147483647, %v1462
          %v1464 = vadd.f32 %v1455, %v1463
          %v1465 = vstv %s394
          %v1466 = vsub.f32 %v1465, %v504
          %v1467 = vstv %s396
          %v1468 = vsub.f32 %v1467, %v500
          %v1469 = vmul.f32 %v1466, %v1466
          %v1470 = vmul.f32 %v1468, %v1468
          %v1471 = vadd.f32 %v1469, %v1470
          %s1472 = smul.f32 %s398, %s398
          %v1473 = vstv %s1472
          %v1474 = vadd.f32 %v1471, %v1473
          %v1475 = vadd.f32 %v1474, 1e-12
          %v1476 = vrsqrt.pop %v1475
          %v1477 = vmul.f32 %v1466, %v1476
          %v1478 = vmul.f32 %v1468, %v1476
          %v1479 = vstv %s398
          %v1480 = vmul.f32 %v1479, %v1476
          %v1481 = vstv %s388
          %v1482 = vsub.f32 %v1481, %v504
          %v1483 = vstv %s390
          %v1484 = vsub.f32 %v1483, %v500
          %v1485 = vmul.f32 %v1482, %v1482
          %v1486 = vmul.f32 %v1484, %v1484
          %v1487 = vadd.f32 %v1485, %v1486
          %s1488 = smul.f32 %s392, %s392
          %v1489 = vstv %s1488
          %v1490 = vadd.f32 %v1487, %v1489
          %v1491 = vadd.f32 %v1490, 1e-12
          %v1492 = vrsqrt.pop %v1491
          %v1493 = vmul.f32 %v1482, %v1492
          %v1494 = vmul.f32 %v1484, %v1492
          %v1495 = vstv %s392
          %v1496 = vmul.f32 %v1495, %v1492
          %v1497 = vadd.f32 %v1477, %v1493
          %v1498 = vadd.f32 %v1478, %v1494
          %v1499 = vadd.f32 %v1480, %v1496
          %v1500 = vmul.f32 %v1497, %v1497
          %v1501 = vmul.f32 %v1498, %v1498
          %v1502 = vadd.f32 %v1500, %v1501
          %v1503 = vmul.f32 %v1499, %v1499
          %v1504 = vadd.f32 %v1502, %v1503
          %v1505 = vadd.f32 %v1504, 1e-12
          %v1506 = vrsqrt.pop %v1505
          %v1507 = vmul.f32 %v1497, %v1506
          %v1508 = vmul.f32 %v1498, %v1506
          %v1509 = vmul.f32 %v1499, %v1506
          %v1510 = vmul.f32 %v1493, %v1507
          %v1511 = vmul.f32 %v1494, %v1508
          %v1512 = vadd.f32 %v1510, %v1511
          %v1513 = vmul.f32 %v1496, %v1509
          %v1514 = vadd.f32 %v1512, %v1513
          %v1515 = vmax.f32 %v1514, 0.001
          %v1516 = vsub.f32 1.0, %v1515
          %v1517 = vmul.f32 %v1516, %v1516
          %v1518 = vmul.f32 %v1517, %v1517
          %v1519 = vmul.f32 %v1518, %v1516
          %v1520 = vmul.f32 %v1476, %v1476
          %v1521 = vstv %s400
          %v1522 = vmul.f32 %v1521, %v1520
          %v1523 = vstv %s402
          %v1524 = vmul.f32 %v1523, %v1520
          %v1525 = vstv %s404
          %v1526 = vmul.f32 %v1525, %v1520
          %v1527 = vmul.f32 %v515, %v1477
          %v1528 = vmul.f32 %v516, %v1478
          %v1529 = vadd.f32 %v1527, %v1528
          %v1530 = vmul.f32 %v514, %v1480
          %v1531 = vadd.f32 %v1529, %v1530
          %v1532 = vmax.f32 %v1531, 0.001
          %v1533 = vmul.f32 %v515, %v1493
          %v1534 = vmul.f32 %v516, %v1494
          %v1535 = vadd.f32 %v1533, %v1534
          %v1536 = vmul.f32 %v514, %v1496
          %v1537 = vadd.f32 %v1535, %v1536
          %v1538 = vmax.f32 %v1537, 0.001
          %v1539 = vmul.f32 %v515, %v1507
          %v1540 = vmul.f32 %v516, %v1508
          %v1541 = vadd.f32 %v1539, %v1540
          %v1542 = vmul.f32 %v514, %v1509
          %v1543 = vadd.f32 %v1541, %v1542
          %v1544 = vmax.f32 %v1543, 0.001
          %v1545 = vmul.f32 %v1544, %v1544
          %v1546 = vmul.f32 %v1545, %v770
          %v1547 = vadd.f32 %v1546, 1.0
          %v1548 = vmul.f32 %v1532, %v655
          %v1549 = vadd.f32 %v1548, %v654
          %v1550 = vmul.f32 %v1538, %v655
          %v1551 = vadd.f32 %v1550, %v654
          %v1552 = vmul.f32 %v1547, 3.1415927
          %v1553 = vmul.f32 %v1552, %v1547
          %v1554 = vmul.f32 %v1553, %v1549
          %v1555 = vmul.f32 %v1554, %v1551
          %v1556 = vrcp.pop %v1555
          %v1557 = vmul.f32 %v777, %v1556
          %v1558 = vmul.f32 %v656, %v1519
          %v1559 = vadd.f32 %v541, %v1558
          %v1560 = vmul.f32 %v1557, %v1559
          %v1561 = vadd.f32 %v660, %v1560
          %v1562 = vmul.f32 %v1522, %v1532
          %v1563 = vmul.f32 %v1561, %v1562
          %v1564 = vmax.f32 %v1563, 0.0
          %v1565 = vmul.f32 %v657, %v1519
          %v1566 = vadd.f32 %v546, %v1565
          %v1567 = vmul.f32 %v1557, %v1566
          %v1568 = vadd.f32 %v662, %v1567
          %v1569 = vmul.f32 %v1524, %v1532
          %v1570 = vmul.f32 %v1568, %v1569
          %v1571 = vmax.f32 %v1570, 0.0
          %v1572 = vmul.f32 %v658, %v1519
          %v1573 = vadd.f32 %v551, %v1572
          %v1574 = vmul.f32 %v1557, %v1573
          %v1575 = vadd.f32 %v664, %v1574
          %v1576 = vmul.f32 %v1526, %v1532
          %v1577 = vmul.f32 %v1575, %v1576
          %v1578 = vmax.f32 %v1577, 0.0
          %v1579 = vmul.f32 %v672, %v1477
          %v1580 = vmul.f32 %v673, %v1478
          %v1581 = vadd.f32 %v1579, %v1580
          %v1582 = vmul.f32 %v674, %v1480
          %v1583 = vadd.f32 %v1581, %v1582
          %v1584 = vmax.f32 %v1583, 0.001
          %v1585 = vmul.f32 %v672, %v1493
          %v1586 = vmul.f32 %v673, %v1494
          %v1587 = vadd.f32 %v1585, %v1586
          %v1588 = vmul.f32 %v674, %v1496
          %v1589 = vadd.f32 %v1587, %v1588
          %v1590 = vmax.f32 %v1589, 0.001
          %v1591 = vmul.f32 %v672, %v1507
          %v1592 = vmul.f32 %v673, %v1508
          %v1593 = vadd.f32 %v1591, %v1592
          %v1594 = vmul.f32 %v674, %v1509
          %v1595 = vadd.f32 %v1593, %v1594
          %v1596 = vmax.f32 %v1595, 0.001
          %v1597 = vmul.f32 %v1596, %v1596
          %v1598 = vmul.f32 %v1597, %v824
          %v1599 = vadd.f32 %v1598, 1.0
          %v1600 = vmul.f32 %v1584, %v679
          %v1601 = vadd.f32 %v1600, %v678
          %v1602 = vmul.f32 %v1590, %v679
          %v1603 = vadd.f32 %v1602, %v678
          %v1604 = vmul.f32 %v1599, 3.1415927
          %v1605 = vmul.f32 %v1604, %v1599
          %v1606 = vmul.f32 %v1605, %v1601
          %v1607 = vmul.f32 %v1606, %v1603
          %v1608 = vrcp.pop %v1607
          %v1609 = vmul.f32 %v831, %v1608
          %v1610 = vmul.f32 %v680, %v1519
          %v1611 = vadd.f32 %v572, %v1610
          %v1612 = vmul.f32 %v1609, %v1611
          %v1613 = vadd.f32 %v684, %v1612
          %v1614 = vmul.f32 %v1522, %v1584
          %v1615 = vmul.f32 %v1613, %v1614
          %v1616 = vmax.f32 %v1615, 0.0
          %v1617 = vmul.f32 %v681, %v1519
          %v1618 = vadd.f32 %v575, %v1617
          %v1619 = vmul.f32 %v1609, %v1618
          %v1620 = vadd.f32 %v686, %v1619
          %v1621 = vmul.f32 %v1524, %v1584
          %v1622 = vmul.f32 %v1620, %v1621
          %v1623 = vmax.f32 %v1622, 0.0
          %v1624 = vmul.f32 %v682, %v1519
          %v1625 = vadd.f32 %v578, %v1624
          %v1626 = vmul.f32 %v1609, %v1625
          %v1627 = vadd.f32 %v688, %v1626
          %v1628 = vmul.f32 %v1526, %v1584
          %v1629 = vmul.f32 %v1627, %v1628
          %v1630 = vmax.f32 %v1629, 0.0
          %v1631 = vadd.f32 %v1564, 0.1
          %v1632 = vlog2.pop %v1631
          %v1633 = vmul.f32 %v1632, 0.6931472
          %v1634 = vadd.f32 %v1616, 0.1
          %v1635 = vlog2.pop %v1634
          %v1636 = vmul.f32 %v1635, 0.6931472
          %v1637 = vsub.f32 %v1633, %v1636
          %v1638 = vand.u32 2147483647, %v1637
          %v1639 = vadd.f32 %v1464, %v1638
          %v1640 = vadd.f32 %v1571, 0.1
          %v1641 = vlog2.pop %v1640
          %v1642 = vmul.f32 %v1641, 0.6931472
          %v1643 = vadd.f32 %v1623, 0.1
          %v1644 = vlog2.pop %v1643
          %v1645 = vmul.f32 %v1644, 0.6931472
          %v1646 = vsub.f32 %v1642, %v1645
          %v1647 = vand.u32 2147483647, %v1646
          %v1648 = vadd.f32 %v1639, %v1647
          %v1649 = vadd.f32 %v1578, 0.1
          %v1650 = vlog2.pop %v1649
          %v1651 = vmul.f32 %v1650, 0.6931472
          %v1652 = vadd.f32 %v1630, 0.1
          %v1653 = vlog2.pop %v1652
          %v1654 = vmul.f32 %v1653, 0.6931472
          %v1655 = vsub.f32 %v1651, %v1654
          %v1656 = vand.u32 2147483647, %v1655
          %v1657 = vadd.f32 %v1648, %v1656
          %v1658 = vstv %s412
          %v1659 = vsub.f32 %v1658, %v504
          %v1660 = vstv %s414
          %v1661 = vsub.f32 %v1660, %v500
          %v1662 = vmul.f32 %v1659, %v1659
          %v1663 = vmul.f32 %v1661, %v1661
          %v1664 = vadd.f32 %v1662, %v1663
          %s1665 = smul.f32 %s416, %s416
          %v1666 = vstv %s1665
          %v1667 = vadd.f32 %v1664, %v1666
          %v1668 = vadd.f32 %v1667, 1e-12
          %v1669 = vrsqrt.pop %v1668
          %v1670 = vmul.f32 %v1659, %v1669
          %v1671 = vmul.f32 %v1661, %v1669
          %v1672 = vstv %s416
          %v1673 = vmul.f32 %v1672, %v1669
          %v1674 = vstv %s406
          %v1675 = vsub.f32 %v1674, %v504
          %v1676 = vstv %s408
          %v1677 = vsub.f32 %v1676, %v500
          %v1678 = vmul.f32 %v1675, %v1675
          %v1679 = vmul.f32 %v1677, %v1677
          %v1680 = vadd.f32 %v1678, %v1679
          %s1681 = smul.f32 %s410, %s410
          %v1682 = vstv %s1681
          %v1683 = vadd.f32 %v1680, %v1682
          %v1684 = vadd.f32 %v1683, 1e-12
          %v1685 = vrsqrt.pop %v1684
          %v1686 = vmul.f32 %v1675, %v1685
          %v1687 = vmul.f32 %v1677, %v1685
          %v1688 = vstv %s410
          %v1689 = vmul.f32 %v1688, %v1685
          %v1690 = vadd.f32 %v1670, %v1686
          %v1691 = vadd.f32 %v1671, %v1687
          %v1692 = vadd.f32 %v1673, %v1689
          %v1693 = vmul.f32 %v1690, %v1690
          %v1694 = vmul.f32 %v1691, %v1691
          %v1695 = vadd.f32 %v1693, %v1694
          %v1696 = vmul.f32 %v1692, %v1692
          %v1697 = vadd.f32 %v1695, %v1696
          %v1698 = vadd.f32 %v1697, 1e-12
          %v1699 = vrsqrt.pop %v1698
          %v1700 = vmul.f32 %v1690, %v1699
          %v1701 = vmul.f32 %v1691, %v1699
          %v1702 = vmul.f32 %v1692, %v1699
          %v1703 = vmul.f32 %v1686, %v1700
          %v1704 = vmul.f32 %v1687, %v1701
          %v1705 = vadd.f32 %v1703, %v1704
          %v1706 = vmul.f32 %v1689, %v1702
          %v1707 = vadd.f32 %v1705, %v1706
          %v1708 = vmax.f32 %v1707, 0.001
          %v1709 = vsub.f32 1.0, %v1708
          %v1710 = vmul.f32 %v1709, %v1709
          %v1711 = vmul.f32 %v1710, %v1710
          %v1712 = vmul.f32 %v1711, %v1709
          %v1713 = vmul.f32 %v1669, %v1669
          %v1714 = vstv %s418
          %v1715 = vmul.f32 %v1714, %v1713
          %v1716 = vstv %s420
          %v1717 = vmul.f32 %v1716, %v1713
          %v1718 = vstv %s422
          %v1719 = vmul.f32 %v1718, %v1713
          %v1720 = vmul.f32 %v515, %v1670
          %v1721 = vmul.f32 %v516, %v1671
          %v1722 = vadd.f32 %v1720, %v1721
          %v1723 = vmul.f32 %v514, %v1673
          %v1724 = vadd.f32 %v1722, %v1723
          %v1725 = vmax.f32 %v1724, 0.001
          %v1726 = vmul.f32 %v515, %v1686
          %v1727 = vmul.f32 %v516, %v1687
          %v1728 = vadd.f32 %v1726, %v1727
          %v1729 = vmul.f32 %v514, %v1689
          %v1730 = vadd.f32 %v1728, %v1729
          %v1731 = vmax.f32 %v1730, 0.001
          %v1732 = vmul.f32 %v515, %v1700
          %v1733 = vmul.f32 %v516, %v1701
          %v1734 = vadd.f32 %v1732, %v1733
          %v1735 = vmul.f32 %v514, %v1702
          %v1736 = vadd.f32 %v1734, %v1735
          %v1737 = vmax.f32 %v1736, 0.001
          %v1738 = vmul.f32 %v1737, %v1737
          %v1739 = vmul.f32 %v1738, %v770
          %v1740 = vadd.f32 %v1739, 1.0
          %v1741 = vmul.f32 %v1725, %v655
          %v1742 = vadd.f32 %v1741, %v654
          %v1743 = vmul.f32 %v1731, %v655
          %v1744 = vadd.f32 %v1743, %v654
          %v1745 = vmul.f32 %v1740, 3.1415927
          %v1746 = vmul.f32 %v1745, %v1740
          %v1747 = vmul.f32 %v1746, %v1742
          %v1748 = vmul.f32 %v1747, %v1744
          %v1749 = vrcp.pop %v1748
          %v1750 = vmul.f32 %v777, %v1749
          %v1751 = vmul.f32 %v656, %v1712
          %v1752 = vadd.f32 %v541, %v1751
          %v1753 = vmul.f32 %v1750, %v1752
          %v1754 = vadd.f32 %v660, %v1753
          %v1755 = vmul.f32 %v1715, %v1725
          %v1756 = vmul.f32 %v1754, %v1755
          %v1757 = vmax.f32 %v1756, 0.0
          %v1758 = vmul.f32 %v657, %v1712
          %v1759 = vadd.f32 %v546, %v1758
          %v1760 = vmul.f32 %v1750, %v1759
          %v1761 = vadd.f32 %v662, %v1760
          %v1762 = vmul.f32 %v1717, %v1725
          %v1763 = vmul.f32 %v1761, %v1762
          %v1764 = vmax.f32 %v1763, 0.0
          %v1765 = vmul.f32 %v658, %v1712
          %v1766 = vadd.f32 %v551, %v1765
          %v1767 = vmul.f32 %v1750, %v1766
          %v1768 = vadd.f32 %v664, %v1767
          %v1769 = vmul.f32 %v1719, %v1725
          %v1770 = vmul.f32 %v1768, %v1769
          %v1771 = vmax.f32 %v1770, 0.0
          %v1772 = vmul.f32 %v672, %v1670
          %v1773 = vmul.f32 %v673, %v1671
          %v1774 = vadd.f32 %v1772, %v1773
          %v1775 = vmul.f32 %v674, %v1673
          %v1776 = vadd.f32 %v1774, %v1775
          %v1777 = vmax.f32 %v1776, 0.001
          %v1778 = vmul.f32 %v672, %v1686
          %v1779 = vmul.f32 %v673, %v1687
          %v1780 = vadd.f32 %v1778, %v1779
          %v1781 = vmul.f32 %v674, %v1689
          %v1782 = vadd.f32 %v1780, %v1781
          %v1783 = vmax.f32 %v1782, 0.001
          %v1784 = vmul.f32 %v672, %v1700
          %v1785 = vmul.f32 %v673, %v1701
          %v1786 = vadd.f32 %v1784, %v1785
          %v1787 = vmul.f32 %v674, %v1702
          %v1788 = vadd.f32 %v1786, %v1787
          %v1789 = vmax.f32 %v1788, 0.001
          %v1790 = vmul.f32 %v1789, %v1789
          %v1791 = vmul.f32 %v1790, %v824
          %v1792 = vadd.f32 %v1791, 1.0
          %v1793 = vmul.f32 %v1777, %v679
          %v1794 = vadd.f32 %v1793, %v678
          %v1795 = vmul.f32 %v1783, %v679
          %v1796 = vadd.f32 %v1795, %v678
          %v1797 = vmul.f32 %v1792, 3.1415927
          %v1798 = vmul.f32 %v1797, %v1792
          %v1799 = vmul.f32 %v1798, %v1794
          %v1800 = vmul.f32 %v1799, %v1796
          %v1801 = vrcp.pop %v1800
          %v1802 = vmul.f32 %v831, %v1801
          %v1803 = vmul.f32 %v680, %v1712
          %v1804 = vadd.f32 %v572, %v1803
          %v1805 = vmul.f32 %v1802, %v1804
          %v1806 = vadd.f32 %v684, %v1805
          %v1807 = vmul.f32 %v1715, %v1777
          %v1808 = vmul.f32 %v1806, %v1807
          %v1809 = vmax.f32 %v1808, 0.0
          %v1810 = vmul.f32 %v681, %v1712
          %v1811 = vadd.f32 %v575, %v1810
          %v1812 = vmul.f32 %v1802, %v1811
          %v1813 = vadd.f32 %v686, %v1812
          %v1814 = vmul.f32 %v1717, %v1777
          %v1815 = vmul.f32 %v1813, %v1814
          %v1816 = vmax.f32 %v1815, 0.0
          %v1817 = vmul.f32 %v682, %v1712
          %v1818 = vadd.f32 %v578, %v1817
          %v1819 = vmul.f32 %v1802, %v1818
          %v1820 = vadd.f32 %v688, %v1819
          %v1821 = vmul.f32 %v1719, %v1777
          %v1822 = vmul.f32 %v1820, %v1821
          %v1823 = vmax.f32 %v1822, 0.0
          %v1824 = vadd.f32 %v1757, 0.1
          %v1825 = vlog2.pop %v1824
          %v1826 = vmul.f32 %v1825, 0.6931472
          %v1827 = vadd.f32 %v1809, 0.1
          %v1828 = vlog2.pop %v1827
          %v1829 = vmul.f32 %v1828, 0.6931472
          %v1830 = vsub.f32 %v1826, %v1829
          %v1831 = vand.u32 2147483647, %v1830
          %v1832 = vadd.f32 %v1657, %v1831
          %v1833 = vadd.f32 %v1764, 0.1
          %v1834 = vlog2.pop %v1833
          %v1835 = vmul.f32 %v1834, 0.6931472
          %v1836 = vadd.f32 %v1816, 0.1
          %v1837 = vlog2.pop %v1836
          %v1838 = vmul.f32 %v1837, 0.6931472
          %v1839 = vsub.f32 %v1835, %v1838
          %v1840 = vand.u32 2147483647, %v1839
          %v1841 = vadd.f32 %v1832, %v1840
          %v1842 = vadd.f32 %v1771, 0.1
          %v1843 = vlog2.pop %v1842
          %v1844 = vmul.f32 %v1843, 0.6931472
          %v1845 = vadd.f32 %v1823, 0.1
          %v1846 = vlog2.pop %v1845
          %v1847 = vmul.f32 %v1846, 0.6931472
          %v1848 = vsub.f32 %v1844, %v1847
          %v1849 = vand.u32 2147483647, %v1848
          %v1850 = vadd.f32 %v1841, %v1849
          %v1851 = vstv %s430
          %v1852 = vsub.f32 %v1851, %v504
          %v1853 = vstv %s432
          %v1854 = vsub.f32 %v1853, %v500
          %v1855 = vmul.f32 %v1852, %v1852
          %v1856 = vmul.f32 %v1854, %v1854
          %v1857 = vadd.f32 %v1855, %v1856
          %s1858 = smul.f32 %s434, %s434
          %v1859 = vstv %s1858
          %v1860 = vadd.f32 %v1857, %v1859
          %v1861 = vadd.f32 %v1860, 1e-12
          %v1862 = vrsqrt.pop %v1861
          %v1863 = vmul.f32 %v1852, %v1862
          %v1864 = vmul.f32 %v1854, %v1862
          %v1865 = vstv %s434
          %v1866 = vmul.f32 %v1865, %v1862
          %v1867 = vstv %s424
          %v1868 = vsub.f32 %v1867, %v504
          %v1869 = vstv %s426
          %v1870 = vsub.f32 %v1869, %v500
          %v1871 = vmul.f32 %v1868, %v1868
          %v1872 = vmul.f32 %v1870, %v1870
          %v1873 = vadd.f32 %v1871, %v1872
          %s1874 = smul.f32 %s428, %s428
          %v1875 = vstv %s1874
          %v1876 = vadd.f32 %v1873, %v1875
          %v1877 = vadd.f32 %v1876, 1e-12
          %v1878 = vrsqrt.pop %v1877
          %v1879 = vmul.f32 %v1868, %v1878
          %v1880 = vmul.f32 %v1870, %v1878
          %v1881 = vstv %s428
          %v1882 = vmul.f32 %v1881, %v1878
          %v1883 = vadd.f32 %v1863, %v1879
          %v1884 = vadd.f32 %v1864, %v1880
          %v1885 = vadd.f32 %v1866, %v1882
          %v1886 = vmul.f32 %v1883, %v1883
          %v1887 = vmul.f32 %v1884, %v1884
          %v1888 = vadd.f32 %v1886, %v1887
          %v1889 = vmul.f32 %v1885, %v1885
          %v1890 = vadd.f32 %v1888, %v1889
          %v1891 = vadd.f32 %v1890, 1e-12
          %v1892 = vrsqrt.pop %v1891
          %v1893 = vmul.f32 %v1883, %v1892
          %v1894 = vmul.f32 %v1884, %v1892
          %v1895 = vmul.f32 %v1885, %v1892
          %v1896 = vmul.f32 %v1879, %v1893
          %v1897 = vmul.f32 %v1880, %v1894
          %v1898 = vadd.f32 %v1896, %v1897
          %v1899 = vmul.f32 %v1882, %v1895
          %v1900 = vadd.f32 %v1898, %v1899
          %v1901 = vmax.f32 %v1900, 0.001
          %v1902 = vsub.f32 1.0, %v1901
          %v1903 = vmul.f32 %v1902, %v1902
          %v1904 = vmul.f32 %v1903, %v1903
          %v1905 = vmul.f32 %v1904, %v1902
          %v1906 = vmul.f32 %v1862, %v1862
          %v1907 = vstv %s436
          %v1908 = vmul.f32 %v1907, %v1906
          %v1909 = vstv %s438
          %v1910 = vmul.f32 %v1909, %v1906
          %v1911 = vstv %s440
          %v1912 = vmul.f32 %v1911, %v1906
          %v1913 = vmul.f32 %v515, %v1863
          %v1914 = vmul.f32 %v516, %v1864
          %v1915 = vadd.f32 %v1913, %v1914
          %v1916 = vmul.f32 %v514, %v1866
          %v1917 = vadd.f32 %v1915, %v1916
          %v1918 = vmax.f32 %v1917, 0.001
          %v1919 = vmul.f32 %v515, %v1879
          %v1920 = vmul.f32 %v516, %v1880
          %v1921 = vadd.f32 %v1919, %v1920
          %v1922 = vmul.f32 %v514, %v1882
          %v1923 = vadd.f32 %v1921, %v1922
          %v1924 = vmax.f32 %v1923, 0.001
          %v1925 = vmul.f32 %v515, %v1893
          %v1926 = vmul.f32 %v516, %v1894
          %v1927 = vadd.f32 %v1925, %v1926
          %v1928 = vmul.f32 %v514, %v1895
          %v1929 = vadd.f32 %v1927, %v1928
          %v1930 = vmax.f32 %v1929, 0.001
          %v1931 = vmul.f32 %v1930, %v1930
          %v1932 = vmul.f32 %v1931, %v770
          %v1933 = vadd.f32 %v1932, 1.0
          %v1934 = vmul.f32 %v1918, %v655
          %v1935 = vadd.f32 %v1934, %v654
          %v1936 = vmul.f32 %v1924, %v655
          %v1937 = vadd.f32 %v1936, %v654
          %v1938 = vmul.f32 %v1933, 3.1415927
          %v1939 = vmul.f32 %v1938, %v1933
          %v1940 = vmul.f32 %v1939, %v1935
          %v1941 = vmul.f32 %v1940, %v1937
          %v1942 = vrcp.pop %v1941
          %v1943 = vmul.f32 %v777, %v1942
          %v1944 = vmul.f32 %v656, %v1905
          %v1945 = vadd.f32 %v541, %v1944
          %v1946 = vmul.f32 %v1943, %v1945
          %v1947 = vadd.f32 %v660, %v1946
          %v1948 = vmul.f32 %v1908, %v1918
          %v1949 = vmul.f32 %v1947, %v1948
          %v1950 = vmax.f32 %v1949, 0.0
          %v1951 = vmul.f32 %v657, %v1905
          %v1952 = vadd.f32 %v546, %v1951
          %v1953 = vmul.f32 %v1943, %v1952
          %v1954 = vadd.f32 %v662, %v1953
          %v1955 = vmul.f32 %v1910, %v1918
          %v1956 = vmul.f32 %v1954, %v1955
          %v1957 = vmax.f32 %v1956, 0.0
          %v1958 = vmul.f32 %v658, %v1905
          %v1959 = vadd.f32 %v551, %v1958
          %v1960 = vmul.f32 %v1943, %v1959
          %v1961 = vadd.f32 %v664, %v1960
          %v1962 = vmul.f32 %v1912, %v1918
          %v1963 = vmul.f32 %v1961, %v1962
          %v1964 = vmax.f32 %v1963, 0.0
          %v1965 = vmul.f32 %v672, %v1863
          %v1966 = vmul.f32 %v673, %v1864
          %v1967 = vadd.f32 %v1965, %v1966
          %v1968 = vmul.f32 %v674, %v1866
          %v1969 = vadd.f32 %v1967, %v1968
          %v1970 = vmax.f32 %v1969, 0.001
          %v1971 = vmul.f32 %v672, %v1879
          %v1972 = vmul.f32 %v673, %v1880
          %v1973 = vadd.f32 %v1971, %v1972
          %v1974 = vmul.f32 %v674, %v1882
          %v1975 = vadd.f32 %v1973, %v1974
          %v1976 = vmax.f32 %v1975, 0.001
          %v1977 = vmul.f32 %v672, %v1893
          %v1978 = vmul.f32 %v673, %v1894
          %v1979 = vadd.f32 %v1977, %v1978
          %v1980 = vmul.f32 %v674, %v1895
          %v1981 = vadd.f32 %v1979, %v1980
          %v1982 = vmax.f32 %v1981, 0.001
          %v1983 = vmul.f32 %v1982, %v1982
          %v1984 = vmul.f32 %v1983, %v824
          %v1985 = vadd.f32 %v1984, 1.0
          %v1986 = vmul.f32 %v1970, %v679
          %v1987 = vadd.f32 %v1986, %v678
          %v1988 = vmul.f32 %v1976, %v679
          %v1989 = vadd.f32 %v1988, %v678
          %v1990 = vmul.f32 %v1985, 3.1415927
          %v1991 = vmul.f32 %v1990, %v1985
          %v1992 = vmul.f32 %v1991, %v1987
          %v1993 = vmul.f32 %v1992, %v1989
          %v1994 = vrcp.pop %v1993
          %v1995 = vmul.f32 %v831, %v1994
          %v1996 = vmul.f32 %v680, %v1905
          %v1997 = vadd.f32 %v572, %v1996
          %v1998 = vmul.f32 %v1995, %v1997
          %v1999 = vadd.f32 %v684, %v1998
          %v2000 = vmul.f32 %v1908, %v1970
          %v2001 = vmul.f32 %v1999, %v2000
          %v2002 = vmax.f32 %v2001, 0.0
          %v2003 = vmul.f32 %v681, %v1905
          %v2004 = vadd.f32 %v575, %v2003
          %v2005 = vmul.f32 %v1995, %v2004
          %v2006 = vadd.f32 %v686, %v2005
          %v2007 = vmul.f32 %v1910, %v1970
          %v2008 = vmul.f32 %v2006, %v2007
          %v2009 = vmax.f32 %v2008, 0.0
          %v2010 = vmul.f32 %v682, %v1905
          %v2011 = vadd.f32 %v578, %v2010
          %v2012 = vmul.f32 %v1995, %v2011
          %v2013 = vadd.f32 %v688, %v2012
          %v2014 = vmul.f32 %v1912, %v1970
          %v2015 = vmul.f32 %v2013, %v2014
          %v2016 = vmax.f32 %v2015, 0.0
          %v2017 = vadd.f32 %v1950, 0.1
          %v2018 = vlog2.pop %v2017
          %v2019 = vmul.f32 %v2018, 0.6931472
          %v2020 = vadd.f32 %v2002, 0.1
          %v2021 = vlog2.pop %v2020
          %v2022 = vmul.f32 %v2021, 0.6931472
          %v2023 = vsub.f32 %v2019, %v2022
          %v2024 = vand.u32 2147483647, %v2023
          %v2025 = vadd.f32 %v1850, %v2024
          %v2026 = vadd.f32 %v1957, 0.1
          %v2027 = vlog2.pop %v2026
          %v2028 = vmul.f32 %v2027, 0.6931472
          %v2029 = vadd.f32 %v2009, 0.1
          %v2030 = vlog2.pop %v2029
          %v2031 = vmul.f32 %v2030, 0.6931472
          %v2032 = vsub.f32 %v2028, %v2031
          %v2033 = vand.u32 2147483647, %v2032
          %v2034 = vadd.f32 %v2025, %v2033
          %v2035 = vadd.f32 %v1964, 0.1
          %v2036 = vlog2.pop %v2035
          %v2037 = vmul.f32 %v2036, 0.6931472
          %v2038 = vadd.f32 %v2016, 0.1
          %v2039 = vlog2.pop %v2038
          %v2040 = vmul.f32 %v2039, 0.6931472
          %v2041 = vsub.f32 %v2037, %v2040
          %v2042 = vand.u32 2147483647, %v2041
          %v2043 = vadd.f32 %v2034, %v2042
          %v2044 = vstv %s448
          %v2045 = vsub.f32 %v2044, %v504
          %v2046 = vstv %s450
          %v2047 = vsub.f32 %v2046, %v500
          %v2048 = vmul.f32 %v2045, %v2045
          %v2049 = vmul.f32 %v2047, %v2047
          %v2050 = vadd.f32 %v2048, %v2049
          %s2051 = smul.f32 %s452, %s452
          %v2052 = vstv %s2051
          %v2053 = vadd.f32 %v2050, %v2052
          %v2054 = vadd.f32 %v2053, 1e-12
          %v2055 = vrsqrt.pop %v2054
          %v2056 = vmul.f32 %v2045, %v2055
          %v2057 = vmul.f32 %v2047, %v2055
          %v2058 = vstv %s452
          %v2059 = vmul.f32 %v2058, %v2055
          %v2060 = vstv %s442
          %v2061 = vsub.f32 %v2060, %v504
          %v2062 = vstv %s444
          %v2063 = vsub.f32 %v2062, %v500
          %v2064 = vmul.f32 %v2061, %v2061
          %v2065 = vmul.f32 %v2063, %v2063
          %v2066 = vadd.f32 %v2064, %v2065
          %s2067 = smul.f32 %s446, %s446
          %v2068 = vstv %s2067
          %v2069 = vadd.f32 %v2066, %v2068
          %v2070 = vadd.f32 %v2069, 1e-12
          %v2071 = vrsqrt.pop %v2070
          %v2072 = vmul.f32 %v2061, %v2071
          %v2073 = vmul.f32 %v2063, %v2071
          %v2074 = vstv %s446
          %v2075 = vmul.f32 %v2074, %v2071
          %v2076 = vadd.f32 %v2056, %v2072
          %v2077 = vadd.f32 %v2057, %v2073
          %v2078 = vadd.f32 %v2059, %v2075
          %v2079 = vmul.f32 %v2076, %v2076
          %v2080 = vmul.f32 %v2077, %v2077
          %v2081 = vadd.f32 %v2079, %v2080
          %v2082 = vmul.f32 %v2078, %v2078
          %v2083 = vadd.f32 %v2081, %v2082
          %v2084 = vadd.f32 %v2083, 1e-12
          %v2085 = vrsqrt.pop %v2084
          %v2086 = vmul.f32 %v2076, %v2085
          %v2087 = vmul.f32 %v2077, %v2085
          %v2088 = vmul.f32 %v2078, %v2085
          %v2089 = vmul.f32 %v2072, %v2086
          %v2090 = vmul.f32 %v2073, %v2087
          %v2091 = vadd.f32 %v2089, %v2090
          %v2092 = vmul.f32 %v2075, %v2088
          %v2093 = vadd.f32 %v2091, %v2092
          %v2094 = vmax.f32 %v2093, 0.001
          %v2095 = vsub.f32 1.0, %v2094
          %v2096 = vmul.f32 %v2095, %v2095
          %v2097 = vmul.f32 %v2096, %v2096
          %v2098 = vmul.f32 %v2097, %v2095
          %v2099 = vmul.f32 %v2055, %v2055
          %v2100 = vstv %s454
          %v2101 = vmul.f32 %v2100, %v2099
          %v2102 = vstv %s456
          %v2103 = vmul.f32 %v2102, %v2099
          %v2104 = vstv %s458
          %v2105 = vmul.f32 %v2104, %v2099
          %v2106 = vmul.f32 %v515, %v2056
          %v2107 = vmul.f32 %v516, %v2057
          %v2108 = vadd.f32 %v2106, %v2107
          %v2109 = vmul.f32 %v514, %v2059
          %v2110 = vadd.f32 %v2108, %v2109
          %v2111 = vmax.f32 %v2110, 0.001
          %v2112 = vmul.f32 %v515, %v2072
          %v2113 = vmul.f32 %v516, %v2073
          %v2114 = vadd.f32 %v2112, %v2113
          %v2115 = vmul.f32 %v514, %v2075
          %v2116 = vadd.f32 %v2114, %v2115
          %v2117 = vmax.f32 %v2116, 0.001
          %v2118 = vmul.f32 %v515, %v2086
          %v2119 = vmul.f32 %v516, %v2087
          %v2120 = vadd.f32 %v2118, %v2119
          %v2121 = vmul.f32 %v514, %v2088
          %v2122 = vadd.f32 %v2120, %v2121
          %v2123 = vmax.f32 %v2122, 0.001
          %v2124 = vmul.f32 %v2123, %v2123
          %v2125 = vmul.f32 %v2124, %v770
          %v2126 = vadd.f32 %v2125, 1.0
          %v2127 = vmul.f32 %v2111, %v655
          %v2128 = vadd.f32 %v2127, %v654
          %v2129 = vmul.f32 %v2117, %v655
          %v2130 = vadd.f32 %v2129, %v654
          %v2131 = vmul.f32 %v2126, 3.1415927
          %v2132 = vmul.f32 %v2131, %v2126
          %v2133 = vmul.f32 %v2132, %v2128
          %v2134 = vmul.f32 %v2133, %v2130
          %v2135 = vrcp.pop %v2134
          %v2136 = vmul.f32 %v777, %v2135
          %v2137 = vmul.f32 %v656, %v2098
          %v2138 = vadd.f32 %v541, %v2137
          %v2139 = vmul.f32 %v2136, %v2138
          %v2140 = vadd.f32 %v660, %v2139
          %v2141 = vmul.f32 %v2101, %v2111
          %v2142 = vmul.f32 %v2140, %v2141
          %v2143 = vmax.f32 %v2142, 0.0
          %v2144 = vmul.f32 %v657, %v2098
          %v2145 = vadd.f32 %v546, %v2144
          %v2146 = vmul.f32 %v2136, %v2145
          %v2147 = vadd.f32 %v662, %v2146
          %v2148 = vmul.f32 %v2103, %v2111
          %v2149 = vmul.f32 %v2147, %v2148
          %v2150 = vmax.f32 %v2149, 0.0
          %v2151 = vmul.f32 %v658, %v2098
          %v2152 = vadd.f32 %v551, %v2151
          %v2153 = vmul.f32 %v2136, %v2152
          %v2154 = vadd.f32 %v664, %v2153
          %v2155 = vmul.f32 %v2105, %v2111
          %v2156 = vmul.f32 %v2154, %v2155
          %v2157 = vmax.f32 %v2156, 0.0
          %v2158 = vmul.f32 %v672, %v2056
          %v2159 = vmul.f32 %v673, %v2057
          %v2160 = vadd.f32 %v2158, %v2159
          %v2161 = vmul.f32 %v674, %v2059
          %v2162 = vadd.f32 %v2160, %v2161
          %v2163 = vmax.f32 %v2162, 0.001
          %v2164 = vmul.f32 %v672, %v2072
          %v2165 = vmul.f32 %v673, %v2073
          %v2166 = vadd.f32 %v2164, %v2165
          %v2167 = vmul.f32 %v674, %v2075
          %v2168 = vadd.f32 %v2166, %v2167
          %v2169 = vmax.f32 %v2168, 0.001
          %v2170 = vmul.f32 %v672, %v2086
          %v2171 = vmul.f32 %v673, %v2087
          %v2172 = vadd.f32 %v2170, %v2171
          %v2173 = vmul.f32 %v674, %v2088
          %v2174 = vadd.f32 %v2172, %v2173
          %v2175 = vmax.f32 %v2174, 0.001
          %v2176 = vmul.f32 %v2175, %v2175
          %v2177 = vmul.f32 %v2176, %v824
          %v2178 = vadd.f32 %v2177, 1.0
          %v2179 = vmul.f32 %v2163, %v679
          %v2180 = vadd.f32 %v2179, %v678
          %v2181 = vmul.f32 %v2169, %v679
          %v2182 = vadd.f32 %v2181, %v678
          %v2183 = vmul.f32 %v2178, 3.1415927
          %v2184 = vmul.f32 %v2183, %v2178
          %v2185 = vmul.f32 %v2184, %v2180
          %v2186 = vmul.f32 %v2185, %v2182
          %v2187 = vrcp.pop %v2186
          %v2188 = vmul.f32 %v831, %v2187
          %v2189 = vmul.f32 %v680, %v2098
          %v2190 = vadd.f32 %v572, %v2189
          %v2191 = vmul.f32 %v2188, %v2190
          %v2192 = vadd.f32 %v684, %v2191
          %v2193 = vmul.f32 %v2101, %v2163
          %v2194 = vmul.f32 %v2192, %v2193
          %v2195 = vmax.f32 %v2194, 0.0
          %v2196 = vmul.f32 %v681, %v2098
          %v2197 = vadd.f32 %v575, %v2196
          %v2198 = vmul.f32 %v2188, %v2197
          %v2199 = vadd.f32 %v686, %v2198
          %v2200 = vmul.f32 %v2103, %v2163
          %v2201 = vmul.f32 %v2199, %v2200
          %v2202 = vmax.f32 %v2201, 0.0
          %v2203 = vmul.f32 %v682, %v2098
          %v2204 = vadd.f32 %v578, %v2203
          %v2205 = vmul.f32 %v2188, %v2204
          %v2206 = vadd.f32 %v688, %v2205
          %v2207 = vmul.f32 %v2105, %v2163
          %v2208 = vmul.f32 %v2206, %v2207
          %v2209 = vmax.f32 %v2208, 0.0
          %v2210 = vadd.f32 %v2143, 0.1
          %v2211 = vlog2.pop %v2210
          %v2212 = vmul.f32 %v2211, 0.6931472
          %v2213 = vadd.f32 %v2195, 0.1
          %v2214 = vlog2.pop %v2213
          %v2215 = vmul.f32 %v2214, 0.6931472
          %v2216 = vsub.f32 %v2212, %v2215
          %v2217 = vand.u32 2147483647, %v2216
          %v2218 = vadd.f32 %v2043, %v2217
          %v2219 = vadd.f32 %v2150, 0.1
          %v2220 = vlog2.pop %v2219
          %v2221 = vmul.f32 %v2220, 0.6931472
          %v2222 = vadd.f32 %v2202, 0.1
          %v2223 = vlog2.pop %v2222
          %v2224 = vmul.f32 %v2223, 0.6931472
          %v2225 = vsub.f32 %v2221, %v2224
          %v2226 = vand.u32 2147483647, %v2225
          %v2227 = vadd.f32 %v2218, %v2226
          %v2228 = vadd.f32 %v2157, 0.1
          %v2229 = vlog2.pop %v2228
          %v2230 = vmul.f32 %v2229, 0.6931472
          %v2231 = vadd.f32 %v2209, 0.1
          %v2232 = vlog2.pop %v2231
          %v2233 = vmul.f32 %v2232, 0.6931472
          %v2234 = vsub.f32 %v2230, %v2233
          %v2235 = vand.u32 2147483647, %v2234
          %v2236 = vadd.f32 %v2227, %v2235
          %v2237 = vstv %s466
          %v2238 = vsub.f32 %v2237, %v504
          %v2239 = vstv %s468
          %v2240 = vsub.f32 %v2239, %v500
          %v2241 = vmul.f32 %v2238, %v2238
          %v2242 = vmul.f32 %v2240, %v2240
          %v2243 = vadd.f32 %v2241, %v2242
          %s2244 = smul.f32 %s470, %s470
          %v2245 = vstv %s2244
          %v2246 = vadd.f32 %v2243, %v2245
          %v2247 = vadd.f32 %v2246, 1e-12
          %v2248 = vrsqrt.pop %v2247
          %v2249 = vmul.f32 %v2238, %v2248
          %v2250 = vmul.f32 %v2240, %v2248
          %v2251 = vstv %s470
          %v2252 = vmul.f32 %v2251, %v2248
          %v2253 = vstv %s460
          %v2254 = vsub.f32 %v2253, %v504
          %v2255 = vstv %s462
          %v2256 = vsub.f32 %v2255, %v500
          %v2257 = vmul.f32 %v2254, %v2254
          %v2258 = vmul.f32 %v2256, %v2256
          %v2259 = vadd.f32 %v2257, %v2258
          %s2260 = smul.f32 %s464, %s464
          %v2261 = vstv %s2260
          %v2262 = vadd.f32 %v2259, %v2261
          %v2263 = vadd.f32 %v2262, 1e-12
          %v2264 = vrsqrt.pop %v2263
          %v2265 = vmul.f32 %v2254, %v2264
          %v2266 = vmul.f32 %v2256, %v2264
          %v2267 = vstv %s464
          %v2268 = vmul.f32 %v2267, %v2264
          %v2269 = vadd.f32 %v2249, %v2265
          %v2270 = vadd.f32 %v2250, %v2266
          %v2271 = vadd.f32 %v2252, %v2268
          %v2272 = vmul.f32 %v2269, %v2269
          %v2273 = vmul.f32 %v2270, %v2270
          %v2274 = vadd.f32 %v2272, %v2273
          %v2275 = vmul.f32 %v2271, %v2271
          %v2276 = vadd.f32 %v2274, %v2275
          %v2277 = vadd.f32 %v2276, 1e-12
          %v2278 = vrsqrt.pop %v2277
          %v2279 = vmul.f32 %v2269, %v2278
          %v2280 = vmul.f32 %v2270, %v2278
          %v2281 = vmul.f32 %v2271, %v2278
          %v2282 = vmul.f32 %v2265, %v2279
          %v2283 = vmul.f32 %v2266, %v2280
          %v2284 = vadd.f32 %v2282, %v2283
          %v2285 = vmul.f32 %v2268, %v2281
          %v2286 = vadd.f32 %v2284, %v2285
          %v2287 = vmax.f32 %v2286, 0.001
          %v2288 = vsub.f32 1.0, %v2287
          %v2289 = vmul.f32 %v2288, %v2288
          %v2290 = vmul.f32 %v2289, %v2289
          %v2291 = vmul.f32 %v2290, %v2288
          %v2292 = vmul.f32 %v2248, %v2248
          %v2293 = vstv %s472
          %v2294 = vmul.f32 %v2293, %v2292
          %v2295 = vstv %s474
          %v2296 = vmul.f32 %v2295, %v2292
          %v2297 = vstv %s476
          %v2298 = vmul.f32 %v2297, %v2292
          %v2299 = vmul.f32 %v515, %v2249
          %v2300 = vmul.f32 %v516, %v2250
          %v2301 = vadd.f32 %v2299, %v2300
          %v2302 = vmul.f32 %v514, %v2252
          %v2303 = vadd.f32 %v2301, %v2302
          %v2304 = vmax.f32 %v2303, 0.001
          %v2305 = vmul.f32 %v515, %v2265
          %v2306 = vmul.f32 %v516, %v2266
          %v2307 = vadd.f32 %v2305, %v2306
          %v2308 = vmul.f32 %v514, %v2268
          %v2309 = vadd.f32 %v2307, %v2308
          %v2310 = vmax.f32 %v2309, 0.001
          %v2311 = vmul.f32 %v515, %v2279
          %v2312 = vmul.f32 %v516, %v2280
          %v2313 = vadd.f32 %v2311, %v2312
          %v2314 = vmul.f32 %v514, %v2281
          %v2315 = vadd.f32 %v2313, %v2314
          %v2316 = vmax.f32 %v2315, 0.001
          %v2317 = vmul.f32 %v2316, %v2316
          %v2318 = vmul.f32 %v2317, %v770
          %v2319 = vadd.f32 %v2318, 1.0
          %v2320 = vmul.f32 %v2304, %v655
          %v2321 = vadd.f32 %v2320, %v654
          %v2322 = vmul.f32 %v2310, %v655
          %v2323 = vadd.f32 %v2322, %v654
          %v2324 = vmul.f32 %v2319, 3.1415927
          %v2325 = vmul.f32 %v2324, %v2319
          %v2326 = vmul.f32 %v2325, %v2321
          %v2327 = vmul.f32 %v2326, %v2323
          %v2328 = vrcp.pop %v2327
          %v2329 = vmul.f32 %v777, %v2328
          %v2330 = vmul.f32 %v656, %v2291
          %v2331 = vadd.f32 %v541, %v2330
          %v2332 = vmul.f32 %v2329, %v2331
          %v2333 = vadd.f32 %v660, %v2332
          %v2334 = vmul.f32 %v2294, %v2304
          %v2335 = vmul.f32 %v2333, %v2334
          %v2336 = vmax.f32 %v2335, 0.0
          %v2337 = vmul.f32 %v657, %v2291
          %v2338 = vadd.f32 %v546, %v2337
          %v2339 = vmul.f32 %v2329, %v2338
          %v2340 = vadd.f32 %v662, %v2339
          %v2341 = vmul.f32 %v2296, %v2304
          %v2342 = vmul.f32 %v2340, %v2341
          %v2343 = vmax.f32 %v2342, 0.0
          %v2344 = vmul.f32 %v658, %v2291
          %v2345 = vadd.f32 %v551, %v2344
          %v2346 = vmul.f32 %v2329, %v2345
          %v2347 = vadd.f32 %v664, %v2346
          %v2348 = vmul.f32 %v2298, %v2304
          %v2349 = vmul.f32 %v2347, %v2348
          %v2350 = vmax.f32 %v2349, 0.0
          %v2351 = vmul.f32 %v672, %v2249
          %v2352 = vmul.f32 %v673, %v2250
          %v2353 = vadd.f32 %v2351, %v2352
          %v2354 = vmul.f32 %v674, %v2252
          %v2355 = vadd.f32 %v2353, %v2354
          %v2356 = vmax.f32 %v2355, 0.001
          %v2357 = vmul.f32 %v672, %v2265
          %v2358 = vmul.f32 %v673, %v2266
          %v2359 = vadd.f32 %v2357, %v2358
          %v2360 = vmul.f32 %v674, %v2268
          %v2361 = vadd.f32 %v2359, %v2360
          %v2362 = vmax.f32 %v2361, 0.001
          %v2363 = vmul.f32 %v672, %v2279
          %v2364 = vmul.f32 %v673, %v2280
          %v2365 = vadd.f32 %v2363, %v2364
          %v2366 = vmul.f32 %v674, %v2281
          %v2367 = vadd.f32 %v2365, %v2366
          %v2368 = vmax.f32 %v2367, 0.001
          %v2369 = vmul.f32 %v2368, %v2368
          %v2370 = vmul.f32 %v2369, %v824
          %v2371 = vadd.f32 %v2370, 1.0
          %v2372 = vmul.f32 %v2356, %v679
          %v2373 = vadd.f32 %v2372, %v678
          %v2374 = vmul.f32 %v2362, %v679
          %v2375 = vadd.f32 %v2374, %v678
          %v2376 = vmul.f32 %v2371, 3.1415927
          %v2377 = vmul.f32 %v2376, %v2371
          %v2378 = vmul.f32 %v2377, %v2373
          %v2379 = vmul.f32 %v2378, %v2375
          %v2380 = vrcp.pop %v2379
          %v2381 = vmul.f32 %v831, %v2380
          %v2382 = vmul.f32 %v680, %v2291
          %v2383 = vadd.f32 %v572, %v2382
          %v2384 = vmul.f32 %v2381, %v2383
          %v2385 = vadd.f32 %v684, %v2384
          %v2386 = vmul.f32 %v2294, %v2356
          %v2387 = vmul.f32 %v2385, %v2386
          %v2388 = vmax.f32 %v2387, 0.0
          %v2389 = vmul.f32 %v681, %v2291
          %v2390 = vadd.f32 %v575, %v2389
          %v2391 = vmul.f32 %v2381, %v2390
          %v2392 = vadd.f32 %v686, %v2391
          %v2393 = vmul.f32 %v2296, %v2356
          %v2394 = vmul.f32 %v2392, %v2393
          %v2395 = vmax.f32 %v2394, 0.0
          %v2396 = vmul.f32 %v682, %v2291
          %v2397 = vadd.f32 %v578, %v2396
          %v2398 = vmul.f32 %v2381, %v2397
          %v2399 = vadd.f32 %v688, %v2398
          %v2400 = vmul.f32 %v2298, %v2356
          %v2401 = vmul.f32 %v2399, %v2400
          %v2402 = vmax.f32 %v2401, 0.0
          %v2403 = vadd.f32 %v2336, 0.1
          %v2404 = vlog2.pop %v2403
          %v2405 = vmul.f32 %v2404, 0.6931472
          %v2406 = vadd.f32 %v2388, 0.1
          %v2407 = vlog2.pop %v2406
          %v2408 = vmul.f32 %v2407, 0.6931472
          %v2409 = vsub.f32 %v2405, %v2408
          %v2410 = vand.u32 2147483647, %v2409
          %v2411 = vadd.f32 %v2236, %v2410
          %v2412 = vadd.f32 %v2343, 0.1
          %v2413 = vlog2.pop %v2412
          %v2414 = vmul.f32 %v2413, 0.6931472
          %v2415 = vadd.f32 %v2395, 0.1
          %v2416 = vlog2.pop %v2415
          %v2417 = vmul.f32 %v2416, 0.6931472
          %v2418 = vsub.f32 %v2414, %v2417
          %v2419 = vand.u32 2147483647, %v2418
          %v2420 = vadd.f32 %v2411, %v2419
          %v2421 = vadd.f32 %v2350, 0.1
          %v2422 = vlog2.pop %v2421
          %v2423 = vmul.f32 %v2422, 0.6931472
          %v2424 = vadd.f32 %v2402, 0.1
          %v2425 = vlog2.pop %v2424
          %v2426 = vmul.f32 %v2425, 0.6931472
          %v2427 = vsub.f32 %v2423, %v2426
          %v2428 = vand.u32 2147483647, %v2427
          %v2429 = vadd.f32 %v2420, %v2428
        $region49: #{tpu_custom_call.1} parent=31 // loop_footer
          %s482 = sadd.s32 1, %s478
        $region50: #{tpu_custom_call.1} parent=31 // loop_footer_branch
          %477 = sbr.rel target = $region46
        $region51: #{tpu_custom_call.1} parent=31 // loop_exit
          _
        %2430 = vadd.xlane.f32.xlu0 %v483
        %v2431 = vpop.xlane.xlu0 %2430
        %v2432 = vrot.slane %v2431, 4
        %v2433 = vadd.f32 %v2431, %v2432
        %v2434 = vrot.slane %v2433, 2
        %v2435 = vadd.f32 %v2433, %v2434
        %v2436 = vrot.slane %v2435, 1
        %v2437 = vadd.f32 %v2435, %v2436
        %s2438 = vtos %v2437
        %2439 = vadd.xlane.f32.xlu0 %v484
        %v2440 = vpop.xlane.xlu0 %2439
        %v2441 = vrot.slane %v2440, 4
        %v2442 = vadd.f32 %v2440, %v2441
        %v2443 = vrot.slane %v2442, 2
        %v2444 = vadd.f32 %v2442, %v2443
        %v2445 = vrot.slane %v2444, 1
        %v2446 = vadd.f32 %v2444, %v2445
        %s2447 = vtos %v2446
        %2448 = vadd.xlane.f32.xlu0 %v485
        %v2449 = vpop.xlane.xlu0 %2448
        %v2450 = vrot.slane %v2449, 4
        %v2451 = vadd.f32 %v2449, %v2450
        %v2452 = vrot.slane %v2451, 2
        %v2453 = vadd.f32 %v2451, %v2452
        %v2454 = vrot.slane %v2453, 1
        %v2455 = vadd.f32 %v2453, %v2454
        %s2456 = vtos %v2455
        %2457 = vadd.xlane.f32.xlu0 %v486
        %v2458 = vpop.xlane.xlu0 %2457
        %v2459 = vrot.slane %v2458, 4
        %v2460 = vadd.f32 %v2458, %v2459
        %v2461 = vrot.slane %v2460, 2
        %v2462 = vadd.f32 %v2460, %v2461
        %v2463 = vrot.slane %v2462, 1
        %v2464 = vadd.f32 %v2462, %v2463
        %s2465 = vtos %v2464
        %2466 = vadd.xlane.f32.xlu0 %v487
        %v2467 = vpop.xlane.xlu0 %2466
        %v2468 = vrot.slane %v2467, 4
        %v2469 = vadd.f32 %v2467, %v2468
        %v2470 = vrot.slane %v2469, 2
        %v2471 = vadd.f32 %v2469, %v2470
        %v2472 = vrot.slane %v2471, 1
        %v2473 = vadd.f32 %v2471, %v2472
        %s2474 = vtos %v2473
        %v2475 = vlaneseq
        %v2476 = vshrl.u32 %v2475, 7
        %vm2477 = vcmp.eq.s32.totalorder %v2476, 0
        %v2478 = vsel %vm2477, 1, 0
        %v2479 = vcvt.s32.f32 %v2478
        %v2480 = vstv %s2438
        %v2481 = vmul.f32 %v2479, %v2480
        %vm2482 = vcmp.eq.s32.totalorder %v2476, 1
        %v2483 = vsel %vm2482, 1, 0
        %v2484 = vcvt.s32.f32 %v2483
        %v2485 = vstv %s2447
        %v2486 = vmul.f32 %v2484, %v2485
        %v2487 = vadd.f32 %v2481, %v2486
        %vm2488 = vcmp.eq.s32.totalorder %v2476, 2
        %v2489 = vsel %vm2488, 1, 0
        %v2490 = vcvt.s32.f32 %v2489
        %v2491 = vstv %s2456
        %v2492 = vmul.f32 %v2490, %v2491
        %v2493 = vadd.f32 %v2487, %v2492
        %vm2494 = vcmp.eq.s32.totalorder %v2476, 3
        %v2495 = vsel %vm2494, 1, 0
        %v2496 = vcvt.s32.f32 %v2495
        %v2497 = vstv %s2465
        %v2498 = vmul.f32 %v2496, %v2497
        %v2499 = vadd.f32 %v2493, %v2498
        %vm2500 = vcmp.eq.s32.totalorder %v2476, 4
        %v2501 = vsel %vm2500, 1, 0
        %v2502 = vcvt.s32.f32 %v2501
        %v2503 = vstv %s2474
        %v2504 = vmul.f32 %v2502, %v2503
        %v2505 = vadd.f32 %v2499, %v2504
        %2506 = vst [vmem:[%s312] sm:$0xff] %v2505
        %s2507 = sand.u32 %s123, 1
        %s2508 = scalar_lea.sflag [#allocation4], %s2507
        %s2509 = sand.u32 %s123, 1
        %s2510 = smul.addr %s2509, 8
        %s2511 = scalar_lea.vmem [#allocation9], %s2510
        // Predicated region
        $region52: #{tpu_custom_call.1} parent=31 // pred_check
          %p2512 = pneg %p133
        $region53: #{tpu_custom_call.1} parent=31 // pred_check_branch
          %2514 = sbr.rel (%p2512) target = $region55
        $region54: #{tpu_custom_call.1} parent=31 // pred_region
          %s2516 = ssub.s32 128, 128
          %2517 = vsyncadd %s2508, %s2516
          %s2518 = smul.addr %s28, 2
          %s2519 = sadd.s32 %s29, %s2518
          %s2520 = smul.addr %s2519, 128
          %s2521 = scalar_lea.hbm %s3, %s2520
          %s2523 = sshll.u32 %s2511, 4
          %s2524 = int_to_ptr.vmem [resolvable:$true] %s2523
          %2526 = dma.vmem_to_hbm [thread:$0]  %s2524, 128, %s2521, %s2508
        $region55: #{tpu_custom_call.1} parent=31 // pred_fallthru
          _
      $region32: #{tpu_custom_call.1} parent=5 // pred_fallthru
        _
      %p2527 = scmp.le.s32.totalorder 2, %s19
      // Predicated region
      $region56: #{tpu_custom_call.1} parent=5 // pred_check
        %p2528 = pneg %p2527
      $region57: #{tpu_custom_call.1} parent=5 // pred_check_branch
        %2530 = sbr.rel (%p2528) target = $region59
      $region58: #{tpu_custom_call.1} parent=5 // pred_region
        %s2531 = ssub.s32 %s19, 2
        // Predicated region
        $region60: #{tpu_custom_call.1} parent=58 // pred_check
          %p2532 = pneg %p139
        $region61: #{tpu_custom_call.1} parent=58 // pred_check_branch
          %2534 = sbr.rel (%p2532) target = $region63
        $region62: #{tpu_custom_call.1} parent=58 // pred_region
          %s2535 = sand.u32 %s124, 1
          %s2536 = scalar_lea.sflag [#allocation4], %s2535
          %s2537 = sand.u32 %s124, 1
          %s2538 = smul.addr %s2537, 8
          %s2539 = scalar_lea.vmem [#allocation9], %s2538
          %2540 = dma.done %s2536, 128
        $region63: #{tpu_custom_call.1} parent=58 // pred_fallthru
          _
      $region59: #{tpu_custom_call.1} parent=5 // pred_fallthru
        _
    $region6: #{tpu_custom_call.1} parent=1 // loop_footer
      %s23 = sadd.s32 1, %s19
    $region7: #{tpu_custom_call.1} parent=1 // loop_footer_branch
      %18 = sbr.rel target = $region3
    $region8: #{tpu_custom_call.1} parent=1 // loop_exit
      _
    %2541 = vsyncpa [#allocation3], 1
    %s2542 = scalar_lea.sflag [#allocation3], 1
    %2543 = vsyncpa %s2542, 1
    %2544 = vsyncpa [#allocation8], 1
    %s2545 = scalar_lea.sflag [#allocation8], 1
    %2546 = vsyncpa %s2545, 1
    %2547 = vsyncpa [#allocation4], 1
    %s2548 = scalar_lea.sflag [#allocation4], 1
    %2549 = vsyncpa %s2548, 1
    %2550 = vsyncpa [#allocation5], 1
    %s2551 = scalar_lea.sflag [#allocation5], 1
    %2552 = vsyncpa %s2551, 1

</llo_original>
